<compile_context>
chip_gen: v6e
topology: v6e:2x2x1
jax: 0.10.0
libtpu: 0.0.40
codegen_flags: <defaults>
</compile_context>

<pallas_src>
import functools

import jax
import jax.numpy as jnp
from jax import lax
from jax.experimental import pallas as pl
from jax.experimental.pallas import tpu as pltpu


def _res_encoder_kernel(x_ref, mask_ref, w1_ref, s1_ref, sh1_ref,
                        w2_ref, s2_ref, sh2_ref, w11_ref, b11_ref,
                        o_ref, *, H, W):
    # x_ref:    (1, Cin, L)   margin-padded flat padded image (native dtype)
    # mask_ref: (1, Npad) f32 1.0 at interior pixels, 0.0 at spatial padding
    # w1_ref:   (9, Cout, Cin)   conv1 taps     s1/sh1: (Cout, 1) f32 (BN1 folded)
    # w2_ref:   (9, Cout, Cout)  conv2 taps     s2/sh2: (Cout, 1) f32 (BN2 folded)
    # w11_ref:  (Cout, Cin)      1x1 conv       b11:    (Cout, 1) f32
    # o_ref:    (1, Cout, Npad)
    Wp = W + 2
    Npad = (H + 2) * Wp
    M = Wp + 1                       # margin >= max |tap offset|
    Cout = o_ref.shape[1]
    dtype = x_ref.dtype

    x = x_ref[0]                     # (Cin, L), native dtype (one load, slices CSE'd)
    mask = mask_ref[...]             # (1, Npad), f32

    # Tap offsets on the flat pixel axis (static Python ints -> static slices).
    offs = [(dh - 1) * Wp + (dw - 1) for dh in range(3) for dw in range(3)]

    # ---- conv1 (3x3, pad 1) + folded BN1 + ReLU ---------------------------
    acc1 = jnp.zeros((Cout, Npad), jnp.float32)
    for k, off in enumerate(offs):
        patch = x[:, M + off: M + off + Npad]                     # (Cin, Npad)
        acc1 = acc1 + jnp.dot(w1_ref[k], patch,
                              preferred_element_type=jnp.float32)
    h1 = jnp.maximum(acc1 * s1_ref[...] + sh1_ref[...], 0.0)
    # Zero the spatial-padding positions so conv2 sees true zero padding.
    h1 = h1 * mask

    # Re-margin conv1 output with zero lanes (pure value op, no VMEM scratch).
    zm = jnp.zeros((Cout, M), dtype)
    h1e = jnp.concatenate([zm, h1.astype(dtype), zm], axis=-1)    # (Cout, L)

    # ---- conv2 (3x3, pad 1) + folded BN2 + ReLU ---------------------------
    acc2 = jnp.zeros((Cout, Npad), jnp.float32)
    for k, off in enumerate(offs):
        patch = h1e[:, M + off: M + off + Npad]                   # (Cout, Npad)
        acc2 = acc2 + jnp.dot(w2_ref[k], patch,
                              preferred_element_type=jnp.float32)
    h2 = jnp.maximum(acc2 * s2_ref[...] + sh2_ref[...], 0.0)

    # ---- 1x1 residual conv, add, final ReLU (fused epilogue) ---------------
    xc = x[:, M: M + Npad]                                        # center tap
    residual = jnp.dot(w11_ref[...], xc,
                       preferred_element_type=jnp.float32) + b11_ref[...]

    o_ref[0] = jnp.maximum(h2 + residual, 0.0).astype(o_ref.dtype)


def res_encoder(x, p, eps=1e-5):
    """x: (B, Cin, H, W). p: dict of PyTorch-layout ResEncoder parameters."""
    B, Cin, H, W = x.shape
    Cout = p["conv1_w"].shape[0]
    dtype = x.dtype
    itemsize = jnp.dtype(dtype).itemsize

    Hp, Wp = H + 2, W + 2
    Npad = Hp * Wp
    M = Wp + 1                       # covers max |tap offset| = Wp + 1
    L = Npad + 2 * M

    # ---- host-side prep: padding, flattening, BN folding, weight layout ----
    xp = jnp.pad(x, ((0, 0), (0, 0), (1, 1), (1, 1)))             # (B,Cin,Hp,Wp)
    x_ext = jnp.pad(xp.reshape(B, Cin, Npad), ((0, 0), (0, 0), (M, M)))

    row = jnp.arange(Npad) // Wp
    col = jnp.arange(Npad) % Wp
    interior = (row >= 1) & (row <= H) & (col >= 1) & (col <= W)
    mask = interior.astype(jnp.float32).reshape(1, Npad)

    # Fold BatchNorm (eval mode) + conv bias into per-channel scale/shift.
    s1 = p["bn1_gamma"] / jnp.sqrt(p["bn1_var"] + eps)
    sh1 = p["bn1_beta"] + (p["conv1_b"] - p["bn1_mean"]) * s1
    s2 = p["bn2_gamma"] / jnp.sqrt(p["bn2_var"] + eps)
    sh2 = p["bn2_beta"] + (p["conv2_b"] - p["bn2_mean"]) * s2

    # Weights as (tap, Cout, Cin); operands in the input's native dtype.
    w1_t = jnp.transpose(p["conv1_w"], (2, 3, 0, 1)).reshape(9, Cout, Cin).astype(dtype)
    w2_t = jnp.transpose(p["conv2_w"], (2, 3, 0, 1)).reshape(9, Cout, Cout).astype(dtype)
    w11_t = p["conv1x1_w"].reshape(Cout, Cin).astype(dtype)

    colv = lambda v: v.reshape(Cout, 1).astype(jnp.float32)

    # Explicit (small) VMEM budget: double-buffered in/out blocks + constants.
    blk_bytes = Cin * L * itemsize + Cout * Npad * itemsize
    const_bytes = (w1_t.size + w2_t.size + w11_t.size) * itemsize + Npad * 4
    vmem_limit = int(2 * blk_bytes + 2 * const_bytes) + (8 << 20)

    kernel = functools.partial(_res_encoder_kernel, H=H, W=W)

    out_flat = pl.pallas_call(
        kernel,
        out_shape=jax.ShapeDtypeStruct((B, Cout, Npad), dtype),
        grid_spec=pltpu.PrefetchScalarGridSpec(
            num_scalar_prefetch=0,
            grid=(B,),
            in_specs=[
                pl.BlockSpec((1, Cin, L), lambda b: (b, 0, 0)),        # x_ext
                pl.BlockSpec((1, Npad), lambda b: (0, 0)),             # mask
                pl.BlockSpec((9, Cout, Cin), lambda b: (0, 0, 0)),     # w1
                pl.BlockSpec((Cout, 1), lambda b: (0, 0)),             # s1
                pl.BlockSpec((Cout, 1), lambda b: (0, 0)),             # sh1
                pl.BlockSpec((9, Cout, Cout), lambda b: (0, 0, 0)),    # w2
                pl.BlockSpec((Cout, 1), lambda b: (0, 0)),             # s2
                pl.BlockSpec((Cout, 1), lambda b: (0, 0)),             # sh2
                pl.BlockSpec((Cout, Cin), lambda b: (0, 0)),           # w1x1
                pl.BlockSpec((Cout, 1), lambda b: (0, 0)),             # b1x1
            ],
            out_specs=pl.BlockSpec((1, Cout, Npad), lambda b: (b, 0, 0)),
        ),
        compiler_params=pltpu.CompilerParams(
            dimension_semantics=("parallel",),
            vmem_limit_bytes=vmem_limit,
        ),
    )(x_ext, mask, w1_t, colv(s1), colv(sh1), w2_t, colv(s2), colv(sh2),
      w11_t, colv(p["conv1x1_b"]))

    # Back to NCHW: drop the spatial-padding border of the flat pixel axis.
    out = out_flat.reshape(B, Cout, Hp, Wp)[:, :, 1:H + 1, 1:W + 1]
    return out


def _reference(x, p, eps=1e-5):
    dn = ("NCHW", "OIHW", "NCHW")
    hp = lax.Precision.HIGHEST

    def conv(x, w, b, pad):
        y = lax.conv_general_dilated(x, w, (1, 1), ((pad, pad), (pad, pad)),
                                     dimension_numbers=dn, precision=hp)
        return y + b[None, :, None, None]

    def bn(y, g, be, m, v):
        return ((y - m[None, :, None, None]) /
                jnp.sqrt(v[None, :, None, None] + eps)
                * g[None, :, None, None] + be[None, :, None, None])

    residual = conv(x, p["conv1x1_w"], p["conv1x1_b"], 0)
    out = jax.nn.relu(bn(conv(x, p["conv1_w"], p["conv1_b"], 1),
                         p["bn1_gamma"], p["bn1_beta"], p["bn1_mean"], p["bn1_var"]))
    out = jax.nn.relu(bn(conv(out, p["conv2_w"], p["conv2_b"], 1),
                         p["bn2_gamma"], p["bn2_beta"], p["bn2_mean"], p["bn2_var"]))
    return jax.nn.relu(out + residual)


if __name__ == "__main__":
    key = jax.random.PRNGKey(0)
    ks = jax.random.split(key, 16)
    B, Cin, Cout, H, W = 2, 4, 8, 16, 16

    x = jax.random.normal(ks[0], (B, Cin, H, W), dtype=jnp.float32)
    p = {
        "conv1_w": 0.3 * jax.random.normal(ks[1], (Cout, Cin, 3, 3), jnp.float32),
        "conv1_b": 0.1 * jax.random.normal(ks[2], (Cout,), jnp.float32),
        "bn1_gamma": 1.0 + 0.1 * jax.random.normal(ks[3], (Cout,), jnp.float32),
        "bn1_beta": 0.1 * jax.random.normal(ks[4], (Cout,), jnp.float32),
        "bn1_mean": 0.1 * jax.random.normal(ks[5], (Cout,), jnp.float32),
        "bn1_var": jax.random.uniform(ks[6], (Cout,), minval=0.5, maxval=1.5),
        "conv2_w": 0.2 * jax.random.normal(ks[7], (Cout, Cout, 3, 3), jnp.float32),
        "conv2_b": 0.1 * jax.random.normal(ks[8], (Cout,), jnp.float32),
        "bn2_gamma": 1.0 + 0.1 * jax.random.normal(ks[9], (Cout,), jnp.float32),
        "bn2_beta": 0.1 * jax.random.normal(ks[10], (Cout,), jnp.float32),
        "bn2_mean": 0.1 * jax.random.normal(ks[11], (Cout,), jnp.float32),
        "bn2_var": jax.random.uniform(ks[12], (Cout,), minval=0.5, maxval=1.5),
        "conv1x1_w": 0.3 * jax.random.normal(ks[13], (Cout, Cin, 1, 1), jnp.float32),
        "conv1x1_b": 0.1 * jax.random.normal(ks[14], (Cout,), jnp.float32),
    }

    out = res_encoder(x, p)
    out = jax.block_until_ready(out)

    ref = _reference(x, p)
    assert out.shape == (B, Cout, H, W)
    assert jnp.allclose(out, ref, atol=2e-3, rtol=2e-3), (
        "mismatch vs reference, max err %e" % float(jnp.max(jnp.abs(out - ref))))

    print("KERNEL_OK")
</pallas_src>

<mosaic_0001>
module attributes {stable_mosaic.version = 11 : i64} {
  func.func @_res_encoder_kernel(%arg0: i32, %arg1: memref<1x4x362xf32, #tpu.memory_space<vmem>>, %arg2: memref<1x324xf32, #tpu.memory_space<vmem>>, %arg3: memref<9x8x4xf32, #tpu.memory_space<vmem>>, %arg4: memref<8x1xf32, #tpu.memory_space<vmem>>, %arg5: memref<8x1xf32, #tpu.memory_space<vmem>>, %arg6: memref<9x8x8xf32, #tpu.memory_space<vmem>>, %arg7: memref<8x1xf32, #tpu.memory_space<vmem>>, %arg8: memref<8x1xf32, #tpu.memory_space<vmem>>, %arg9: memref<8x4xf32, #tpu.memory_space<vmem>>, %arg10: memref<8x1xf32, #tpu.memory_space<vmem>>, %arg11: memref<1x8x324xf32, #tpu.memory_space<vmem>>) attributes {dimension_semantics = [#tpu.dimension_semantics<parallel>], iteration_bounds = array<i64: 2>, scalar_prefetch = 0 : i64, scratch_operands = 0 : i64, tpu.core_type = #tpu.core_type<tc>, window_params = [{transform_indices = @transform_0, window_bounds = array<i64: 1, 4, 362>}, {pipeline_mode = #tpu.pipeline_mode<synchronous>, transform_indices = @transform_1, window_bounds = array<i64: 1, 324>}, {pipeline_mode = #tpu.pipeline_mode<synchronous>, transform_indices = @transform_2, window_bounds = array<i64: 9, 8, 4>}, {pipeline_mode = #tpu.pipeline_mode<synchronous>, transform_indices = @transform_3, window_bounds = array<i64: 8, 1>}, {pipeline_mode = #tpu.pipeline_mode<synchronous>, transform_indices = @transform_4, window_bounds = array<i64: 8, 1>}, {pipeline_mode = #tpu.pipeline_mode<synchronous>, transform_indices = @transform_5, window_bounds = array<i64: 9, 8, 8>}, {pipeline_mode = #tpu.pipeline_mode<synchronous>, transform_indices = @transform_6, window_bounds = array<i64: 8, 1>}, {pipeline_mode = #tpu.pipeline_mode<synchronous>, transform_indices = @transform_7, window_bounds = array<i64: 8, 1>}, {pipeline_mode = #tpu.pipeline_mode<synchronous>, transform_indices = @transform_8, window_bounds = array<i64: 8, 4>}, {pipeline_mode = #tpu.pipeline_mode<synchronous>, transform_indices = @transform_9, window_bounds = array<i64: 8, 1>}, {transform_indices = @transform_10, window_bounds = array<i64: 1, 8, 324>}]} {
    %c0 = arith.constant 0 : index
    %c0_0 = arith.constant 0 : index
    %c0_1 = arith.constant 0 : index
    %0 = vector.load %arg1[%c0, %c0_0, %c0_1] : memref<1x4x362xf32, #tpu.memory_space<vmem>>, vector<1x4x362xf32>
    %1 = vector.shape_cast %0 : vector<1x4x362xf32> to vector<4x362xf32>
    %c0_2 = arith.constant 0 : index
    %c0_3 = arith.constant 0 : index
    %2 = vector.load %arg2[%c0_2, %c0_3] : memref<1x324xf32, #tpu.memory_space<vmem>>, vector<1x324xf32>
    %cst = arith.constant 0.000000e+00 : f32
    %3 = vector.broadcast %cst : f32 to vector<8x324xf32>
    %4 = vector.extract_strided_slice %1 {offsets = [0, 0], sizes = [4, 324], strides = [1, 1]} : vector<4x362xf32> to vector<4x324xf32>
    %c0_4 = arith.constant 0 : index
    %c0_5 = arith.constant 0 : index
    %c0_6 = arith.constant 0 : index
    %5 = vector.load %arg3[%c0_4, %c0_5, %c0_6] : memref<9x8x4xf32, #tpu.memory_space<vmem>>, vector<1x8x4xf32>
    %6 = vector.shape_cast %5 : vector<1x8x4xf32> to vector<8x4xf32>
    %cst_7 = arith.constant dense<0.000000e+00> : vector<8x324xf32>
    %7 = tpu.matmul %6, %4, %cst_7 {dimension_numbers = #tpu.dot_dimension_numbers<[1], [0], [0], [1], [0, 0, 1, 1], [], []>} : vector<8x4xf32>, vector<4x324xf32>, vector<8x324xf32> -> vector<8x324xf32>
    %8 = arith.addf %3, %7 : vector<8x324xf32>
    %9 = vector.extract_strided_slice %1 {offsets = [0, 1], sizes = [4, 324], strides = [1, 1]} : vector<4x362xf32> to vector<4x324xf32>
    %c1 = arith.constant 1 : index
    %c0_8 = arith.constant 0 : index
    %c0_9 = arith.constant 0 : index
    %10 = vector.load %arg3[%c1, %c0_8, %c0_9] : memref<9x8x4xf32, #tpu.memory_space<vmem>>, vector<1x8x4xf32>
    %11 = vector.shape_cast %10 : vector<1x8x4xf32> to vector<8x4xf32>
    %cst_10 = arith.constant dense<0.000000e+00> : vector<8x324xf32>
    %12 = tpu.matmul %11, %9, %cst_10 {dimension_numbers = #tpu.dot_dimension_numbers<[1], [0], [0], [1], [0, 0, 1, 1], [], []>} : vector<8x4xf32>, vector<4x324xf32>, vector<8x324xf32> -> vector<8x324xf32>
    %13 = arith.addf %8, %12 : vector<8x324xf32>
    %14 = vector.extract_strided_slice %1 {offsets = [0, 2], sizes = [4, 324], strides = [1, 1]} : vector<4x362xf32> to vector<4x324xf32>
    %c2 = arith.constant 2 : index
    %c0_11 = arith.constant 0 : index
    %c0_12 = arith.constant 0 : index
    %15 = vector.load %arg3[%c2, %c0_11, %c0_12] : memref<9x8x4xf32, #tpu.memory_space<vmem>>, vector<1x8x4xf32>
    %16 = vector.shape_cast %15 : vector<1x8x4xf32> to vector<8x4xf32>
    %cst_13 = arith.constant dense<0.000000e+00> : vector<8x324xf32>
    %17 = tpu.matmul %16, %14, %cst_13 {dimension_numbers = #tpu.dot_dimension_numbers<[1], [0], [0], [1], [0, 0, 1, 1], [], []>} : vector<8x4xf32>, vector<4x324xf32>, vector<8x324xf32> -> vector<8x324xf32>
    %18 = arith.addf %13, %17 : vector<8x324xf32>
    %19 = vector.extract_strided_slice %1 {offsets = [0, 18], sizes = [4, 324], strides = [1, 1]} : vector<4x362xf32> to vector<4x324xf32>
    %c3 = arith.constant 3 : index
    %c0_14 = arith.constant 0 : index
    %c0_15 = arith.constant 0 : index
    %20 = vector.load %arg3[%c3, %c0_14, %c0_15] : memref<9x8x4xf32, #tpu.memory_space<vmem>>, vector<1x8x4xf32>
    %21 = vector.shape_cast %20 : vector<1x8x4xf32> to vector<8x4xf32>
    %cst_16 = arith.constant dense<0.000000e+00> : vector<8x324xf32>
    %22 = tpu.matmul %21, %19, %cst_16 {dimension_numbers = #tpu.dot_dimension_numbers<[1], [0], [0], [1], [0, 0, 1, 1], [], []>} : vector<8x4xf32>, vector<4x324xf32>, vector<8x324xf32> -> vector<8x324xf32>
    %23 = arith.addf %18, %22 : vector<8x324xf32>
    %24 = vector.extract_strided_slice %1 {offsets = [0, 19], sizes = [4, 324], strides = [1, 1]} : vector<4x362xf32> to vector<4x324xf32>
    %c4 = arith.constant 4 : index
    %c0_17 = arith.constant 0 : index
    %c0_18 = arith.constant 0 : index
    %25 = vector.load %arg3[%c4, %c0_17, %c0_18] : memref<9x8x4xf32, #tpu.memory_space<vmem>>, vector<1x8x4xf32>
    %26 = vector.shape_cast %25 : vector<1x8x4xf32> to vector<8x4xf32>
    %cst_19 = arith.constant dense<0.000000e+00> : vector<8x324xf32>
    %27 = tpu.matmul %26, %24, %cst_19 {dimension_numbers = #tpu.dot_dimension_numbers<[1], [0], [0], [1], [0, 0, 1, 1], [], []>} : vector<8x4xf32>, vector<4x324xf32>, vector<8x324xf32> -> vector<8x324xf32>
    %28 = arith.addf %23, %27 : vector<8x324xf32>
    %29 = vector.extract_strided_slice %1 {offsets = [0, 20], sizes = [4, 324], strides = [1, 1]} : vector<4x362xf32> to vector<4x324xf32>
    %c5 = arith.constant 5 : index
    %c0_20 = arith.constant 0 : index
    %c0_21 = arith.constant 0 : index
    %30 = vector.load %arg3[%c5, %c0_20, %c0_21] : memref<9x8x4xf32, #tpu.memory_space<vmem>>, vector<1x8x4xf32>
    %31 = vector.shape_cast %30 : vector<1x8x4xf32> to vector<8x4xf32>
    %cst_22 = arith.constant dense<0.000000e+00> : vector<8x324xf32>
    %32 = tpu.matmul %31, %29, %cst_22 {dimension_numbers = #tpu.dot_dimension_numbers<[1], [0], [0], [1], [0, 0, 1, 1], [], []>} : vector<8x4xf32>, vector<4x324xf32>, vector<8x324xf32> -> vector<8x324xf32>
    %33 = arith.addf %28, %32 : vector<8x324xf32>
    %34 = vector.extract_strided_slice %1 {offsets = [0, 36], sizes = [4, 324], strides = [1, 1]} : vector<4x362xf32> to vector<4x324xf32>
    %c6 = arith.constant 6 : index
    %c0_23 = arith.constant 0 : index
    %c0_24 = arith.constant 0 : index
    %35 = vector.load %arg3[%c6, %c0_23, %c0_24] : memref<9x8x4xf32, #tpu.memory_space<vmem>>, vector<1x8x4xf32>
    %36 = vector.shape_cast %35 : vector<1x8x4xf32> to vector<8x4xf32>
    %cst_25 = arith.constant dense<0.000000e+00> : vector<8x324xf32>
    %37 = tpu.matmul %36, %34, %cst_25 {dimension_numbers = #tpu.dot_dimension_numbers<[1], [0], [0], [1], [0, 0, 1, 1], [], []>} : vector<8x4xf32>, vector<4x324xf32>, vector<8x324xf32> -> vector<8x324xf32>
    %38 = arith.addf %33, %37 : vector<8x324xf32>
    %39 = vector.extract_strided_slice %1 {offsets = [0, 37], sizes = [4, 324], strides = [1, 1]} : vector<4x362xf32> to vector<4x324xf32>
    %c7 = arith.constant 7 : index
    %c0_26 = arith.constant 0 : index
    %c0_27 = arith.constant 0 : index
    %40 = vector.load %arg3[%c7, %c0_26, %c0_27] : memref<9x8x4xf32, #tpu.memory_space<vmem>>, vector<1x8x4xf32>
    %41 = vector.shape_cast %40 : vector<1x8x4xf32> to vector<8x4xf32>
    %cst_28 = arith.constant dense<0.000000e+00> : vector<8x324xf32>
    %42 = tpu.matmul %41, %39, %cst_28 {dimension_numbers = #tpu.dot_dimension_numbers<[1], [0], [0], [1], [0, 0, 1, 1], [], []>} : vector<8x4xf32>, vector<4x324xf32>, vector<8x324xf32> -> vector<8x324xf32>
    %43 = arith.addf %38, %42 : vector<8x324xf32>
    %44 = vector.extract_strided_slice %1 {offsets = [0, 38], sizes = [4, 324], strides = [1, 1]} : vector<4x362xf32> to vector<4x324xf32>
    %c8 = arith.constant 8 : index
    %c0_29 = arith.constant 0 : index
    %c0_30 = arith.constant 0 : index
    %45 = vector.load %arg3[%c8, %c0_29, %c0_30] : memref<9x8x4xf32, #tpu.memory_space<vmem>>, vector<1x8x4xf32>
    %46 = vector.shape_cast %45 : vector<1x8x4xf32> to vector<8x4xf32>
    %cst_31 = arith.constant dense<0.000000e+00> : vector<8x324xf32>
    %47 = tpu.matmul %46, %44, %cst_31 {dimension_numbers = #tpu.dot_dimension_numbers<[1], [0], [0], [1], [0, 0, 1, 1], [], []>} : vector<8x4xf32>, vector<4x324xf32>, vector<8x324xf32> -> vector<8x324xf32>
    %48 = arith.addf %43, %47 : vector<8x324xf32>
    %c0_32 = arith.constant 0 : index
    %c0_33 = arith.constant 0 : index
    %49 = vector.load %arg4[%c0_32, %c0_33] : memref<8x1xf32, #tpu.memory_space<vmem>>, vector<8x1xf32>
    %50 = vector.broadcast %49 : vector<8x1xf32> to vector<8x324xf32>
    %51 = arith.mulf %48, %50 : vector<8x324xf32>
    %c0_34 = arith.constant 0 : index
    %c0_35 = arith.constant 0 : index
    %52 = vector.load %arg5[%c0_34, %c0_35] : memref<8x1xf32, #tpu.memory_space<vmem>>, vector<8x1xf32>
    %53 = vector.broadcast %52 : vector<8x1xf32> to vector<8x324xf32>
    %54 = arith.addf %51, %53 : vector<8x324xf32>
    %cst_36 = arith.constant 0.000000e+00 : f32
    %55 = vector.broadcast %cst_36 : f32 to vector<8x324xf32>
    %56 = arith.maximumf %54, %55 : vector<8x324xf32>
    %57 = vector.broadcast %2 : vector<1x324xf32> to vector<8x324xf32>
    %58 = arith.mulf %56, %57 : vector<8x324xf32>
    %cst_37 = arith.constant 0.000000e+00 : f32
    %59 = vector.broadcast %cst_37 : f32 to vector<8x19xf32>
    %60 = tpu.concatenate %59, %58, %59 in 1 : vector<8x19xf32>, vector<8x324xf32>, vector<8x19xf32> -> vector<8x362xf32>
    %cst_38 = arith.constant 0.000000e+00 : f32
    %61 = vector.broadcast %cst_38 : f32 to vector<8x324xf32>
    %62 = vector.extract_strided_slice %60 {offsets = [0, 0], sizes = [8, 324], strides = [1, 1]} : vector<8x362xf32> to vector<8x324xf32>
    %c0_39 = arith.constant 0 : index
    %c0_40 = arith.constant 0 : index
    %c0_41 = arith.constant 0 : index
    %63 = vector.load %arg6[%c0_39, %c0_40, %c0_41] : memref<9x8x8xf32, #tpu.memory_space<vmem>>, vector<1x8x8xf32>
    %64 = vector.shape_cast %63 : vector<1x8x8xf32> to vector<8x8xf32>
    %cst_42 = arith.constant dense<0.000000e+00> : vector<8x324xf32>
    %65 = tpu.matmul %64, %62, %cst_42 {dimension_numbers = #tpu.dot_dimension_numbers<[1], [0], [0], [1], [0, 0, 1, 1], [], []>} : vector<8x8xf32>, vector<8x324xf32>, vector<8x324xf32> -> vector<8x324xf32>
    %66 = arith.addf %61, %65 : vector<8x324xf32>
    %67 = vector.extract_strided_slice %60 {offsets = [0, 1], sizes = [8, 324], strides = [1, 1]} : vector<8x362xf32> to vector<8x324xf32>
    %c1_43 = arith.constant 1 : index
    %c0_44 = arith.constant 0 : index
    %c0_45 = arith.constant 0 : index
    %68 = vector.load %arg6[%c1_43, %c0_44, %c0_45] : memref<9x8x8xf32, #tpu.memory_space<vmem>>, vector<1x8x8xf32>
    %69 = vector.shape_cast %68 : vector<1x8x8xf32> to vector<8x8xf32>
    %cst_46 = arith.constant dense<0.000000e+00> : vector<8x324xf32>
    %70 = tpu.matmul %69, %67, %cst_46 {dimension_numbers = #tpu.dot_dimension_numbers<[1], [0], [0], [1], [0, 0, 1, 1], [], []>} : vector<8x8xf32>, vector<8x324xf32>, vector<8x324xf32> -> vector<8x324xf32>
    %71 = arith.addf %66, %70 : vector<8x324xf32>
    %72 = vector.extract_strided_slice %60 {offsets = [0, 2], sizes = [8, 324], strides = [1, 1]} : vector<8x362xf32> to vector<8x324xf32>
    %c2_47 = arith.constant 2 : index
    %c0_48 = arith.constant 0 : index
    %c0_49 = arith.constant 0 : index
    %73 = vector.load %arg6[%c2_47, %c0_48, %c0_49] : memref<9x8x8xf32, #tpu.memory_space<vmem>>, vector<1x8x8xf32>
    %74 = vector.shape_cast %73 : vector<1x8x8xf32> to vector<8x8xf32>
    %cst_50 = arith.constant dense<0.000000e+00> : vector<8x324xf32>
    %75 = tpu.matmul %74, %72, %cst_50 {dimension_numbers = #tpu.dot_dimension_numbers<[1], [0], [0], [1], [0, 0, 1, 1], [], []>} : vector<8x8xf32>, vector<8x324xf32>, vector<8x324xf32> -> vector<8x324xf32>
    %76 = arith.addf %71, %75 : vector<8x324xf32>
    %77 = vector.extract_strided_slice %60 {offsets = [0, 18], sizes = [8, 324], strides = [1, 1]} : vector<8x362xf32> to vector<8x324xf32>
    %c3_51 = arith.constant 3 : index
    %c0_52 = arith.constant 0 : index
    %c0_53 = arith.constant 0 : index
    %78 = vector.load %arg6[%c3_51, %c0_52, %c0_53] : memref<9x8x8xf32, #tpu.memory_space<vmem>>, vector<1x8x8xf32>
    %79 = vector.shape_cast %78 : vector<1x8x8xf32> to vector<8x8xf32>
    %cst_54 = arith.constant dense<0.000000e+00> : vector<8x324xf32>
    %80 = tpu.matmul %79, %77, %cst_54 {dimension_numbers = #tpu.dot_dimension_numbers<[1], [0], [0], [1], [0, 0, 1, 1], [], []>} : vector<8x8xf32>, vector<8x324xf32>, vector<8x324xf32> -> vector<8x324xf32>
    %81 = arith.addf %76, %80 : vector<8x324xf32>
    %82 = vector.extract_strided_slice %60 {offsets = [0, 19], sizes = [8, 324], strides = [1, 1]} : vector<8x362xf32> to vector<8x324xf32>
    %c4_55 = arith.constant 4 : index
    %c0_56 = arith.constant 0 : index
    %c0_57 = arith.constant 0 : index
    %83 = vector.load %arg6[%c4_55, %c0_56, %c0_57] : memref<9x8x8xf32, #tpu.memory_space<vmem>>, vector<1x8x8xf32>
    %84 = vector.shape_cast %83 : vector<1x8x8xf32> to vector<8x8xf32>
    %cst_58 = arith.constant dense<0.000000e+00> : vector<8x324xf32>
    %85 = tpu.matmul %84, %82, %cst_58 {dimension_numbers = #tpu.dot_dimension_numbers<[1], [0], [0], [1], [0, 0, 1, 1], [], []>} : vector<8x8xf32>, vector<8x324xf32>, vector<8x324xf32> -> vector<8x324xf32>
    %86 = arith.addf %81, %85 : vector<8x324xf32>
    %87 = vector.extract_strided_slice %60 {offsets = [0, 20], sizes = [8, 324], strides = [1, 1]} : vector<8x362xf32> to vector<8x324xf32>
    %c5_59 = arith.constant 5 : index
    %c0_60 = arith.constant 0 : index
    %c0_61 = arith.constant 0 : index
    %88 = vector.load %arg6[%c5_59, %c0_60, %c0_61] : memref<9x8x8xf32, #tpu.memory_space<vmem>>, vector<1x8x8xf32>
    %89 = vector.shape_cast %88 : vector<1x8x8xf32> to vector<8x8xf32>
    %cst_62 = arith.constant dense<0.000000e+00> : vector<8x324xf32>
    %90 = tpu.matmul %89, %87, %cst_62 {dimension_numbers = #tpu.dot_dimension_numbers<[1], [0], [0], [1], [0, 0, 1, 1], [], []>} : vector<8x8xf32>, vector<8x324xf32>, vector<8x324xf32> -> vector<8x324xf32>
    %91 = arith.addf %86, %90 : vector<8x324xf32>
    %92 = vector.extract_strided_slice %60 {offsets = [0, 36], sizes = [8, 324], strides = [1, 1]} : vector<8x362xf32> to vector<8x324xf32>
    %c6_63 = arith.constant 6 : index
    %c0_64 = arith.constant 0 : index
    %c0_65 = arith.constant 0 : index
    %93 = vector.load %arg6[%c6_63, %c0_64, %c0_65] : memref<9x8x8xf32, #tpu.memory_space<vmem>>, vector<1x8x8xf32>
    %94 = vector.shape_cast %93 : vector<1x8x8xf32> to vector<8x8xf32>
    %cst_66 = arith.constant dense<0.000000e+00> : vector<8x324xf32>
    %95 = tpu.matmul %94, %92, %cst_66 {dimension_numbers = #tpu.dot_dimension_numbers<[1], [0], [0], [1], [0, 0, 1, 1], [], []>} : vector<8x8xf32>, vector<8x324xf32>, vector<8x324xf32> -> vector<8x324xf32>
    %96 = arith.addf %91, %95 : vector<8x324xf32>
    %97 = vector.extract_strided_slice %60 {offsets = [0, 37], sizes = [8, 324], strides = [1, 1]} : vector<8x362xf32> to vector<8x324xf32>
    %c7_67 = arith.constant 7 : index
    %c0_68 = arith.constant 0 : index
    %c0_69 = arith.constant 0 : index
    %98 = vector.load %arg6[%c7_67, %c0_68, %c0_69] : memref<9x8x8xf32, #tpu.memory_space<vmem>>, vector<1x8x8xf32>
    %99 = vector.shape_cast %98 : vector<1x8x8xf32> to vector<8x8xf32>
    %cst_70 = arith.constant dense<0.000000e+00> : vector<8x324xf32>
    %100 = tpu.matmul %99, %97, %cst_70 {dimension_numbers = #tpu.dot_dimension_numbers<[1], [0], [0], [1], [0, 0, 1, 1], [], []>} : vector<8x8xf32>, vector<8x324xf32>, vector<8x324xf32> -> vector<8x324xf32>
    %101 = arith.addf %96, %100 : vector<8x324xf32>
    %102 = vector.extract_strided_slice %60 {offsets = [0, 38], sizes = [8, 324], strides = [1, 1]} : vector<8x362xf32> to vector<8x324xf32>
    %c8_71 = arith.constant 8 : index
    %c0_72 = arith.constant 0 : index
    %c0_73 = arith.constant 0 : index
    %103 = vector.load %arg6[%c8_71, %c0_72, %c0_73] : memref<9x8x8xf32, #tpu.memory_space<vmem>>, vector<1x8x8xf32>
    %104 = vector.shape_cast %103 : vector<1x8x8xf32> to vector<8x8xf32>
    %cst_74 = arith.constant dense<0.000000e+00> : vector<8x324xf32>
    %105 = tpu.matmul %104, %102, %cst_74 {dimension_numbers = #tpu.dot_dimension_numbers<[1], [0], [0], [1], [0, 0, 1, 1], [], []>} : vector<8x8xf32>, vector<8x324xf32>, vector<8x324xf32> -> vector<8x324xf32>
    %106 = arith.addf %101, %105 : vector<8x324xf32>
    %c0_75 = arith.constant 0 : index
    %c0_76 = arith.constant 0 : index
    %107 = vector.load %arg7[%c0_75, %c0_76] : memref<8x1xf32, #tpu.memory_space<vmem>>, vector<8x1xf32>
    %108 = vector.broadcast %107 : vector<8x1xf32> to vector<8x324xf32>
    %109 = arith.mulf %106, %108 : vector<8x324xf32>
    %c0_77 = arith.constant 0 : index
    %c0_78 = arith.constant 0 : index
    %110 = vector.load %arg8[%c0_77, %c0_78] : memref<8x1xf32, #tpu.memory_space<vmem>>, vector<8x1xf32>
    %111 = vector.broadcast %110 : vector<8x1xf32> to vector<8x324xf32>
    %112 = arith.addf %109, %111 : vector<8x324xf32>
    %cst_79 = arith.constant 0.000000e+00 : f32
    %113 = vector.broadcast %cst_79 : f32 to vector<8x324xf32>
    %114 = arith.maximumf %112, %113 : vector<8x324xf32>
    %115 = vector.extract_strided_slice %1 {offsets = [0, 19], sizes = [4, 324], strides = [1, 1]} : vector<4x362xf32> to vector<4x324xf32>
    %c0_80 = arith.constant 0 : index
    %c0_81 = arith.constant 0 : index
    %116 = vector.load %arg9[%c0_80, %c0_81] : memref<8x4xf32, #tpu.memory_space<vmem>>, vector<8x4xf32>
    %cst_82 = arith.constant dense<0.000000e+00> : vector<8x324xf32>
    %117 = tpu.matmul %116, %115, %cst_82 {dimension_numbers = #tpu.dot_dimension_numbers<[1], [0], [0], [1], [0, 0, 1, 1], [], []>} : vector<8x4xf32>, vector<4x324xf32>, vector<8x324xf32> -> vector<8x324xf32>
    %c0_83 = arith.constant 0 : index
    %c0_84 = arith.constant 0 : index
    %118 = vector.load %arg10[%c0_83, %c0_84] : memref<8x1xf32, #tpu.memory_space<vmem>>, vector<8x1xf32>
    %119 = vector.broadcast %118 : vector<8x1xf32> to vector<8x324xf32>
    %120 = arith.addf %117, %119 : vector<8x324xf32>
    %121 = arith.addf %114, %120 : vector<8x324xf32>
    %cst_85 = arith.constant 0.000000e+00 : f32
    %122 = vector.broadcast %cst_85 : f32 to vector<8x324xf32>
    %123 = arith.maximumf %121, %122 : vector<8x324xf32>
    %c0_86 = arith.constant 0 : index
    %c0_87 = arith.constant 0 : index
    %c0_88 = arith.constant 0 : index
    %124 = vector.load %arg11[%c0_86, %c0_87, %c0_88] : memref<1x8x324xf32, #tpu.memory_space<vmem>>, vector<1x8x324xf32>
    %125 = vector.shape_cast %124 : vector<1x8x324xf32> to vector<8x324xf32>
    %126 = vector.shape_cast %123 : vector<8x324xf32> to vector<1x8x324xf32>
    tpu.vector_store %arg11[%c0_86, %c0_87, %c0_88], %126 {strides = array<i32>} : memref<1x8x324xf32, #tpu.memory_space<vmem>>, vector<1x8x324xf32>,
    return
  }
  func.func @transform_0(%arg0: i32) -> (i32, i32, i32) {
    %c0_i32 = arith.constant 0 : i32
    %c0_i32_0 = arith.constant 0 : i32
    %c0_i32_1 = arith.constant 0 : i32
    return %arg0, %c0_i32, %c0_i32_0 : i32, i32, i32
  }
  func.func @transform_1(%arg0: i32) -> (i32, i32) {
    %c0_i32 = arith.constant 0 : i32
    %c0_i32_0 = arith.constant 0 : i32
    %c0_i32_1 = arith.constant 0 : i32
    return %c0_i32, %c0_i32_0 : i32, i32
  }
  func.func @transform_2(%arg0: i32) -> (i32, i32, i32) {
    %c0_i32 = arith.constant 0 : i32
    %c0_i32_0 = arith.constant 0 : i32
    %c0_i32_1 = arith.constant 0 : i32
    %c0_i32_2 = arith.constant 0 : i32
    return %c0_i32, %c0_i32_0, %c0_i32_1 : i32, i32, i32
  }
  func.func @transform_3(%arg0: i32) -> (i32, i32) {
    %c0_i32 = arith.constant 0 : i32
    %c0_i32_0 = arith.constant 0 : i32
    %c0_i32_1 = arith.constant 0 : i32
    return %c0_i32, %c0_i32_0 : i32, i32
  }
  func.func @transform_4(%arg0: i32) -> (i32, i32) {
    %c0_i32 = arith.constant 0 : i32
    %c0_i32_0 = arith.constant 0 : i32
    %c0_i32_1 = arith.constant 0 : i32
    return %c0_i32, %c0_i32_0 : i32, i32
  }
  func.func @transform_5(%arg0: i32) -> (i32, i32, i32) {
    %c0_i32 = arith.constant 0 : i32
    %c0_i32_0 = arith.constant 0 : i32
    %c0_i32_1 = arith.constant 0 : i32
    %c0_i32_2 = arith.constant 0 : i32
    return %c0_i32, %c0_i32_0, %c0_i32_1 : i32, i32, i32
  }
  func.func @transform_6(%arg0: i32) -> (i32, i32) {
    %c0_i32 = arith.constant 0 : i32
    %c0_i32_0 = arith.constant 0 : i32
    %c0_i32_1 = arith.constant 0 : i32
    return %c0_i32, %c0_i32_0 : i32, i32
  }
  func.func @transform_7(%arg0: i32) -> (i32, i32) {
    %c0_i32 = arith.constant 0 : i32
    %c0_i32_0 = arith.constant 0 : i32
    %c0_i32_1 = arith.constant 0 : i32
    return %c0_i32, %c0_i32_0 : i32, i32
  }
  func.func @transform_8(%arg0: i32) -> (i32, i32) {
    %c0_i32 = arith.constant 0 : i32
    %c0_i32_0 = arith.constant 0 : i32
    %c0_i32_1 = arith.constant 0 : i32
    return %c0_i32, %c0_i32_0 : i32, i32
  }
  func.func @transform_9(%arg0: i32) -> (i32, i32) {
    %c0_i32 = arith.constant 0 : i32
    %c0_i32_0 = arith.constant 0 : i32
    %c0_i32_1 = arith.constant 0 : i32
    return %c0_i32, %c0_i32_0 : i32, i32
  }
  func.func @transform_10(%arg0: i32) -> (i32, i32, i32) {
    %c0_i32 = arith.constant 0 : i32
    %c0_i32_0 = arith.constant 0 : i32
    %c0_i32_1 = arith.constant 0 : i32
    return %arg0, %c0_i32, %c0_i32_0 : i32, i32, i32
  }
}

</mosaic_0001>

<llo_original>
// kernel: tpu_custom_call.1
$region0: #{tpu_custom_call.1}
  #allocation0 [shape = 'u32[]', space=smem, size = 0x4, offset = 0x4, fixed_abs, tag = 'smem constant byte address 0x4 - core index']
  #allocation1 [shape = 'u32[144,128]{1,0:T(1,128)}', space=vmem, size = 0x12000, scoped, tag = 'internal scratch']
  %s0 = inlined_call_operand.vmem [shape: f32[2,4,362], index: 0, kind: input, shape index: {}]
  %s1 = inlined_call_operand.vmem [shape: f32[1,324], index: 1, kind: input, shape index: {}]
  %s2 = inlined_call_operand.vmem [shape: f32[9,8,4], index: 2, kind: input, shape index: {}]
  %s3 = inlined_call_operand.vmem [shape: f32[8,1], index: 3, kind: input, shape index: {}]
  %s4 = inlined_call_operand.vmem [shape: f32[8,1], index: 4, kind: input, shape index: {}]
  %s5 = inlined_call_operand.vmem [shape: f32[9,8,8], index: 5, kind: input, shape index: {}]
  %s6 = inlined_call_operand.vmem [shape: f32[8,1], index: 6, kind: input, shape index: {}]
  %s7 = inlined_call_operand.vmem [shape: f32[8,1], index: 7, kind: input, shape index: {}]
  %s8 = inlined_call_operand.vmem [shape: f32[8,4], index: 8, kind: input, shape index: {}]
  %s9 = inlined_call_operand.vmem [shape: f32[8,1], index: 9, kind: input, shape index: {}]
  %s10 = inlined_call_operand.hbm [shape: f32[2,8,324], index: 10, kind: output, shape index: {}]
  %s11 = sld [smem:[#allocation0]]
  $region73: #{tpu_custom_call.1} parent=0
    _
  %s13 = ssub.s32 1, %s11
  %s14 = scalar_select 0, %s13, %s11
  $region1: #{tpu_custom_call.1} parent=0
    #allocation2 [shape = 'u8[24576]{0}', space=vmem, size = 0x6000, scoped, tag = 'output window, operand 0']
    #allocation3 [shape = 's32[2]{0}', space=sflag, size = 0x8, scoped, tag = 'scoped memory for tpu_custom_call.1']
    %15 = vsyncpa [#allocation3], 0
    %s16 = scalar_lea.sflag [#allocation3], 1
    %17 = vsyncpa %s16, 0
    loop: start=0, step=1, limit=4
    $region2: #{tpu_custom_call.1} parent=1 // loop_pre_header
      _
    $region3: #{tpu_custom_call.1} parent=1 // loop_header
      %s19 = sphi 0, %s23
      %p20 = scmp.ge.s32.totalorder %s19, 4
      %s29 = sphi 0, %s31
      %s32 = sphi 0, %s29
      %s33 = sphi 0, %s32
      %s49 = sphi 0, %s33
      %s53 = sphi 0, %s53
      %s55 = sphi 0, %s53
      %s56 = sphi 0, %s55
      %s70 = sphi 0, %s56
      %s74 = sphi 0, %s74
      %s76 = sphi 0, %s74
      %s77 = sphi 0, %s76
      %s91 = sphi 0, %s77
      %s95 = sphi 0, %s95
      %s97 = sphi 0, %s95
      %s98 = sphi 0, %s97
      %s112 = sphi 0, %s98
      %s116 = sphi 0, %s116
      %s118 = sphi 0, %s116
      %s119 = sphi 0, %s118
      %s133 = sphi 0, %s119
      %s137 = sphi 0, %s137
      %s139 = sphi 0, %s137
      %s140 = sphi 0, %s139
      %s154 = sphi 0, %s140
      %s158 = sphi 0, %s158
      %s160 = sphi 0, %s158
      %s161 = sphi 0, %s160
      %s175 = sphi 0, %s161
      %s179 = sphi 0, %s179
      %s181 = sphi 0, %s179
      %s182 = sphi 0, %s181
      %s196 = sphi 0, %s182
      %s200 = sphi 0, %s200
      %s202 = sphi 0, %s200
      %s203 = sphi 0, %s202
      %s217 = sphi 0, %s203
      %s221 = sphi 0, %s221
      %s223 = sphi 0, %s221
      %s224 = sphi 0, %s223
      %s238 = sphi 0, %s224
      %s244 = sphi 0, %s246
      %s247 = sphi 0, %s244
      %s248 = sphi 0, %s247
      %s264 = sphi 0, %s248
    $region4: #{tpu_custom_call.1} parent=1 // loop_header_branch
      %22 = sbr.rel (%p20) target = $region8
    $region5: #{tpu_custom_call.1} parent=1 // loop_body
      %s24 = ssub.s32 %s19, 1
      %s25 = ssub.s32 %s19, 2
      %s26 = sadd.s32 %s19, 1
      %s27 = ssub.s32 %s19, %s26
      %p28 = scmp.eq.s32.totalorder %s27, 0
      %s30 = sadd.s32 %s29, 1
      %s31 = scalar_select %p28, %s29, %s30
      %p34 = pneg %p28
      %p35 = scmp.eq.s32.totalorder %s19, 1
      %p36 = por %p34, %p35
      %p37 = scmp.ne.s32.totalorder %s29, %s32
      %p38 = scmp.eq.s32.totalorder %s19, 0
      %p39 = por %p37, %p38
      %p40 = scmp.ne.s32.totalorder %s29, %s32
      %p41 = scmp.eq.s32.totalorder %s24, 1
      %p42 = por %p40, %p41
      %p43 = scmp.ne.s32.totalorder %s32, %s33
      %p44 = scmp.eq.s32.totalorder %s24, 0
      %p45 = por %p43, %p44
      %p46 = scmp.ne.s32.totalorder %s32, %s33
      %p47 = scmp.eq.s32.totalorder %s25, 1
      %p48 = por %p46, %p47
      %p50 = scmp.ne.s32.totalorder %s33, %s49
      %p51 = scmp.eq.s32.totalorder %s25, 0
      %p52 = por %p50, %p51
      %s54 = sadd.s32 %s53, 1
      %p57 = scmp.eq.s32.totalorder %s19, 1
      %p58 = scmp.ne.s32.totalorder %s53, %s55
      %p59 = scmp.eq.s32.totalorder %s19, 0
      %p60 = por %p58, %p59
      %p61 = scmp.ne.s32.totalorder %s53, %s55
      %p62 = scmp.eq.s32.totalorder %s24, 1
      %p63 = por %p61, %p62
      %p64 = scmp.ne.s32.totalorder %s55, %s56
      %p65 = scmp.eq.s32.totalorder %s24, 0
      %p66 = por %p64, %p65
      %p67 = scmp.ne.s32.totalorder %s55, %s56
      %p68 = scmp.eq.s32.totalorder %s25, 1
      %p69 = por %p67, %p68
      %p71 = scmp.ne.s32.totalorder %s56, %s70
      %p72 = scmp.eq.s32.totalorder %s25, 0
      %p73 = por %p71, %p72
      %s75 = sadd.s32 %s74, 1
      %p78 = scmp.eq.s32.totalorder %s19, 1
      %p79 = scmp.ne.s32.totalorder %s74, %s76
      %p80 = scmp.eq.s32.totalorder %s19, 0
      %p81 = por %p79, %p80
      %p82 = scmp.ne.s32.totalorder %s74, %s76
      %p83 = scmp.eq.s32.totalorder %s24, 1
      %p84 = por %p82, %p83
      %p85 = scmp.ne.s32.totalorder %s76, %s77
      %p86 = scmp.eq.s32.totalorder %s24, 0
      %p87 = por %p85, %p86
      %p88 = scmp.ne.s32.totalorder %s76, %s77
      %p89 = scmp.eq.s32.totalorder %s25, 1
      %p90 = por %p88, %p89
      %p92 = scmp.ne.s32.totalorder %s77, %s91
      %p93 = scmp.eq.s32.totalorder %s25, 0
      %p94 = por %p92, %p93
      %s96 = sadd.s32 %s95, 1
      %p99 = scmp.eq.s32.totalorder %s19, 1
      %p100 = scmp.ne.s32.totalorder %s95, %s97
      %p101 = scmp.eq.s32.totalorder %s19, 0
      %p102 = por %p100, %p101
      %p103 = scmp.ne.s32.totalorder %s95, %s97
      %p104 = scmp.eq.s32.totalorder %s24, 1
      %p105 = por %p103, %p104
      %p106 = scmp.ne.s32.totalorder %s97, %s98
      %p107 = scmp.eq.s32.totalorder %s24, 0
      %p108 = por %p106, %p107
      %p109 = scmp.ne.s32.totalorder %s97, %s98
      %p110 = scmp.eq.s32.totalorder %s25, 1
      %p111 = por %p109, %p110
      %p113 = scmp.ne.s32.totalorder %s98, %s112
      %p114 = scmp.eq.s32.totalorder %s25, 0
      %p115 = por %p113, %p114
      %s117 = sadd.s32 %s116, 1
      %p120 = scmp.eq.s32.totalorder %s19, 1
      %p121 = scmp.ne.s32.totalorder %s116, %s118
      %p122 = scmp.eq.s32.totalorder %s19, 0
      %p123 = por %p121, %p122
      %p124 = scmp.ne.s32.totalorder %s116, %s118
      %p125 = scmp.eq.s32.totalorder %s24, 1
      %p126 = por %p124, %p125
      %p127 = scmp.ne.s32.totalorder %s118, %s119
      %p128 = scmp.eq.s32.totalorder %s24, 0
      %p129 = por %p127, %p128
      %p130 = scmp.ne.s32.totalorder %s118, %s119
      %p131 = scmp.eq.s32.totalorder %s25, 1
      %p132 = por %p130, %p131
      %p134 = scmp.ne.s32.totalorder %s119, %s133
      %p135 = scmp.eq.s32.totalorder %s25, 0
      %p136 = por %p134, %p135
      %s138 = sadd.s32 %s137, 1
      %p141 = scmp.eq.s32.totalorder %s19, 1
      %p142 = scmp.ne.s32.totalorder %s137, %s139
      %p143 = scmp.eq.s32.totalorder %s19, 0
      %p144 = por %p142, %p143
      %p145 = scmp.ne.s32.totalorder %s137, %s139
      %p146 = scmp.eq.s32.totalorder %s24, 1
      %p147 = por %p145, %p146
      %p148 = scmp.ne.s32.totalorder %s139, %s140
      %p149 = scmp.eq.s32.totalorder %s24, 0
      %p150 = por %p148, %p149
      %p151 = scmp.ne.s32.totalorder %s139, %s140
      %p152 = scmp.eq.s32.totalorder %s25, 1
      %p153 = por %p151, %p152
      %p155 = scmp.ne.s32.totalorder %s140, %s154
      %p156 = scmp.eq.s32.totalorder %s25, 0
      %p157 = por %p155, %p156
      %s159 = sadd.s32 %s158, 1
      %p162 = scmp.eq.s32.totalorder %s19, 1
      %p163 = scmp.ne.s32.totalorder %s158, %s160
      %p164 = scmp.eq.s32.totalorder %s19, 0
      %p165 = por %p163, %p164
      %p166 = scmp.ne.s32.totalorder %s158, %s160
      %p167 = scmp.eq.s32.totalorder %s24, 1
      %p168 = por %p166, %p167
      %p169 = scmp.ne.s32.totalorder %s160, %s161
      %p170 = scmp.eq.s32.totalorder %s24, 0
      %p171 = por %p169, %p170
      %p172 = scmp.ne.s32.totalorder %s160, %s161
      %p173 = scmp.eq.s32.totalorder %s25, 1
      %p174 = por %p172, %p173
      %p176 = scmp.ne.s32.totalorder %s161, %s175
      %p177 = scmp.eq.s32.totalorder %s25, 0
      %p178 = por %p176, %p177
      %s180 = sadd.s32 %s179, 1
      %p183 = scmp.eq.s32.totalorder %s19, 1
      %p184 = scmp.ne.s32.totalorder %s179, %s181
      %p185 = scmp.eq.s32.totalorder %s19, 0
      %p186 = por %p184, %p185
      %p187 = scmp.ne.s32.totalorder %s179, %s181
      %p188 = scmp.eq.s32.totalorder %s24, 1
      %p189 = por %p187, %p188
      %p190 = scmp.ne.s32.totalorder %s181, %s182
      %p191 = scmp.eq.s32.totalorder %s24, 0
      %p192 = por %p190, %p191
      %p193 = scmp.ne.s32.totalorder %s181, %s182
      %p194 = scmp.eq.s32.totalorder %s25, 1
      %p195 = por %p193, %p194
      %p197 = scmp.ne.s32.totalorder %s182, %s196
      %p198 = scmp.eq.s32.totalorder %s25, 0
      %p199 = por %p197, %p198
      %s201 = sadd.s32 %s200, 1
      %p204 = scmp.eq.s32.totalorder %s19, 1
      %p205 = scmp.ne.s32.totalorder %s200, %s202
      %p206 = scmp.eq.s32.totalorder %s19, 0
      %p207 = por %p205, %p206
      %p208 = scmp.ne.s32.totalorder %s200, %s202
      %p209 = scmp.eq.s32.totalorder %s24, 1
      %p210 = por %p208, %p209
      %p211 = scmp.ne.s32.totalorder %s202, %s203
      %p212 = scmp.eq.s32.totalorder %s24, 0
      %p213 = por %p211, %p212
      %p214 = scmp.ne.s32.totalorder %s202, %s203
      %p215 = scmp.eq.s32.totalorder %s25, 1
      %p216 = por %p214, %p215
      %p218 = scmp.ne.s32.totalorder %s203, %s217
      %p219 = scmp.eq.s32.totalorder %s25, 0
      %p220 = por %p218, %p219
      %s222 = sadd.s32 %s221, 1
      %p225 = scmp.eq.s32.totalorder %s19, 1
      %p226 = scmp.ne.s32.totalorder %s221, %s223
      %p227 = scmp.eq.s32.totalorder %s19, 0
      %p228 = por %p226, %p227
      %p229 = scmp.ne.s32.totalorder %s221, %s223
      %p230 = scmp.eq.s32.totalorder %s24, 1
      %p231 = por %p229, %p230
      %p232 = scmp.ne.s32.totalorder %s223, %s224
      %p233 = scmp.eq.s32.totalorder %s24, 0
      %p234 = por %p232, %p233
      %p235 = scmp.ne.s32.totalorder %s223, %s224
      %p236 = scmp.eq.s32.totalorder %s25, 1
      %p237 = por %p235, %p236
      %p239 = scmp.ne.s32.totalorder %s224, %s238
      %p240 = scmp.eq.s32.totalorder %s25, 0
      %p241 = por %p239, %p240
      %s242 = ssub.s32 %s19, %s26
      %p243 = scmp.eq.s32.totalorder %s242, 0
      %s245 = sadd.s32 %s244, 1
      %s246 = scalar_select %p243, %s244, %s245
      %p249 = pneg %p243
      %p250 = scmp.eq.s32.totalorder %s19, 1
      %p251 = por %p249, %p250
      %p252 = scmp.ne.s32.totalorder %s244, %s247
      %p253 = scmp.eq.s32.totalorder %s19, 0
      %p254 = por %p252, %p253
      %p255 = scmp.ne.s32.totalorder %s244, %s247
      %p256 = scmp.eq.s32.totalorder %s24, 1
      %p257 = por %p255, %p256
      %p258 = scmp.ne.s32.totalorder %s247, %s248
      %p259 = scmp.eq.s32.totalorder %s24, 0
      %p260 = por %p258, %p259
      %p261 = scmp.ne.s32.totalorder %s247, %s248
      %p262 = scmp.eq.s32.totalorder %s25, 1
      %p263 = por %p261, %p262
      %p265 = scmp.ne.s32.totalorder %s248, %s264
      %p266 = scmp.eq.s32.totalorder %s25, 0
      %p267 = por %p265, %p266
      %p268 = scmp.le.s32.totalorder 1, %s19
      %p269 = scmp.lt.s32.totalorder %s19, 3
      %p270 = pnand %p268, %p269
      %p271 = pneg %p270
      // Predicated region
      $region9: #{tpu_custom_call.1} parent=5 // pred_check
        _
      $region10: #{tpu_custom_call.1} parent=5 // pred_check_branch
        %273 = sbr.rel (%p270) target = $region12
      $region11: #{tpu_custom_call.1} parent=5 // pred_region
        %s274 = ssub.s32 %s19, 1
        // Predicated region
        $region13: #{tpu_custom_call.1} parent=11 // pred_check
          %p275 = pneg %p66
        $region14: #{tpu_custom_call.1} parent=11 // pred_check_branch
          %277 = sbr.rel (%p275) target = $region16
        $region15: #{tpu_custom_call.1} parent=11 // pred_region
          _
        $region16: #{tpu_custom_call.1} parent=11 // pred_fallthru
          _
        // Predicated region
        $region17: #{tpu_custom_call.1} parent=11 // pred_check
          %p278 = pneg %p87
        $region18: #{tpu_custom_call.1} parent=11 // pred_check_branch
          %280 = sbr.rel (%p278) target = $region20
        $region19: #{tpu_custom_call.1} parent=11 // pred_region
          _
        $region20: #{tpu_custom_call.1} parent=11 // pred_fallthru
          _
        // Predicated region
        $region21: #{tpu_custom_call.1} parent=11 // pred_check
          %p281 = pneg %p108
        $region22: #{tpu_custom_call.1} parent=11 // pred_check_branch
          %283 = sbr.rel (%p281) target = $region24
        $region23: #{tpu_custom_call.1} parent=11 // pred_region
          _
        $region24: #{tpu_custom_call.1} parent=11 // pred_fallthru
          _
        // Predicated region
        $region25: #{tpu_custom_call.1} parent=11 // pred_check
          %p284 = pneg %p129
        $region26: #{tpu_custom_call.1} parent=11 // pred_check_branch
          %286 = sbr.rel (%p284) target = $region28
        $region27: #{tpu_custom_call.1} parent=11 // pred_region
          _
        $region28: #{tpu_custom_call.1} parent=11 // pred_fallthru
          _
        // Predicated region
        $region29: #{tpu_custom_call.1} parent=11 // pred_check
          %p287 = pneg %p150
        $region30: #{tpu_custom_call.1} parent=11 // pred_check_branch
          %289 = sbr.rel (%p287) target = $region32
        $region31: #{tpu_custom_call.1} parent=11 // pred_region
          _
        $region32: #{tpu_custom_call.1} parent=11 // pred_fallthru
          _
        // Predicated region
        $region33: #{tpu_custom_call.1} parent=11 // pred_check
          %p290 = pneg %p171
        $region34: #{tpu_custom_call.1} parent=11 // pred_check_branch
          %292 = sbr.rel (%p290) target = $region36
        $region35: #{tpu_custom_call.1} parent=11 // pred_region
          _
        $region36: #{tpu_custom_call.1} parent=11 // pred_fallthru
          _
        // Predicated region
        $region37: #{tpu_custom_call.1} parent=11 // pred_check
          %p293 = pneg %p192
        $region38: #{tpu_custom_call.1} parent=11 // pred_check_branch
          %295 = sbr.rel (%p293) target = $region40
        $region39: #{tpu_custom_call.1} parent=11 // pred_region
          _
        $region40: #{tpu_custom_call.1} parent=11 // pred_fallthru
          _
        // Predicated region
        $region41: #{tpu_custom_call.1} parent=11 // pred_check
          %p296 = pneg %p213
        $region42: #{tpu_custom_call.1} parent=11 // pred_check_branch
          %298 = sbr.rel (%p296) target = $region44
        $region43: #{tpu_custom_call.1} parent=11 // pred_region
          _
        $region44: #{tpu_custom_call.1} parent=11 // pred_fallthru
          _
        // Predicated region
        $region45: #{tpu_custom_call.1} parent=11 // pred_check
          %p299 = pneg %p234
        $region46: #{tpu_custom_call.1} parent=11 // pred_check_branch
          %301 = sbr.rel (%p299) target = $region48
        $region47: #{tpu_custom_call.1} parent=11 // pred_region
          _
        $region48: #{tpu_custom_call.1} parent=11 // pred_fallthru
          _
      $region12: #{tpu_custom_call.1} parent=5 // pred_fallthru
        _
      %p302 = scmp.lt.s32.totalorder %s19, 2
      // Predicated region
      $region49: #{tpu_custom_call.1} parent=5 // pred_check
        %p303 = pneg %p302
      $region50: #{tpu_custom_call.1} parent=5 // pred_check_branch
        %305 = sbr.rel (%p303) target = $region52
      $region51: #{tpu_custom_call.1} parent=5 // pred_region
        // Predicated region
        $region53: #{tpu_custom_call.1} parent=51 // pred_check
          %p306 = pneg %p39
        $region54: #{tpu_custom_call.1} parent=51 // pred_check_branch
          %308 = sbr.rel (%p306) target = $region56
        $region55: #{tpu_custom_call.1} parent=51 // pred_region
          %p309 = scmp.lt.s32.totalorder %s19, 1
          %s310 = scalar_select %p309, %s19, 1
          %s311 = smul.addr %s310, 3
          %s312 = smul.addr %s311, 4
          %s313 = scalar_lea.vmem %s0, %s312
        $region56: #{tpu_custom_call.1} parent=51 // pred_fallthru
          _
      $region52: #{tpu_custom_call.1} parent=5 // pred_fallthru
        _
      %p314 = scmp.le.s32.totalorder 1, %s19
      %p315 = scmp.lt.s32.totalorder %s19, 3
      %p316 = pnand %p314, %p315
      %p317 = pneg %p316
      // Predicated region
      $region57: #{tpu_custom_call.1} parent=5 // pred_check
        _
      $region58: #{tpu_custom_call.1} parent=5 // pred_check_branch
        %319 = sbr.rel (%p316) target = $region60
      $region59: #{tpu_custom_call.1} parent=5 // pred_region
        %s320 = ssub.s32 %s19, 1
        %p321 = scmp.lt.s32.totalorder %s24, 1
        %s322 = scalar_select %p321, %s24, 1
        %s323 = smul.addr %s322, 3
        %s324 = smul.addr %s323, 4
        %s325 = scalar_lea.vmem %s0, %s324
        %p326 = pneg %p45
        %p327 = pneg %p42
        %p328 = pneg %p66
        %p329 = pneg %p63
        %p330 = pneg %p87
        %p331 = pneg %p84
        %p332 = pneg %p108
        %p333 = pneg %p105
        %p334 = pneg %p129
        %p335 = pneg %p126
        %p336 = pneg %p150
        %p337 = pneg %p147
        %p338 = pneg %p171
        %p339 = pneg %p168
        %p340 = pneg %p192
        %p341 = pneg %p189
        %p342 = pneg %p213
        %p343 = pneg %p210
        %p344 = pneg %p234
        %p345 = pneg %p231
        %p346 = pneg %p260
        %p347 = pneg %p257
        %s348 = sand.u32 %s247, 1
        %s349 = scalar_lea.sflag [#allocation3], %s348
        %s350 = sand.u32 %s247, 1
        %s351 = smul.addr %s350, 24
        %s352 = scalar_lea.vmem [#allocation2], %s351
        %p353 = scmp.lt.s32.totalorder %s24, 1
        %s354 = scalar_select %p353, %s24, 1
        %s355 = smul.addr %s354, 3
        %s356 = smul.addr %s355, 4
        %s357 = scalar_lea.vmem %s0, %s356
        %v358 = vld [vmem:[%s357] sm:$0xff]
        %v359 = vld [vmem:[%s357 + $0x8] sm:$0xf]
        %v360 = vld [vmem:[%s1] sm:$0x7]
        %v361 = vld [vmem:[%s2] sm:$0xff]
        %s362 = scalar_lea.vmem %s2, 8
        %v363 = vld [vmem:[%s362] sm:$0xff]
        %v366 = vcombine.high %v358, %v358
        %367 = vrot.lane.b32.xlu0 %v358, 127
        %v368 = vpop.permute.xlu0 %367
        %369 = vrot.lane.b32.xlu0 %v366, 127
        %v370 = vpop.permute.xlu0 %369
        %371 = vrot.lane.b32.xlu0 %v359, 127
        %v372 = vpop.permute.xlu0 %371
        %vm373 = vcmask 1039360
        %v374 = vsel %vm373, %v368, %v370
        %v375 = vsel %vm373, %v370, %v372
        %vm376 = vcmask 31744
        %v378 = vsel %vm376, %v363, 0
        %vm380 = vcmask 1043456
        %v381 = vsel %vm380, %v374, 0
        %v383 = vsel %vm380, %v375, 0
        %v385 = vsel %vm380, %v372, 0
        %387 = vmatprep.subr.mxu0 0.0
        %388 = vmatpush1.msra.mxu0 0.0
        %389 = vmatprep.subr.mxu0 0.0
        %390 = vmatpush1.msra.mxu0 0.0
        %391 = vmatprep.subr.mxu0 0.0
        %392 = vmatpush1.msra.mxu0 0.0
        %393 = vmatprep.subr.mxu0 0.0
        %394 = vmatpush1.msra.mxu0 0.0
        %395 = vmatprep.subr.mxu0 0.0
        %396 = vmatpush1.msra.mxu0 0.0
        %397 = vmatprep.subr.mxu0 0.0
        %398 = vmatpush1.msra.mxu0 0.0
        %399 = vmatprep.subr.mxu0 0.0
        %400 = vmatpush1.msra.mxu0 0.0
        %401 = vmatprep.subr.mxu0 0.0
        %402 = vmatpush1.msra.mxu0 0.0
        %403 = vmatprep.subr.mxu0 0.0
        %404 = vmatpush1.msra.mxu0 0.0
        %405 = vmatprep.subr.mxu0 0.0
        %406 = vmatpush1.msra.mxu0 0.0
        %407 = vmatprep.subr.mxu0 0.0
        %408 = vmatpush1.msra.mxu0 0.0
        %409 = vmatprep.subr.mxu0 0.0
        %410 = vmatpush1.msra.mxu0 0.0
        %411 = vmatprep.subr.mxu0 0.0
        %412 = vmatpush1.msra.mxu0 0.0
        %413 = vmatprep.subr.mxu0 0.0
        %414 = vmatpush1.msra.mxu0 0.0
        %415 = vmatprep.subr.mxu0 0.0
        %416 = vmatpush1.msra.mxu0 0.0
        %417 = vmatprep.subr.mxu0 %v383
        %418 = vmatpush1.msra.mxu0 %v381
        %419 = vmatprep.subr.mxu0 0.0
        %420 = vmatpush2.msra.mxu0 0.0
        %421 = vmatprep.subr.mxu0 0.0
        %422 = vmatpush2.msra.mxu0 0.0
        %423 = vmatprep.subr.mxu0 0.0
        %424 = vmatpush2.msra.mxu0 0.0
        %425 = vmatprep.subr.mxu0 0.0
        %426 = vmatpush2.msra.mxu0 0.0
        %427 = vmatprep.subr.mxu0 0.0
        %428 = vmatpush2.msra.mxu0 0.0
        %429 = vmatprep.subr.mxu0 0.0
        %430 = vmatpush2.msra.mxu0 0.0
        %431 = vmatprep.subr.mxu0 0.0
        %432 = vmatpush2.msra.mxu0 0.0
        %433 = vmatprep.subr.mxu0 0.0
        %434 = vmatpush2.msra.mxu0 0.0
        %435 = vmatprep.subr.mxu0 0.0
        %436 = vmatpush2.msra.mxu0 0.0
        %437 = vmatprep.subr.mxu0 0.0
        %438 = vmatpush2.msra.mxu0 0.0
        %439 = vmatprep.subr.mxu0 0.0
        %440 = vmatpush2.msra.mxu0 0.0
        %441 = vmatprep.subr.mxu0 0.0
        %442 = vmatpush2.msra.mxu0 0.0
        %443 = vmatprep.subr.mxu0 0.0
        %444 = vmatpush2.msra.mxu0 0.0
        %445 = vmatprep.subr.mxu0 0.0
        %446 = vmatpush2.msra.mxu0 0.0
        %447 = vmatprep.subr.mxu0 0.0
        %448 = vmatpush2.msra.mxu0 0.0
        %449 = vmatprep.subr.mxu0 0.0
        %450 = vmatpush2.msra.mxu0 0.0
        %451 = vmatprep.mubr.f32.mxu0 0.0
        %452 = vmatmul.mubr.f32.gmra.mxu0 %v378
        %v453 = vpop.f32.mrf.mxu0
        %v454 = vadd.f32 0.0, %v453
        %v455 = vpop.f32.mrf.mxu0
        %v456 = vadd.f32 0.0, %v455
        %457 = vdwg.mxu0
        %458 = vmatprep.subr.mxu0 0.0
        %459 = vmatpush1.msra.mxu0 0.0
        %460 = vmatprep.subr.mxu0 0.0
        %461 = vmatpush1.msra.mxu0 0.0
        %462 = vmatprep.subr.mxu0 0.0
        %463 = vmatpush1.msra.mxu0 0.0
        %464 = vmatprep.subr.mxu0 0.0
        %465 = vmatpush1.msra.mxu0 0.0
        %466 = vmatprep.subr.mxu0 0.0
        %467 = vmatpush1.msra.mxu0 0.0
        %468 = vmatprep.subr.mxu0 0.0
        %469 = vmatpush1.msra.mxu0 0.0
        %470 = vmatprep.subr.mxu0 0.0
        %471 = vmatpush1.msra.mxu0 0.0
        %472 = vmatprep.subr.mxu0 0.0
        %473 = vmatpush1.msra.mxu0 0.0
        %474 = vmatprep.subr.mxu0 0.0
        %475 = vmatpush1.msra.mxu0 0.0
        %476 = vmatprep.subr.mxu0 0.0
        %477 = vmatpush1.msra.mxu0 0.0
        %478 = vmatprep.subr.mxu0 0.0
        %479 = vmatpush1.msra.mxu0 0.0
        %480 = vmatprep.subr.mxu0 0.0
        %481 = vmatpush1.msra.mxu0 0.0
        %482 = vmatprep.subr.mxu0 0.0
        %483 = vmatpush1.msra.mxu0 0.0
        %484 = vmatprep.subr.mxu0 0.0
        %485 = vmatpush1.msra.mxu0 0.0
        %486 = vmatprep.subr.mxu0 0.0
        %487 = vmatpush1.msra.mxu0 0.0
        %488 = vmatprep.subr.mxu0 0.0
        %489 = vmatpush1.msra.mxu0 %v385
        %490 = vmatprep.subr.mxu0 0.0
        %491 = vmatpush2.msra.mxu0 0.0
        %492 = vmatprep.subr.mxu0 0.0
        %493 = vmatpush2.msra.mxu0 0.0
        %494 = vmatprep.subr.mxu0 0.0
        %495 = vmatpush2.msra.mxu0 0.0
        %496 = vmatprep.subr.mxu0 0.0
        %497 = vmatpush2.msra.mxu0 0.0
        %498 = vmatprep.subr.mxu0 0.0
        %499 = vmatpush2.msra.mxu0 0.0
        %500 = vmatprep.subr.mxu0 0.0
        %501 = vmatpush2.msra.mxu0 0.0
        %502 = vmatprep.subr.mxu0 0.0
        %503 = vmatpush2.msra.mxu0 0.0
        %504 = vmatprep.subr.mxu0 0.0
        %505 = vmatpush2.msra.mxu0 0.0
        %506 = vmatprep.subr.mxu0 0.0
        %507 = vmatpush2.msra.mxu0 0.0
        %508 = vmatprep.subr.mxu0 0.0
        %509 = vmatpush2.msra.mxu0 0.0
        %510 = vmatprep.subr.mxu0 0.0
        %511 = vmatpush2.msra.mxu0 0.0
        %512 = vmatprep.subr.mxu0 0.0
        %513 = vmatpush2.msra.mxu0 0.0
        %514 = vmatprep.subr.mxu0 0.0
        %515 = vmatpush2.msra.mxu0 0.0
        %516 = vmatprep.subr.mxu0 0.0
        %517 = vmatpush2.msra.mxu0 0.0
        %518 = vmatprep.subr.mxu0 0.0
        %519 = vmatpush2.msra.mxu0 0.0
        %520 = vmatprep.subr.mxu0 0.0
        %521 = vmatpush2.msra.mxu0 0.0
        %522 = vmatprep.mubr.f32.mxu0 0.0
        %523 = vmatmul.mubr.f32.gmra.mxu0 %v378
        %v524 = vpop.f32.mrf.mxu0
        %v525 = vadd.f32 0.0, %v524
        %v526 = vpop.f32.mrf.mxu0
        %527 = vdwg.mxu0
        %v529 = vsel %vm376, %v361, 0
        %v531 = vsel %vm380, %v358, 0
        %v533 = vsel %vm380, %v366, 0
        %v535 = vsel %vm380, %v359, 0
        %537 = vmatprep.subr.mxu0 0.0
        %538 = vmatpush1.msra.mxu0 0.0
        %539 = vmatprep.subr.mxu0 0.0
        %540 = vmatpush1.msra.mxu0 0.0
        %541 = vmatprep.subr.mxu0 0.0
        %542 = vmatpush1.msra.mxu0 0.0
        %543 = vmatprep.subr.mxu0 0.0
        %544 = vmatpush1.msra.mxu0 0.0
        %545 = vmatprep.subr.mxu0 0.0
        %546 = vmatpush1.msra.mxu0 0.0
        %547 = vmatprep.subr.mxu0 0.0
        %548 = vmatpush1.msra.mxu0 0.0
        %549 = vmatprep.subr.mxu0 0.0
        %550 = vmatpush1.msra.mxu0 0.0
        %551 = vmatprep.subr.mxu0 0.0
        %552 = vmatpush1.msra.mxu0 0.0
        %553 = vmatprep.subr.mxu0 0.0
        %554 = vmatpush1.msra.mxu0 0.0
        %555 = vmatprep.subr.mxu0 0.0
        %556 = vmatpush1.msra.mxu0 0.0
        %557 = vmatprep.subr.mxu0 0.0
        %558 = vmatpush1.msra.mxu0 0.0
        %559 = vmatprep.subr.mxu0 0.0
        %560 = vmatpush1.msra.mxu0 0.0
        %561 = vmatprep.subr.mxu0 0.0
        %562 = vmatpush1.msra.mxu0 0.0
        %563 = vmatprep.subr.mxu0 0.0
        %564 = vmatpush1.msra.mxu0 0.0
        %565 = vmatprep.subr.mxu0 0.0
        %566 = vmatpush1.msra.mxu0 0.0
        %567 = vmatprep.subr.mxu0 %v533
        %568 = vmatpush1.msra.mxu0 %v531
        %569 = vmatprep.subr.mxu0 0.0
        %570 = vmatpush2.msra.mxu0 0.0
        %571 = vmatprep.subr.mxu0 0.0
        %572 = vmatpush2.msra.mxu0 0.0
        %573 = vmatprep.subr.mxu0 0.0
        %574 = vmatpush2.msra.mxu0 0.0
        %575 = vmatprep.subr.mxu0 0.0
        %576 = vmatpush2.msra.mxu0 0.0
        %577 = vmatprep.subr.mxu0 0.0
        %578 = vmatpush2.msra.mxu0 0.0
        %579 = vmatprep.subr.mxu0 0.0
        %580 = vmatpush2.msra.mxu0 0.0
        %581 = vmatprep.subr.mxu0 0.0
        %582 = vmatpush2.msra.mxu0 0.0
        %583 = vmatprep.subr.mxu0 0.0
        %584 = vmatpush2.msra.mxu0 0.0
        %585 = vmatprep.subr.mxu0 0.0
        %586 = vmatpush2.msra.mxu0 0.0
        %587 = vmatprep.subr.mxu0 0.0
        %588 = vmatpush2.msra.mxu0 0.0
        %589 = vmatprep.subr.mxu0 0.0
        %590 = vmatpush2.msra.mxu0 0.0
        %591 = vmatprep.subr.mxu0 0.0
        %592 = vmatpush2.msra.mxu0 0.0
        %593 = vmatprep.subr.mxu0 0.0
        %594 = vmatpush2.msra.mxu0 0.0
        %595 = vmatprep.subr.mxu0 0.0
        %596 = vmatpush2.msra.mxu0 0.0
        %597 = vmatprep.subr.mxu0 0.0
        %598 = vmatpush2.msra.mxu0 0.0
        %599 = vmatprep.subr.mxu0 0.0
        %600 = vmatpush2.msra.mxu0 0.0
        %601 = vmatprep.mubr.f32.mxu0 0.0
        %602 = vmatmul.mubr.f32.gmra.mxu0 %v529
        %v603 = vpop.f32.mrf.mxu0
        %v604 = vadd.f32 %v454, %v603
        %v605 = vpop.f32.mrf.mxu0
        %v606 = vadd.f32 %v456, %v605
        %607 = vdwg.mxu0
        %608 = vmatprep.subr.mxu0 0.0
        %609 = vmatpush1.msra.mxu0 0.0
        %610 = vmatprep.subr.mxu0 0.0
        %611 = vmatpush1.msra.mxu0 0.0
        %612 = vmatprep.subr.mxu0 0.0
        %613 = vmatpush1.msra.mxu0 0.0
        %614 = vmatprep.subr.mxu0 0.0
        %615 = vmatpush1.msra.mxu0 0.0
        %616 = vmatprep.subr.mxu0 0.0
        %617 = vmatpush1.msra.mxu0 0.0
        %618 = vmatprep.subr.mxu0 0.0
        %619 = vmatpush1.msra.mxu0 0.0
        %620 = vmatprep.subr.mxu0 0.0
        %621 = vmatpush1.msra.mxu0 0.0
        %622 = vmatprep.subr.mxu0 0.0
        %623 = vmatpush1.msra.mxu0 0.0
        %624 = vmatprep.subr.mxu0 0.0
        %625 = vmatpush1.msra.mxu0 0.0
        %626 = vmatprep.subr.mxu0 0.0
        %627 = vmatpush1.msra.mxu0 0.0
        %628 = vmatprep.subr.mxu0 0.0
        %629 = vmatpush1.msra.mxu0 0.0
        %630 = vmatprep.subr.mxu0 0.0
        %631 = vmatpush1.msra.mxu0 0.0
        %632 = vmatprep.subr.mxu0 0.0
        %633 = vmatpush1.msra.mxu0 0.0
        %634 = vmatprep.subr.mxu0 0.0
        %635 = vmatpush1.msra.mxu0 0.0
        %636 = vmatprep.subr.mxu0 0.0
        %637 = vmatpush1.msra.mxu0 0.0
        %638 = vmatprep.subr.mxu0 0.0
        %639 = vmatpush1.msra.mxu0 %v535
        %640 = vmatprep.subr.mxu0 0.0
        %641 = vmatpush2.msra.mxu0 0.0
        %642 = vmatprep.subr.mxu0 0.0
        %643 = vmatpush2.msra.mxu0 0.0
        %644 = vmatprep.subr.mxu0 0.0
        %645 = vmatpush2.msra.mxu0 0.0
        %646 = vmatprep.subr.mxu0 0.0
        %647 = vmatpush2.msra.mxu0 0.0
        %648 = vmatprep.subr.mxu0 0.0
        %649 = vmatpush2.msra.mxu0 0.0
        %650 = vmatprep.subr.mxu0 0.0
        %651 = vmatpush2.msra.mxu0 0.0
        %652 = vmatprep.subr.mxu0 0.0
        %653 = vmatpush2.msra.mxu0 0.0
        %654 = vmatprep.subr.mxu0 0.0
        %655 = vmatpush2.msra.mxu0 0.0
        %656 = vmatprep.subr.mxu0 0.0
        %657 = vmatpush2.msra.mxu0 0.0
        %658 = vmatprep.subr.mxu0 0.0
        %659 = vmatpush2.msra.mxu0 0.0
        %660 = vmatprep.subr.mxu0 0.0
        %661 = vmatpush2.msra.mxu0 0.0
        %662 = vmatprep.subr.mxu0 0.0
        %663 = vmatpush2.msra.mxu0 0.0
        %664 = vmatprep.subr.mxu0 0.0
        %665 = vmatpush2.msra.mxu0 0.0
        %666 = vmatprep.subr.mxu0 0.0
        %667 = vmatpush2.msra.mxu0 0.0
        %668 = vmatprep.subr.mxu0 0.0
        %669 = vmatpush2.msra.mxu0 0.0
        %670 = vmatprep.subr.mxu0 0.0
        %671 = vmatpush2.msra.mxu0 0.0
        %672 = vmatprep.mubr.f32.mxu0 0.0
        %673 = vmatmul.mubr.f32.gmra.mxu0 %v529
        %v674 = vpop.f32.mrf.mxu0
        %v675 = vadd.f32 %v525, %v674
        %v676 = vpop.f32.mrf.mxu0
        %677 = vdwg.mxu0
        %s678 = scalar_lea.vmem %s2, 16
        %v679 = vld [vmem:[%s678] sm:$0xff]
        %680 = vrot.lane.b32.xlu0 %v358, 126
        %v681 = vpop.permute.xlu0 %680
        %682 = vrot.lane.b32.xlu0 %v366, 126
        %v683 = vpop.permute.xlu0 %682
        %684 = vrot.lane.b32.xlu0 %v359, 126
        %v685 = vpop.permute.xlu0 %684
        %vm686 = vcmask 1031168
        %v687 = vsel %vm686, %v681, %v683
        %v688 = vsel %vm686, %v683, %v685
        %v690 = vsel %vm376, %v679, 0
        %v692 = vsel %vm380, %v687, 0
        %v694 = vsel %vm380, %v688, 0
        %v696 = vsel %vm380, %v685, 0
        %698 = vmatprep.subr.mxu0 0.0
        %699 = vmatpush1.msra.mxu0 0.0
        %700 = vmatprep.subr.mxu0 0.0
        %701 = vmatpush1.msra.mxu0 0.0
        %702 = vmatprep.subr.mxu0 0.0
        %703 = vmatpush1.msra.mxu0 0.0
        %704 = vmatprep.subr.mxu0 0.0
        %705 = vmatpush1.msra.mxu0 0.0
        %706 = vmatprep.subr.mxu0 0.0
        %707 = vmatpush1.msra.mxu0 0.0
        %708 = vmatprep.subr.mxu0 0.0
        %709 = vmatpush1.msra.mxu0 0.0
        %710 = vmatprep.subr.mxu0 0.0
        %711 = vmatpush1.msra.mxu0 0.0
        %712 = vmatprep.subr.mxu0 0.0
        %713 = vmatpush1.msra.mxu0 0.0
        %714 = vmatprep.subr.mxu0 0.0
        %715 = vmatpush1.msra.mxu0 0.0
        %716 = vmatprep.subr.mxu0 0.0
        %717 = vmatpush1.msra.mxu0 0.0
        %718 = vmatprep.subr.mxu0 0.0
        %719 = vmatpush1.msra.mxu0 0.0
        %720 = vmatprep.subr.mxu0 0.0
        %721 = vmatpush1.msra.mxu0 0.0
        %722 = vmatprep.subr.mxu0 0.0
        %723 = vmatpush1.msra.mxu0 0.0
        %724 = vmatprep.subr.mxu0 0.0
        %725 = vmatpush1.msra.mxu0 0.0
        %726 = vmatprep.subr.mxu0 0.0
        %727 = vmatpush1.msra.mxu0 0.0
        %728 = vmatprep.subr.mxu0 %v694
        %729 = vmatpush1.msra.mxu0 %v692
        %730 = vmatprep.subr.mxu0 0.0
        %731 = vmatpush2.msra.mxu0 0.0
        %732 = vmatprep.subr.mxu0 0.0
        %733 = vmatpush2.msra.mxu0 0.0
        %734 = vmatprep.subr.mxu0 0.0
        %735 = vmatpush2.msra.mxu0 0.0
        %736 = vmatprep.subr.mxu0 0.0
        %737 = vmatpush2.msra.mxu0 0.0
        %738 = vmatprep.subr.mxu0 0.0
        %739 = vmatpush2.msra.mxu0 0.0
        %740 = vmatprep.subr.mxu0 0.0
        %741 = vmatpush2.msra.mxu0 0.0
        %742 = vmatprep.subr.mxu0 0.0
        %743 = vmatpush2.msra.mxu0 0.0
        %744 = vmatprep.subr.mxu0 0.0
        %745 = vmatpush2.msra.mxu0 0.0
        %746 = vmatprep.subr.mxu0 0.0
        %747 = vmatpush2.msra.mxu0 0.0
        %748 = vmatprep.subr.mxu0 0.0
        %749 = vmatpush2.msra.mxu0 0.0
        %750 = vmatprep.subr.mxu0 0.0
        %751 = vmatpush2.msra.mxu0 0.0
        %752 = vmatprep.subr.mxu0 0.0
        %753 = vmatpush2.msra.mxu0 0.0
        %754 = vmatprep.subr.mxu0 0.0
        %755 = vmatpush2.msra.mxu0 0.0
        %756 = vmatprep.subr.mxu0 0.0
        %757 = vmatpush2.msra.mxu0 0.0
        %758 = vmatprep.subr.mxu0 0.0
        %759 = vmatpush2.msra.mxu0 0.0
        %760 = vmatprep.subr.mxu0 0.0
        %761 = vmatpush2.msra.mxu0 0.0
        %762 = vmatprep.mubr.f32.mxu0 0.0
        %763 = vmatmul.mubr.f32.gmra.mxu0 %v690
        %v764 = vpop.f32.mrf.mxu0
        %v765 = vadd.f32 0.0, %v764
        %v766 = vpop.f32.mrf.mxu0
        %v767 = vadd.f32 0.0, %v766
        %768 = vdwg.mxu0
        %769 = vmatprep.subr.mxu0 0.0
        %770 = vmatpush1.msra.mxu0 0.0
        %771 = vmatprep.subr.mxu0 0.0
        %772 = vmatpush1.msra.mxu0 0.0
        %773 = vmatprep.subr.mxu0 0.0
        %774 = vmatpush1.msra.mxu0 0.0
        %775 = vmatprep.subr.mxu0 0.0
        %776 = vmatpush1.msra.mxu0 0.0
        %777 = vmatprep.subr.mxu0 0.0
        %778 = vmatpush1.msra.mxu0 0.0
        %779 = vmatprep.subr.mxu0 0.0
        %780 = vmatpush1.msra.mxu0 0.0
        %781 = vmatprep.subr.mxu0 0.0
        %782 = vmatpush1.msra.mxu0 0.0
        %783 = vmatprep.subr.mxu0 0.0
        %784 = vmatpush1.msra.mxu0 0.0
        %785 = vmatprep.subr.mxu0 0.0
        %786 = vmatpush1.msra.mxu0 0.0
        %787 = vmatprep.subr.mxu0 0.0
        %788 = vmatpush1.msra.mxu0 0.0
        %789 = vmatprep.subr.mxu0 0.0
        %790 = vmatpush1.msra.mxu0 0.0
        %791 = vmatprep.subr.mxu0 0.0
        %792 = vmatpush1.msra.mxu0 0.0
        %793 = vmatprep.subr.mxu0 0.0
        %794 = vmatpush1.msra.mxu0 0.0
        %795 = vmatprep.subr.mxu0 0.0
        %796 = vmatpush1.msra.mxu0 0.0
        %797 = vmatprep.subr.mxu0 0.0
        %798 = vmatpush1.msra.mxu0 0.0
        %799 = vmatprep.subr.mxu0 0.0
        %800 = vmatpush1.msra.mxu0 %v696
        %801 = vmatprep.subr.mxu0 0.0
        %802 = vmatpush2.msra.mxu0 0.0
        %803 = vmatprep.subr.mxu0 0.0
        %804 = vmatpush2.msra.mxu0 0.0
        %805 = vmatprep.subr.mxu0 0.0
        %806 = vmatpush2.msra.mxu0 0.0
        %807 = vmatprep.subr.mxu0 0.0
        %808 = vmatpush2.msra.mxu0 0.0
        %809 = vmatprep.subr.mxu0 0.0
        %810 = vmatpush2.msra.mxu0 0.0
        %811 = vmatprep.subr.mxu0 0.0
        %812 = vmatpush2.msra.mxu0 0.0
        %813 = vmatprep.subr.mxu0 0.0
        %814 = vmatpush2.msra.mxu0 0.0
        %815 = vmatprep.subr.mxu0 0.0
        %816 = vmatpush2.msra.mxu0 0.0
        %817 = vmatprep.subr.mxu0 0.0
        %818 = vmatpush2.msra.mxu0 0.0
        %819 = vmatprep.subr.mxu0 0.0
        %820 = vmatpush2.msra.mxu0 0.0
        %821 = vmatprep.subr.mxu0 0.0
        %822 = vmatpush2.msra.mxu0 0.0
        %823 = vmatprep.subr.mxu0 0.0
        %824 = vmatpush2.msra.mxu0 0.0
        %825 = vmatprep.subr.mxu0 0.0
        %826 = vmatpush2.msra.mxu0 0.0
        %827 = vmatprep.subr.mxu0 0.0
        %828 = vmatpush2.msra.mxu0 0.0
        %829 = vmatprep.subr.mxu0 0.0
        %830 = vmatpush2.msra.mxu0 0.0
        %831 = vmatprep.subr.mxu0 0.0
        %832 = vmatpush2.msra.mxu0 0.0
        %833 = vmatprep.mubr.f32.mxu0 0.0
        %834 = vmatmul.mubr.f32.gmra.mxu0 %v690
        %v835 = vpop.f32.mrf.mxu0
        %v836 = vadd.f32 0.0, %v835
        %v837 = vpop.f32.mrf.mxu0
        %838 = vdwg.mxu0
        %v839 = vadd.f32 %v604, %v765
        %v840 = vadd.f32 %v606, %v767
        %v841 = vadd.f32 %v675, %v836
        %s842 = scalar_lea.vmem %s2, 24
        %v843 = vld [vmem:[%s842] sm:$0xff]
        %844 = vrot.lane.b32.xlu0 %v358, 110
        %v845 = vpop.permute.xlu0 %844
        %846 = vrot.lane.b32.xlu0 %v366, 110
        %v847 = vpop.permute.xlu0 %846
        %848 = vrot.lane.b32.xlu0 %v359, 110
        %v849 = vpop.permute.xlu0 %848
        %vm850 = vcmask 900096
        %v851 = vsel %vm850, %v845, %v847
        %v852 = vsel %vm850, %v847, %v849
        %v854 = vsel %vm376, %v843, 0
        %v856 = vsel %vm380, %v851, 0
        %v858 = vsel %vm380, %v852, 0
        %v860 = vsel %vm380, %v849, 0
        %862 = vmatprep.subr.mxu0 0.0
        %863 = vmatpush1.msra.mxu0 0.0
        %864 = vmatprep.subr.mxu0 0.0
        %865 = vmatpush1.msra.mxu0 0.0
        %866 = vmatprep.subr.mxu0 0.0
        %867 = vmatpush1.msra.mxu0 0.0
        %868 = vmatprep.subr.mxu0 0.0
        %869 = vmatpush1.msra.mxu0 0.0
        %870 = vmatprep.subr.mxu0 0.0
        %871 = vmatpush1.msra.mxu0 0.0
        %872 = vmatprep.subr.mxu0 0.0
        %873 = vmatpush1.msra.mxu0 0.0
        %874 = vmatprep.subr.mxu0 0.0
        %875 = vmatpush1.msra.mxu0 0.0
        %876 = vmatprep.subr.mxu0 0.0
        %877 = vmatpush1.msra.mxu0 0.0
        %878 = vmatprep.subr.mxu0 0.0
        %879 = vmatpush1.msra.mxu0 0.0
        %880 = vmatprep.subr.mxu0 0.0
        %881 = vmatpush1.msra.mxu0 0.0
        %882 = vmatprep.subr.mxu0 0.0
        %883 = vmatpush1.msra.mxu0 0.0
        %884 = vmatprep.subr.mxu0 0.0
        %885 = vmatpush1.msra.mxu0 0.0
        %886 = vmatprep.subr.mxu0 0.0
        %887 = vmatpush1.msra.mxu0 0.0
        %888 = vmatprep.subr.mxu0 0.0
        %889 = vmatpush1.msra.mxu0 0.0
        %890 = vmatprep.subr.mxu0 0.0
        %891 = vmatpush1.msra.mxu0 0.0
        %892 = vmatprep.subr.mxu0 %v858
        %893 = vmatpush1.msra.mxu0 %v856
        %894 = vmatprep.subr.mxu0 0.0
        %895 = vmatpush2.msra.mxu0 0.0
        %896 = vmatprep.subr.mxu0 0.0
        %897 = vmatpush2.msra.mxu0 0.0
        %898 = vmatprep.subr.mxu0 0.0
        %899 = vmatpush2.msra.mxu0 0.0
        %900 = vmatprep.subr.mxu0 0.0
        %901 = vmatpush2.msra.mxu0 0.0
        %902 = vmatprep.subr.mxu0 0.0
        %903 = vmatpush2.msra.mxu0 0.0
        %904 = vmatprep.subr.mxu0 0.0
        %905 = vmatpush2.msra.mxu0 0.0
        %906 = vmatprep.subr.mxu0 0.0
        %907 = vmatpush2.msra.mxu0 0.0
        %908 = vmatprep.subr.mxu0 0.0
        %909 = vmatpush2.msra.mxu0 0.0
        %910 = vmatprep.subr.mxu0 0.0
        %911 = vmatpush2.msra.mxu0 0.0
        %912 = vmatprep.subr.mxu0 0.0
        %913 = vmatpush2.msra.mxu0 0.0
        %914 = vmatprep.subr.mxu0 0.0
        %915 = vmatpush2.msra.mxu0 0.0
        %916 = vmatprep.subr.mxu0 0.0
        %917 = vmatpush2.msra.mxu0 0.0
        %918 = vmatprep.subr.mxu0 0.0
        %919 = vmatpush2.msra.mxu0 0.0
        %920 = vmatprep.subr.mxu0 0.0
        %921 = vmatpush2.msra.mxu0 0.0
        %922 = vmatprep.subr.mxu0 0.0
        %923 = vmatpush2.msra.mxu0 0.0
        %924 = vmatprep.subr.mxu0 0.0
        %925 = vmatpush2.msra.mxu0 0.0
        %926 = vmatprep.mubr.f32.mxu0 0.0
        %927 = vmatmul.mubr.f32.gmra.mxu0 %v854
        %v928 = vpop.f32.mrf.mxu0
        %v929 = vadd.f32 0.0, %v928
        %v930 = vpop.f32.mrf.mxu0
        %v931 = vadd.f32 0.0, %v930
        %932 = vdwg.mxu0
        %933 = vmatprep.subr.mxu0 0.0
        %934 = vmatpush1.msra.mxu0 0.0
        %935 = vmatprep.subr.mxu0 0.0
        %936 = vmatpush1.msra.mxu0 0.0
        %937 = vmatprep.subr.mxu0 0.0
        %938 = vmatpush1.msra.mxu0 0.0
        %939 = vmatprep.subr.mxu0 0.0
        %940 = vmatpush1.msra.mxu0 0.0
        %941 = vmatprep.subr.mxu0 0.0
        %942 = vmatpush1.msra.mxu0 0.0
        %943 = vmatprep.subr.mxu0 0.0
        %944 = vmatpush1.msra.mxu0 0.0
        %945 = vmatprep.subr.mxu0 0.0
        %946 = vmatpush1.msra.mxu0 0.0
        %947 = vmatprep.subr.mxu0 0.0
        %948 = vmatpush1.msra.mxu0 0.0
        %949 = vmatprep.subr.mxu0 0.0
        %950 = vmatpush1.msra.mxu0 0.0
        %951 = vmatprep.subr.mxu0 0.0
        %952 = vmatpush1.msra.mxu0 0.0
        %953 = vmatprep.subr.mxu0 0.0
        %954 = vmatpush1.msra.mxu0 0.0
        %955 = vmatprep.subr.mxu0 0.0
        %956 = vmatpush1.msra.mxu0 0.0
        %957 = vmatprep.subr.mxu0 0.0
        %958 = vmatpush1.msra.mxu0 0.0
        %959 = vmatprep.subr.mxu0 0.0
        %960 = vmatpush1.msra.mxu0 0.0
        %961 = vmatprep.subr.mxu0 0.0
        %962 = vmatpush1.msra.mxu0 0.0
        %963 = vmatprep.subr.mxu0 0.0
        %964 = vmatpush1.msra.mxu0 %v860
        %965 = vmatprep.subr.mxu0 0.0
        %966 = vmatpush2.msra.mxu0 0.0
        %967 = vmatprep.subr.mxu0 0.0
        %968 = vmatpush2.msra.mxu0 0.0
        %969 = vmatprep.subr.mxu0 0.0
        %970 = vmatpush2.msra.mxu0 0.0
        %971 = vmatprep.subr.mxu0 0.0
        %972 = vmatpush2.msra.mxu0 0.0
        %973 = vmatprep.subr.mxu0 0.0
        %974 = vmatpush2.msra.mxu0 0.0
        %975 = vmatprep.subr.mxu0 0.0
        %976 = vmatpush2.msra.mxu0 0.0
        %977 = vmatprep.subr.mxu0 0.0
        %978 = vmatpush2.msra.mxu0 0.0
        %979 = vmatprep.subr.mxu0 0.0
        %980 = vmatpush2.msra.mxu0 0.0
        %981 = vmatprep.subr.mxu0 0.0
        %982 = vmatpush2.msra.mxu0 0.0
        %983 = vmatprep.subr.mxu0 0.0
        %984 = vmatpush2.msra.mxu0 0.0
        %985 = vmatprep.subr.mxu0 0.0
        %986 = vmatpush2.msra.mxu0 0.0
        %987 = vmatprep.subr.mxu0 0.0
        %988 = vmatpush2.msra.mxu0 0.0
        %989 = vmatprep.subr.mxu0 0.0
        %990 = vmatpush2.msra.mxu0 0.0
        %991 = vmatprep.subr.mxu0 0.0
        %992 = vmatpush2.msra.mxu0 0.0
        %993 = vmatprep.subr.mxu0 0.0
        %994 = vmatpush2.msra.mxu0 0.0
        %995 = vmatprep.subr.mxu0 0.0
        %996 = vmatpush2.msra.mxu0 0.0
        %997 = vmatprep.mubr.f32.mxu0 0.0
        %998 = vmatmul.mubr.f32.gmra.mxu0 %v854
        %v999 = vpop.f32.mrf.mxu0
        %v1000 = vadd.f32 0.0, %v999
        %v1001 = vpop.f32.mrf.mxu0
        %1002 = vdwg.mxu0
        %v1003 = vadd.f32 %v839, %v929
        %v1004 = vadd.f32 %v840, %v931
        %v1005 = vadd.f32 %v841, %v1000
        %s1006 = scalar_lea.vmem %s2, 32
        %v1007 = vld [vmem:[%s1006] sm:$0xff]
        %1008 = vrot.lane.b32.xlu0 %v358, 109
        %v1009 = vpop.permute.xlu0 %1008
        %1010 = vrot.lane.b32.xlu0 %v366, 109
        %v1011 = vpop.permute.xlu0 %1010
        %1012 = vrot.lane.b32.xlu0 %v359, 109
        %v1013 = vpop.permute.xlu0 %1012
        %vm1014 = vcmask 891904
        %v1015 = vsel %vm1014, %v1009, %v1011
        %v1016 = vsel %vm1014, %v1011, %v1013
        %v1018 = vsel %vm376, %v1007, 0
        %v1020 = vsel %vm380, %v1015, 0
        %v1022 = vsel %vm380, %v1016, 0
        %v1024 = vsel %vm380, %v1013, 0
        %1026 = vmatprep.subr.mxu0 0.0
        %1027 = vmatpush1.msra.mxu0 0.0
        %1028 = vmatprep.subr.mxu0 0.0
        %1029 = vmatpush1.msra.mxu0 0.0
        %1030 = vmatprep.subr.mxu0 0.0
        %1031 = vmatpush1.msra.mxu0 0.0
        %1032 = vmatprep.subr.mxu0 0.0
        %1033 = vmatpush1.msra.mxu0 0.0
        %1034 = vmatprep.subr.mxu0 0.0
        %1035 = vmatpush1.msra.mxu0 0.0
        %1036 = vmatprep.subr.mxu0 0.0
        %1037 = vmatpush1.msra.mxu0 0.0
        %1038 = vmatprep.subr.mxu0 0.0
        %1039 = vmatpush1.msra.mxu0 0.0
        %1040 = vmatprep.subr.mxu0 0.0
        %1041 = vmatpush1.msra.mxu0 0.0
        %1042 = vmatprep.subr.mxu0 0.0
        %1043 = vmatpush1.msra.mxu0 0.0
        %1044 = vmatprep.subr.mxu0 0.0
        %1045 = vmatpush1.msra.mxu0 0.0
        %1046 = vmatprep.subr.mxu0 0.0
        %1047 = vmatpush1.msra.mxu0 0.0
        %1048 = vmatprep.subr.mxu0 0.0
        %1049 = vmatpush1.msra.mxu0 0.0
        %1050 = vmatprep.subr.mxu0 0.0
        %1051 = vmatpush1.msra.mxu0 0.0
        %1052 = vmatprep.subr.mxu0 0.0
        %1053 = vmatpush1.msra.mxu0 0.0
        %1054 = vmatprep.subr.mxu0 0.0
        %1055 = vmatpush1.msra.mxu0 0.0
        %1056 = vmatprep.subr.mxu0 %v1022
        %1057 = vmatpush1.msra.mxu0 %v1020
        %1058 = vmatprep.subr.mxu0 0.0
        %1059 = vmatpush2.msra.mxu0 0.0
        %1060 = vmatprep.subr.mxu0 0.0
        %1061 = vmatpush2.msra.mxu0 0.0
        %1062 = vmatprep.subr.mxu0 0.0
        %1063 = vmatpush2.msra.mxu0 0.0
        %1064 = vmatprep.subr.mxu0 0.0
        %1065 = vmatpush2.msra.mxu0 0.0
        %1066 = vmatprep.subr.mxu0 0.0
        %1067 = vmatpush2.msra.mxu0 0.0
        %1068 = vmatprep.subr.mxu0 0.0
        %1069 = vmatpush2.msra.mxu0 0.0
        %1070 = vmatprep.subr.mxu0 0.0
        %1071 = vmatpush2.msra.mxu0 0.0
        %1072 = vmatprep.subr.mxu0 0.0
        %1073 = vmatpush2.msra.mxu0 0.0
        %1074 = vmatprep.subr.mxu0 0.0
        %1075 = vmatpush2.msra.mxu0 0.0
        %1076 = vmatprep.subr.mxu0 0.0
        %1077 = vmatpush2.msra.mxu0 0.0
        %1078 = vmatprep.subr.mxu0 0.0
        %1079 = vmatpush2.msra.mxu0 0.0
        %1080 = vmatprep.subr.mxu0 0.0
        %1081 = vmatpush2.msra.mxu0 0.0
        %1082 = vmatprep.subr.mxu0 0.0
        %1083 = vmatpush2.msra.mxu0 0.0
        %1084 = vmatprep.subr.mxu0 0.0
        %1085 = vmatpush2.msra.mxu0 0.0
        %1086 = vmatprep.subr.mxu0 0.0
        %1087 = vmatpush2.msra.mxu0 0.0
        %1088 = vmatprep.subr.mxu0 0.0
        %1089 = vmatpush2.msra.mxu0 0.0
        %1090 = vmatprep.mubr.f32.mxu0 0.0
        %1091 = vmatmul.mubr.f32.gmra.mxu0 %v1018
        %v1092 = vpop.f32.mrf.mxu0
        %v1093 = vadd.f32 0.0, %v1092
        %v1094 = vpop.f32.mrf.mxu0
        %v1095 = vadd.f32 0.0, %v1094
        %1096 = vdwg.mxu0
        %1097 = vmatprep.subr.mxu0 0.0
        %1098 = vmatpush1.msra.mxu0 0.0
        %1099 = vmatprep.subr.mxu0 0.0
        %1100 = vmatpush1.msra.mxu0 0.0
        %1101 = vmatprep.subr.mxu0 0.0
        %1102 = vmatpush1.msra.mxu0 0.0
        %1103 = vmatprep.subr.mxu0 0.0
        %1104 = vmatpush1.msra.mxu0 0.0
        %1105 = vmatprep.subr.mxu0 0.0
        %1106 = vmatpush1.msra.mxu0 0.0
        %1107 = vmatprep.subr.mxu0 0.0
        %1108 = vmatpush1.msra.mxu0 0.0
        %1109 = vmatprep.subr.mxu0 0.0
        %1110 = vmatpush1.msra.mxu0 0.0
        %1111 = vmatprep.subr.mxu0 0.0
        %1112 = vmatpush1.msra.mxu0 0.0
        %1113 = vmatprep.subr.mxu0 0.0
        %1114 = vmatpush1.msra.mxu0 0.0
        %1115 = vmatprep.subr.mxu0 0.0
        %1116 = vmatpush1.msra.mxu0 0.0
        %1117 = vmatprep.subr.mxu0 0.0
        %1118 = vmatpush1.msra.mxu0 0.0
        %1119 = vmatprep.subr.mxu0 0.0
        %1120 = vmatpush1.msra.mxu0 0.0
        %1121 = vmatprep.subr.mxu0 0.0
        %1122 = vmatpush1.msra.mxu0 0.0
        %1123 = vmatprep.subr.mxu0 0.0
        %1124 = vmatpush1.msra.mxu0 0.0
        %1125 = vmatprep.subr.mxu0 0.0
        %1126 = vmatpush1.msra.mxu0 0.0
        %1127 = vmatprep.subr.mxu0 0.0
        %1128 = vmatpush1.msra.mxu0 %v1024
        %1129 = vmatprep.subr.mxu0 0.0
        %1130 = vmatpush2.msra.mxu0 0.0
        %1131 = vmatprep.subr.mxu0 0.0
        %1132 = vmatpush2.msra.mxu0 0.0
        %1133 = vmatprep.subr.mxu0 0.0
        %1134 = vmatpush2.msra.mxu0 0.0
        %1135 = vmatprep.subr.mxu0 0.0
        %1136 = vmatpush2.msra.mxu0 0.0
        %1137 = vmatprep.subr.mxu0 0.0
        %1138 = vmatpush2.msra.mxu0 0.0
        %1139 = vmatprep.subr.mxu0 0.0
        %1140 = vmatpush2.msra.mxu0 0.0
        %1141 = vmatprep.subr.mxu0 0.0
        %1142 = vmatpush2.msra.mxu0 0.0
        %1143 = vmatprep.subr.mxu0 0.0
        %1144 = vmatpush2.msra.mxu0 0.0
        %1145 = vmatprep.subr.mxu0 0.0
        %1146 = vmatpush2.msra.mxu0 0.0
        %1147 = vmatprep.subr.mxu0 0.0
        %1148 = vmatpush2.msra.mxu0 0.0
        %1149 = vmatprep.subr.mxu0 0.0
        %1150 = vmatpush2.msra.mxu0 0.0
        %1151 = vmatprep.subr.mxu0 0.0
        %1152 = vmatpush2.msra.mxu0 0.0
        %1153 = vmatprep.subr.mxu0 0.0
        %1154 = vmatpush2.msra.mxu0 0.0
        %1155 = vmatprep.subr.mxu0 0.0
        %1156 = vmatpush2.msra.mxu0 0.0
        %1157 = vmatprep.subr.mxu0 0.0
        %1158 = vmatpush2.msra.mxu0 0.0
        %1159 = vmatprep.subr.mxu0 0.0
        %1160 = vmatpush2.msra.mxu0 0.0
        %1161 = vmatprep.mubr.f32.mxu0 0.0
        %1162 = vmatmul.mubr.f32.gmra.mxu0 %v1018
        %v1163 = vpop.f32.mrf.mxu0
        %v1164 = vadd.f32 0.0, %v1163
        %v1165 = vpop.f32.mrf.mxu0
        %1166 = vdwg.mxu0
        %v1167 = vadd.f32 %v1003, %v1093
        %v1168 = vadd.f32 %v1004, %v1095
        %v1169 = vadd.f32 %v1005, %v1164
        %s1170 = scalar_lea.vmem %s2, 40
        %v1171 = vld [vmem:[%s1170] sm:$0xff]
        %1172 = vrot.lane.b32.xlu0 %v358, 108
        %v1173 = vpop.permute.xlu0 %1172
        %1174 = vrot.lane.b32.xlu0 %v366, 108
        %v1175 = vpop.permute.xlu0 %1174
        %1176 = vrot.lane.b32.xlu0 %v359, 108
        %v1177 = vpop.permute.xlu0 %1176
        %vm1178 = vcmask 883712
        %v1179 = vsel %vm1178, %v1173, %v1175
        %v1180 = vsel %vm1178, %v1175, %v1177
        %v1182 = vsel %vm376, %v1171, 0
        %v1184 = vsel %vm380, %v1179, 0
        %v1186 = vsel %vm380, %v1180, 0
        %v1188 = vsel %vm380, %v1177, 0
        %1190 = vmatprep.subr.mxu0 0.0
        %1191 = vmatpush1.msra.mxu0 0.0
        %1192 = vmatprep.subr.mxu0 0.0
        %1193 = vmatpush1.msra.mxu0 0.0
        %1194 = vmatprep.subr.mxu0 0.0
        %1195 = vmatpush1.msra.mxu0 0.0
        %1196 = vmatprep.subr.mxu0 0.0
        %1197 = vmatpush1.msra.mxu0 0.0
        %1198 = vmatprep.subr.mxu0 0.0
        %1199 = vmatpush1.msra.mxu0 0.0
        %1200 = vmatprep.subr.mxu0 0.0
        %1201 = vmatpush1.msra.mxu0 0.0
        %1202 = vmatprep.subr.mxu0 0.0
        %1203 = vmatpush1.msra.mxu0 0.0
        %1204 = vmatprep.subr.mxu0 0.0
        %1205 = vmatpush1.msra.mxu0 0.0
        %1206 = vmatprep.subr.mxu0 0.0
        %1207 = vmatpush1.msra.mxu0 0.0
        %1208 = vmatprep.subr.mxu0 0.0
        %1209 = vmatpush1.msra.mxu0 0.0
        %1210 = vmatprep.subr.mxu0 0.0
        %1211 = vmatpush1.msra.mxu0 0.0
        %1212 = vmatprep.subr.mxu0 0.0
        %1213 = vmatpush1.msra.mxu0 0.0
        %1214 = vmatprep.subr.mxu0 0.0
        %1215 = vmatpush1.msra.mxu0 0.0
        %1216 = vmatprep.subr.mxu0 0.0
        %1217 = vmatpush1.msra.mxu0 0.0
        %1218 = vmatprep.subr.mxu0 0.0
        %1219 = vmatpush1.msra.mxu0 0.0
        %1220 = vmatprep.subr.mxu0 %v1186
        %1221 = vmatpush1.msra.mxu0 %v1184
        %1222 = vmatprep.subr.mxu0 0.0
        %1223 = vmatpush2.msra.mxu0 0.0
        %1224 = vmatprep.subr.mxu0 0.0
        %1225 = vmatpush2.msra.mxu0 0.0
        %1226 = vmatprep.subr.mxu0 0.0
        %1227 = vmatpush2.msra.mxu0 0.0
        %1228 = vmatprep.subr.mxu0 0.0
        %1229 = vmatpush2.msra.mxu0 0.0
        %1230 = vmatprep.subr.mxu0 0.0
        %1231 = vmatpush2.msra.mxu0 0.0
        %1232 = vmatprep.subr.mxu0 0.0
        %1233 = vmatpush2.msra.mxu0 0.0
        %1234 = vmatprep.subr.mxu0 0.0
        %1235 = vmatpush2.msra.mxu0 0.0
        %1236 = vmatprep.subr.mxu0 0.0
        %1237 = vmatpush2.msra.mxu0 0.0
        %1238 = vmatprep.subr.mxu0 0.0
        %1239 = vmatpush2.msra.mxu0 0.0
        %1240 = vmatprep.subr.mxu0 0.0
        %1241 = vmatpush2.msra.mxu0 0.0
        %1242 = vmatprep.subr.mxu0 0.0
        %1243 = vmatpush2.msra.mxu0 0.0
        %1244 = vmatprep.subr.mxu0 0.0
        %1245 = vmatpush2.msra.mxu0 0.0
        %1246 = vmatprep.subr.mxu0 0.0
        %1247 = vmatpush2.msra.mxu0 0.0
        %1248 = vmatprep.subr.mxu0 0.0
        %1249 = vmatpush2.msra.mxu0 0.0
        %1250 = vmatprep.subr.mxu0 0.0
        %1251 = vmatpush2.msra.mxu0 0.0
        %1252 = vmatprep.subr.mxu0 0.0
        %1253 = vmatpush2.msra.mxu0 0.0
        %1254 = vmatprep.mubr.f32.mxu0 0.0
        %1255 = vmatmul.mubr.f32.gmra.mxu0 %v1182
        %v1256 = vpop.f32.mrf.mxu0
        %v1257 = vadd.f32 0.0, %v1256
        %v1258 = vpop.f32.mrf.mxu0
        %v1259 = vadd.f32 0.0, %v1258
        %1260 = vdwg.mxu0
        %1261 = vmatprep.subr.mxu0 0.0
        %1262 = vmatpush1.msra.mxu0 0.0
        %1263 = vmatprep.subr.mxu0 0.0
        %1264 = vmatpush1.msra.mxu0 0.0
        %1265 = vmatprep.subr.mxu0 0.0
        %1266 = vmatpush1.msra.mxu0 0.0
        %1267 = vmatprep.subr.mxu0 0.0
        %1268 = vmatpush1.msra.mxu0 0.0
        %1269 = vmatprep.subr.mxu0 0.0
        %1270 = vmatpush1.msra.mxu0 0.0
        %1271 = vmatprep.subr.mxu0 0.0
        %1272 = vmatpush1.msra.mxu0 0.0
        %1273 = vmatprep.subr.mxu0 0.0
        %1274 = vmatpush1.msra.mxu0 0.0
        %1275 = vmatprep.subr.mxu0 0.0
        %1276 = vmatpush1.msra.mxu0 0.0
        %1277 = vmatprep.subr.mxu0 0.0
        %1278 = vmatpush1.msra.mxu0 0.0
        %1279 = vmatprep.subr.mxu0 0.0
        %1280 = vmatpush1.msra.mxu0 0.0
        %1281 = vmatprep.subr.mxu0 0.0
        %1282 = vmatpush1.msra.mxu0 0.0
        %1283 = vmatprep.subr.mxu0 0.0
        %1284 = vmatpush1.msra.mxu0 0.0
        %1285 = vmatprep.subr.mxu0 0.0
        %1286 = vmatpush1.msra.mxu0 0.0
        %1287 = vmatprep.subr.mxu0 0.0
        %1288 = vmatpush1.msra.mxu0 0.0
        %1289 = vmatprep.subr.mxu0 0.0
        %1290 = vmatpush1.msra.mxu0 0.0
        %1291 = vmatprep.subr.mxu0 0.0
        %1292 = vmatpush1.msra.mxu0 %v1188
        %1293 = vmatprep.subr.mxu0 0.0
        %1294 = vmatpush2.msra.mxu0 0.0
        %1295 = vmatprep.subr.mxu0 0.0
        %1296 = vmatpush2.msra.mxu0 0.0
        %1297 = vmatprep.subr.mxu0 0.0
        %1298 = vmatpush2.msra.mxu0 0.0
        %1299 = vmatprep.subr.mxu0 0.0
        %1300 = vmatpush2.msra.mxu0 0.0
        %1301 = vmatprep.subr.mxu0 0.0
        %1302 = vmatpush2.msra.mxu0 0.0
        %1303 = vmatprep.subr.mxu0 0.0
        %1304 = vmatpush2.msra.mxu0 0.0
        %1305 = vmatprep.subr.mxu0 0.0
        %1306 = vmatpush2.msra.mxu0 0.0
        %1307 = vmatprep.subr.mxu0 0.0
        %1308 = vmatpush2.msra.mxu0 0.0
        %1309 = vmatprep.subr.mxu0 0.0
        %1310 = vmatpush2.msra.mxu0 0.0
        %1311 = vmatprep.subr.mxu0 0.0
        %1312 = vmatpush2.msra.mxu0 0.0
        %1313 = vmatprep.subr.mxu0 0.0
        %1314 = vmatpush2.msra.mxu0 0.0
        %1315 = vmatprep.subr.mxu0 0.0
        %1316 = vmatpush2.msra.mxu0 0.0
        %1317 = vmatprep.subr.mxu0 0.0
        %1318 = vmatpush2.msra.mxu0 0.0
        %1319 = vmatprep.subr.mxu0 0.0
        %1320 = vmatpush2.msra.mxu0 0.0
        %1321 = vmatprep.subr.mxu0 0.0
        %1322 = vmatpush2.msra.mxu0 0.0
        %1323 = vmatprep.subr.mxu0 0.0
        %1324 = vmatpush2.msra.mxu0 0.0
        %1325 = vmatprep.mubr.f32.mxu0 0.0
        %1326 = vmatmul.mubr.f32.gmra.mxu0 %v1182
        %v1327 = vpop.f32.mrf.mxu0
        %v1328 = vadd.f32 0.0, %v1327
        %v1329 = vpop.f32.mrf.mxu0
        %1330 = vdwg.mxu0
        %v1331 = vadd.f32 %v1167, %v1257
        %v1332 = vadd.f32 %v1168, %v1259
        %v1333 = vadd.f32 %v1169, %v1328
        %s1334 = scalar_lea.vmem %s2, 48
        %v1335 = vld [vmem:[%s1334] sm:$0xff]
        %1336 = vrot.lane.b32.xlu0 %v358, 92
        %v1337 = vpop.permute.xlu0 %1336
        %1338 = vrot.lane.b32.xlu0 %v366, 92
        %v1339 = vpop.permute.xlu0 %1338
        %1340 = vrot.lane.b32.xlu0 %v359, 92
        %v1341 = vpop.permute.xlu0 %1340
        %vm1342 = vcmask 752640
        %v1343 = vsel %vm1342, %v1337, %v1339
        %v1344 = vsel %vm1342, %v1339, %v1341
        %v1346 = vsel %vm376, %v1335, 0
        %v1348 = vsel %vm380, %v1343, 0
        %v1350 = vsel %vm380, %v1344, 0
        %v1352 = vsel %vm380, %v1341, 0
        %1354 = vmatprep.subr.mxu0 0.0
        %1355 = vmatpush1.msra.mxu0 0.0
        %1356 = vmatprep.subr.mxu0 0.0
        %1357 = vmatpush1.msra.mxu0 0.0
        %1358 = vmatprep.subr.mxu0 0.0
        %1359 = vmatpush1.msra.mxu0 0.0
        %1360 = vmatprep.subr.mxu0 0.0
        %1361 = vmatpush1.msra.mxu0 0.0
        %1362 = vmatprep.subr.mxu0 0.0
        %1363 = vmatpush1.msra.mxu0 0.0
        %1364 = vmatprep.subr.mxu0 0.0
        %1365 = vmatpush1.msra.mxu0 0.0
        %1366 = vmatprep.subr.mxu0 0.0
        %1367 = vmatpush1.msra.mxu0 0.0
        %1368 = vmatprep.subr.mxu0 0.0
        %1369 = vmatpush1.msra.mxu0 0.0
        %1370 = vmatprep.subr.mxu0 0.0
        %1371 = vmatpush1.msra.mxu0 0.0
        %1372 = vmatprep.subr.mxu0 0.0
        %1373 = vmatpush1.msra.mxu0 0.0
        %1374 = vmatprep.subr.mxu0 0.0
        %1375 = vmatpush1.msra.mxu0 0.0
        %1376 = vmatprep.subr.mxu0 0.0
        %1377 = vmatpush1.msra.mxu0 0.0
        %1378 = vmatprep.subr.mxu0 0.0
        %1379 = vmatpush1.msra.mxu0 0.0
        %1380 = vmatprep.subr.mxu0 0.0
        %1381 = vmatpush1.msra.mxu0 0.0
        %1382 = vmatprep.subr.mxu0 0.0
        %1383 = vmatpush1.msra.mxu0 0.0
        %1384 = vmatprep.subr.mxu0 %v1350
        %1385 = vmatpush1.msra.mxu0 %v1348
        %1386 = vmatprep.subr.mxu0 0.0
        %1387 = vmatpush2.msra.mxu0 0.0
        %1388 = vmatprep.subr.mxu0 0.0
        %1389 = vmatpush2.msra.mxu0 0.0
        %1390 = vmatprep.subr.mxu0 0.0
        %1391 = vmatpush2.msra.mxu0 0.0
        %1392 = vmatprep.subr.mxu0 0.0
        %1393 = vmatpush2.msra.mxu0 0.0
        %1394 = vmatprep.subr.mxu0 0.0
        %1395 = vmatpush2.msra.mxu0 0.0
        %1396 = vmatprep.subr.mxu0 0.0
        %1397 = vmatpush2.msra.mxu0 0.0
        %1398 = vmatprep.subr.mxu0 0.0
        %1399 = vmatpush2.msra.mxu0 0.0
        %1400 = vmatprep.subr.mxu0 0.0
        %1401 = vmatpush2.msra.mxu0 0.0
        %1402 = vmatprep.subr.mxu0 0.0
        %1403 = vmatpush2.msra.mxu0 0.0
        %1404 = vmatprep.subr.mxu0 0.0
        %1405 = vmatpush2.msra.mxu0 0.0
        %1406 = vmatprep.subr.mxu0 0.0
        %1407 = vmatpush2.msra.mxu0 0.0
        %1408 = vmatprep.subr.mxu0 0.0
        %1409 = vmatpush2.msra.mxu0 0.0
        %1410 = vmatprep.subr.mxu0 0.0
        %1411 = vmatpush2.msra.mxu0 0.0
        %1412 = vmatprep.subr.mxu0 0.0
        %1413 = vmatpush2.msra.mxu0 0.0
        %1414 = vmatprep.subr.mxu0 0.0
        %1415 = vmatpush2.msra.mxu0 0.0
        %1416 = vmatprep.subr.mxu0 0.0
        %1417 = vmatpush2.msra.mxu0 0.0
        %1418 = vmatprep.mubr.f32.mxu0 0.0
        %1419 = vmatmul.mubr.f32.gmra.mxu0 %v1346
        %v1420 = vpop.f32.mrf.mxu0
        %v1421 = vadd.f32 0.0, %v1420
        %v1422 = vpop.f32.mrf.mxu0
        %v1423 = vadd.f32 0.0, %v1422
        %1424 = vdwg.mxu0
        %1425 = vmatprep.subr.mxu0 0.0
        %1426 = vmatpush1.msra.mxu0 0.0
        %1427 = vmatprep.subr.mxu0 0.0
        %1428 = vmatpush1.msra.mxu0 0.0
        %1429 = vmatprep.subr.mxu0 0.0
        %1430 = vmatpush1.msra.mxu0 0.0
        %1431 = vmatprep.subr.mxu0 0.0
        %1432 = vmatpush1.msra.mxu0 0.0
        %1433 = vmatprep.subr.mxu0 0.0
        %1434 = vmatpush1.msra.mxu0 0.0
        %1435 = vmatprep.subr.mxu0 0.0
        %1436 = vmatpush1.msra.mxu0 0.0
        %1437 = vmatprep.subr.mxu0 0.0
        %1438 = vmatpush1.msra.mxu0 0.0
        %1439 = vmatprep.subr.mxu0 0.0
        %1440 = vmatpush1.msra.mxu0 0.0
        %1441 = vmatprep.subr.mxu0 0.0
        %1442 = vmatpush1.msra.mxu0 0.0
        %1443 = vmatprep.subr.mxu0 0.0
        %1444 = vmatpush1.msra.mxu0 0.0
        %1445 = vmatprep.subr.mxu0 0.0
        %1446 = vmatpush1.msra.mxu0 0.0
        %1447 = vmatprep.subr.mxu0 0.0
        %1448 = vmatpush1.msra.mxu0 0.0
        %1449 = vmatprep.subr.mxu0 0.0
        %1450 = vmatpush1.msra.mxu0 0.0
        %1451 = vmatprep.subr.mxu0 0.0
        %1452 = vmatpush1.msra.mxu0 0.0
        %1453 = vmatprep.subr.mxu0 0.0
        %1454 = vmatpush1.msra.mxu0 0.0
        %1455 = vmatprep.subr.mxu0 0.0
        %1456 = vmatpush1.msra.mxu0 %v1352
        %1457 = vmatprep.subr.mxu0 0.0
        %1458 = vmatpush2.msra.mxu0 0.0
        %1459 = vmatprep.subr.mxu0 0.0
        %1460 = vmatpush2.msra.mxu0 0.0
        %1461 = vmatprep.subr.mxu0 0.0
        %1462 = vmatpush2.msra.mxu0 0.0
        %1463 = vmatprep.subr.mxu0 0.0
        %1464 = vmatpush2.msra.mxu0 0.0
        %1465 = vmatprep.subr.mxu0 0.0
        %1466 = vmatpush2.msra.mxu0 0.0
        %1467 = vmatprep.subr.mxu0 0.0
        %1468 = vmatpush2.msra.mxu0 0.0
        %1469 = vmatprep.subr.mxu0 0.0
        %1470 = vmatpush2.msra.mxu0 0.0
        %1471 = vmatprep.subr.mxu0 0.0
        %1472 = vmatpush2.msra.mxu0 0.0
        %1473 = vmatprep.subr.mxu0 0.0
        %1474 = vmatpush2.msra.mxu0 0.0
        %1475 = vmatprep.subr.mxu0 0.0
        %1476 = vmatpush2.msra.mxu0 0.0
        %1477 = vmatprep.subr.mxu0 0.0
        %1478 = vmatpush2.msra.mxu0 0.0
        %1479 = vmatprep.subr.mxu0 0.0
        %1480 = vmatpush2.msra.mxu0 0.0
        %1481 = vmatprep.subr.mxu0 0.0
        %1482 = vmatpush2.msra.mxu0 0.0
        %1483 = vmatprep.subr.mxu0 0.0
        %1484 = vmatpush2.msra.mxu0 0.0
        %1485 = vmatprep.subr.mxu0 0.0
        %1486 = vmatpush2.msra.mxu0 0.0
        %1487 = vmatprep.subr.mxu0 0.0
        %1488 = vmatpush2.msra.mxu0 0.0
        %1489 = vmatprep.mubr.f32.mxu0 0.0
        %1490 = vmatmul.mubr.f32.gmra.mxu0 %v1346
        %v1491 = vpop.f32.mrf.mxu0
        %v1492 = vadd.f32 0.0, %v1491
        %v1493 = vpop.f32.mrf.mxu0
        %1494 = vdwg.mxu0
        %v1495 = vadd.f32 %v1331, %v1421
        %v1496 = vadd.f32 %v1332, %v1423
        %v1497 = vadd.f32 %v1333, %v1492
        %s1498 = scalar_lea.vmem %s2, 56
        %v1499 = vld [vmem:[%s1498] sm:$0xff]
        %1500 = vrot.lane.b32.xlu0 %v358, 91
        %v1501 = vpop.permute.xlu0 %1500
        %1502 = vrot.lane.b32.xlu0 %v366, 91
        %v1503 = vpop.permute.xlu0 %1502
        %1504 = vrot.lane.b32.xlu0 %v359, 91
        %v1505 = vpop.permute.xlu0 %1504
        %vm1506 = vcmask 744448
        %v1507 = vsel %vm1506, %v1501, %v1503
        %v1508 = vsel %vm1506, %v1503, %v1505
        %v1510 = vsel %vm376, %v1499, 0
        %v1512 = vsel %vm380, %v1507, 0
        %v1514 = vsel %vm380, %v1508, 0
        %v1516 = vsel %vm380, %v1505, 0
        %1518 = vmatprep.subr.mxu0 0.0
        %1519 = vmatpush1.msra.mxu0 0.0
        %1520 = vmatprep.subr.mxu0 0.0
        %1521 = vmatpush1.msra.mxu0 0.0
        %1522 = vmatprep.subr.mxu0 0.0
        %1523 = vmatpush1.msra.mxu0 0.0
        %1524 = vmatprep.subr.mxu0 0.0
        %1525 = vmatpush1.msra.mxu0 0.0
        %1526 = vmatprep.subr.mxu0 0.0
        %1527 = vmatpush1.msra.mxu0 0.0
        %1528 = vmatprep.subr.mxu0 0.0
        %1529 = vmatpush1.msra.mxu0 0.0
        %1530 = vmatprep.subr.mxu0 0.0
        %1531 = vmatpush1.msra.mxu0 0.0
        %1532 = vmatprep.subr.mxu0 0.0
        %1533 = vmatpush1.msra.mxu0 0.0
        %1534 = vmatprep.subr.mxu0 0.0
        %1535 = vmatpush1.msra.mxu0 0.0
        %1536 = vmatprep.subr.mxu0 0.0
        %1537 = vmatpush1.msra.mxu0 0.0
        %1538 = vmatprep.subr.mxu0 0.0
        %1539 = vmatpush1.msra.mxu0 0.0
        %1540 = vmatprep.subr.mxu0 0.0
        %1541 = vmatpush1.msra.mxu0 0.0
        %1542 = vmatprep.subr.mxu0 0.0
        %1543 = vmatpush1.msra.mxu0 0.0
        %1544 = vmatprep.subr.mxu0 0.0
        %1545 = vmatpush1.msra.mxu0 0.0
        %1546 = vmatprep.subr.mxu0 0.0
        %1547 = vmatpush1.msra.mxu0 0.0
        %1548 = vmatprep.subr.mxu0 %v1514
        %1549 = vmatpush1.msra.mxu0 %v1512
        %1550 = vmatprep.subr.mxu0 0.0
        %1551 = vmatpush2.msra.mxu0 0.0
        %1552 = vmatprep.subr.mxu0 0.0
        %1553 = vmatpush2.msra.mxu0 0.0
        %1554 = vmatprep.subr.mxu0 0.0
        %1555 = vmatpush2.msra.mxu0 0.0
        %1556 = vmatprep.subr.mxu0 0.0
        %1557 = vmatpush2.msra.mxu0 0.0
        %1558 = vmatprep.subr.mxu0 0.0
        %1559 = vmatpush2.msra.mxu0 0.0
        %1560 = vmatprep.subr.mxu0 0.0
        %1561 = vmatpush2.msra.mxu0 0.0
        %1562 = vmatprep.subr.mxu0 0.0
        %1563 = vmatpush2.msra.mxu0 0.0
        %1564 = vmatprep.subr.mxu0 0.0
        %1565 = vmatpush2.msra.mxu0 0.0
        %1566 = vmatprep.subr.mxu0 0.0
        %1567 = vmatpush2.msra.mxu0 0.0
        %1568 = vmatprep.subr.mxu0 0.0
        %1569 = vmatpush2.msra.mxu0 0.0
        %1570 = vmatprep.subr.mxu0 0.0
        %1571 = vmatpush2.msra.mxu0 0.0
        %1572 = vmatprep.subr.mxu0 0.0
        %1573 = vmatpush2.msra.mxu0 0.0
        %1574 = vmatprep.subr.mxu0 0.0
        %1575 = vmatpush2.msra.mxu0 0.0
        %1576 = vmatprep.subr.mxu0 0.0
        %1577 = vmatpush2.msra.mxu0 0.0
        %1578 = vmatprep.subr.mxu0 0.0
        %1579 = vmatpush2.msra.mxu0 0.0
        %1580 = vmatprep.subr.mxu0 0.0
        %1581 = vmatpush2.msra.mxu0 0.0
        %1582 = vmatprep.mubr.f32.mxu0 0.0
        %1583 = vmatmul.mubr.f32.gmra.mxu0 %v1510
        %v1584 = vpop.f32.mrf.mxu0
        %v1585 = vadd.f32 0.0, %v1584
        %v1586 = vpop.f32.mrf.mxu0
        %v1587 = vadd.f32 0.0, %v1586
        %1588 = vdwg.mxu0
        %1589 = vmatprep.subr.mxu0 0.0
        %1590 = vmatpush1.msra.mxu0 0.0
        %1591 = vmatprep.subr.mxu0 0.0
        %1592 = vmatpush1.msra.mxu0 0.0
        %1593 = vmatprep.subr.mxu0 0.0
        %1594 = vmatpush1.msra.mxu0 0.0
        %1595 = vmatprep.subr.mxu0 0.0
        %1596 = vmatpush1.msra.mxu0 0.0
        %1597 = vmatprep.subr.mxu0 0.0
        %1598 = vmatpush1.msra.mxu0 0.0
        %1599 = vmatprep.subr.mxu0 0.0
        %1600 = vmatpush1.msra.mxu0 0.0
        %1601 = vmatprep.subr.mxu0 0.0
        %1602 = vmatpush1.msra.mxu0 0.0
        %1603 = vmatprep.subr.mxu0 0.0
        %1604 = vmatpush1.msra.mxu0 0.0
        %1605 = vmatprep.subr.mxu0 0.0
        %1606 = vmatpush1.msra.mxu0 0.0
        %1607 = vmatprep.subr.mxu0 0.0
        %1608 = vmatpush1.msra.mxu0 0.0
        %1609 = vmatprep.subr.mxu0 0.0
        %1610 = vmatpush1.msra.mxu0 0.0
        %1611 = vmatprep.subr.mxu0 0.0
        %1612 = vmatpush1.msra.mxu0 0.0
        %1613 = vmatprep.subr.mxu0 0.0
        %1614 = vmatpush1.msra.mxu0 0.0
        %1615 = vmatprep.subr.mxu0 0.0
        %1616 = vmatpush1.msra.mxu0 0.0
        %1617 = vmatprep.subr.mxu0 0.0
        %1618 = vmatpush1.msra.mxu0 0.0
        %1619 = vmatprep.subr.mxu0 0.0
        %1620 = vmatpush1.msra.mxu0 %v1516
        %1621 = vmatprep.subr.mxu0 0.0
        %1622 = vmatpush2.msra.mxu0 0.0
        %1623 = vmatprep.subr.mxu0 0.0
        %1624 = vmatpush2.msra.mxu0 0.0
        %1625 = vmatprep.subr.mxu0 0.0
        %1626 = vmatpush2.msra.mxu0 0.0
        %1627 = vmatprep.subr.mxu0 0.0
        %1628 = vmatpush2.msra.mxu0 0.0
        %1629 = vmatprep.subr.mxu0 0.0
        %1630 = vmatpush2.msra.mxu0 0.0
        %1631 = vmatprep.subr.mxu0 0.0
        %1632 = vmatpush2.msra.mxu0 0.0
        %1633 = vmatprep.subr.mxu0 0.0
        %1634 = vmatpush2.msra.mxu0 0.0
        %1635 = vmatprep.subr.mxu0 0.0
        %1636 = vmatpush2.msra.mxu0 0.0
        %1637 = vmatprep.subr.mxu0 0.0
        %1638 = vmatpush2.msra.mxu0 0.0
        %1639 = vmatprep.subr.mxu0 0.0
        %1640 = vmatpush2.msra.mxu0 0.0
        %1641 = vmatprep.subr.mxu0 0.0
        %1642 = vmatpush2.msra.mxu0 0.0
        %1643 = vmatprep.subr.mxu0 0.0
        %1644 = vmatpush2.msra.mxu0 0.0
        %1645 = vmatprep.subr.mxu0 0.0
        %1646 = vmatpush2.msra.mxu0 0.0
        %1647 = vmatprep.subr.mxu0 0.0
        %1648 = vmatpush2.msra.mxu0 0.0
        %1649 = vmatprep.subr.mxu0 0.0
        %1650 = vmatpush2.msra.mxu0 0.0
        %1651 = vmatprep.subr.mxu0 0.0
        %1652 = vmatpush2.msra.mxu0 0.0
        %1653 = vmatprep.mubr.f32.mxu0 0.0
        %1654 = vmatmul.mubr.f32.gmra.mxu0 %v1510
        %v1655 = vpop.f32.mrf.mxu0
        %v1656 = vadd.f32 0.0, %v1655
        %v1657 = vpop.f32.mrf.mxu0
        %1658 = vdwg.mxu0
        %v1659 = vadd.f32 %v1495, %v1585
        %v1660 = vadd.f32 %v1496, %v1587
        %v1661 = vadd.f32 %v1497, %v1656
        %s1662 = scalar_lea.vmem %s2, 64
        %v1663 = vld [vmem:[%s1662] sm:$0xff]
        %1664 = vrot.lane.b32.xlu0 %v358, 90
        %v1665 = vpop.permute.xlu0 %1664
        %1666 = vrot.lane.b32.xlu0 %v366, 90
        %v1667 = vpop.permute.xlu0 %1666
        %1668 = vrot.lane.b32.xlu0 %v359, 90
        %v1669 = vpop.permute.xlu0 %1668
        %vm1670 = vcmask 736256
        %v1671 = vsel %vm1670, %v1665, %v1667
        %v1672 = vsel %vm1670, %v1667, %v1669
        %v1674 = vsel %vm376, %v1663, 0
        %v1676 = vsel %vm380, %v1671, 0
        %v1678 = vsel %vm380, %v1672, 0
        %v1680 = vsel %vm380, %v1669, 0
        %1682 = vmatprep.subr.mxu0 0.0
        %1683 = vmatpush1.msra.mxu0 0.0
        %1684 = vmatprep.subr.mxu0 0.0
        %1685 = vmatpush1.msra.mxu0 0.0
        %1686 = vmatprep.subr.mxu0 0.0
        %1687 = vmatpush1.msra.mxu0 0.0
        %1688 = vmatprep.subr.mxu0 0.0
        %1689 = vmatpush1.msra.mxu0 0.0
        %1690 = vmatprep.subr.mxu0 0.0
        %1691 = vmatpush1.msra.mxu0 0.0
        %1692 = vmatprep.subr.mxu0 0.0
        %1693 = vmatpush1.msra.mxu0 0.0
        %1694 = vmatprep.subr.mxu0 0.0
        %1695 = vmatpush1.msra.mxu0 0.0
        %1696 = vmatprep.subr.mxu0 0.0
        %1697 = vmatpush1.msra.mxu0 0.0
        %1698 = vmatprep.subr.mxu0 0.0
        %1699 = vmatpush1.msra.mxu0 0.0
        %1700 = vmatprep.subr.mxu0 0.0
        %1701 = vmatpush1.msra.mxu0 0.0
        %1702 = vmatprep.subr.mxu0 0.0
        %1703 = vmatpush1.msra.mxu0 0.0
        %1704 = vmatprep.subr.mxu0 0.0
        %1705 = vmatpush1.msra.mxu0 0.0
        %1706 = vmatprep.subr.mxu0 0.0
        %1707 = vmatpush1.msra.mxu0 0.0
        %1708 = vmatprep.subr.mxu0 0.0
        %1709 = vmatpush1.msra.mxu0 0.0
        %1710 = vmatprep.subr.mxu0 0.0
        %1711 = vmatpush1.msra.mxu0 0.0
        %1712 = vmatprep.subr.mxu0 %v1678
        %1713 = vmatpush1.msra.mxu0 %v1676
        %1714 = vmatprep.subr.mxu0 0.0
        %1715 = vmatpush2.msra.mxu0 0.0
        %1716 = vmatprep.subr.mxu0 0.0
        %1717 = vmatpush2.msra.mxu0 0.0
        %1718 = vmatprep.subr.mxu0 0.0
        %1719 = vmatpush2.msra.mxu0 0.0
        %1720 = vmatprep.subr.mxu0 0.0
        %1721 = vmatpush2.msra.mxu0 0.0
        %1722 = vmatprep.subr.mxu0 0.0
        %1723 = vmatpush2.msra.mxu0 0.0
        %1724 = vmatprep.subr.mxu0 0.0
        %1725 = vmatpush2.msra.mxu0 0.0
        %1726 = vmatprep.subr.mxu0 0.0
        %1727 = vmatpush2.msra.mxu0 0.0
        %1728 = vmatprep.subr.mxu0 0.0
        %1729 = vmatpush2.msra.mxu0 0.0
        %1730 = vmatprep.subr.mxu0 0.0
        %1731 = vmatpush2.msra.mxu0 0.0
        %1732 = vmatprep.subr.mxu0 0.0
        %1733 = vmatpush2.msra.mxu0 0.0
        %1734 = vmatprep.subr.mxu0 0.0
        %1735 = vmatpush2.msra.mxu0 0.0
        %1736 = vmatprep.subr.mxu0 0.0
        %1737 = vmatpush2.msra.mxu0 0.0
        %1738 = vmatprep.subr.mxu0 0.0
        %1739 = vmatpush2.msra.mxu0 0.0
        %1740 = vmatprep.subr.mxu0 0.0
        %1741 = vmatpush2.msra.mxu0 0.0
        %1742 = vmatprep.subr.mxu0 0.0
        %1743 = vmatpush2.msra.mxu0 0.0
        %1744 = vmatprep.subr.mxu0 0.0
        %1745 = vmatpush2.msra.mxu0 0.0
        %1746 = vmatprep.mubr.f32.mxu0 0.0
        %1747 = vmatmul.mubr.f32.gmra.mxu0 %v1674
        %v1748 = vpop.f32.mrf.mxu0
        %v1749 = vadd.f32 0.0, %v1748
        %v1750 = vpop.f32.mrf.mxu0
        %v1751 = vadd.f32 0.0, %v1750
        %1752 = vdwg.mxu0
        %1753 = vmatprep.subr.mxu0 0.0
        %1754 = vmatpush1.msra.mxu0 0.0
        %1755 = vmatprep.subr.mxu0 0.0
        %1756 = vmatpush1.msra.mxu0 0.0
        %1757 = vmatprep.subr.mxu0 0.0
        %1758 = vmatpush1.msra.mxu0 0.0
        %1759 = vmatprep.subr.mxu0 0.0
        %1760 = vmatpush1.msra.mxu0 0.0
        %1761 = vmatprep.subr.mxu0 0.0
        %1762 = vmatpush1.msra.mxu0 0.0
        %1763 = vmatprep.subr.mxu0 0.0
        %1764 = vmatpush1.msra.mxu0 0.0
        %1765 = vmatprep.subr.mxu0 0.0
        %1766 = vmatpush1.msra.mxu0 0.0
        %1767 = vmatprep.subr.mxu0 0.0
        %1768 = vmatpush1.msra.mxu0 0.0
        %1769 = vmatprep.subr.mxu0 0.0
        %1770 = vmatpush1.msra.mxu0 0.0
        %1771 = vmatprep.subr.mxu0 0.0
        %1772 = vmatpush1.msra.mxu0 0.0
        %1773 = vmatprep.subr.mxu0 0.0
        %1774 = vmatpush1.msra.mxu0 0.0
        %1775 = vmatprep.subr.mxu0 0.0
        %1776 = vmatpush1.msra.mxu0 0.0
        %1777 = vmatprep.subr.mxu0 0.0
        %1778 = vmatpush1.msra.mxu0 0.0
        %1779 = vmatprep.subr.mxu0 0.0
        %1780 = vmatpush1.msra.mxu0 0.0
        %1781 = vmatprep.subr.mxu0 0.0
        %1782 = vmatpush1.msra.mxu0 0.0
        %1783 = vmatprep.subr.mxu0 0.0
        %1784 = vmatpush1.msra.mxu0 %v1680
        %1785 = vmatprep.subr.mxu0 0.0
        %1786 = vmatpush2.msra.mxu0 0.0
        %1787 = vmatprep.subr.mxu0 0.0
        %1788 = vmatpush2.msra.mxu0 0.0
        %1789 = vmatprep.subr.mxu0 0.0
        %1790 = vmatpush2.msra.mxu0 0.0
        %1791 = vmatprep.subr.mxu0 0.0
        %1792 = vmatpush2.msra.mxu0 0.0
        %1793 = vmatprep.subr.mxu0 0.0
        %1794 = vmatpush2.msra.mxu0 0.0
        %1795 = vmatprep.subr.mxu0 0.0
        %1796 = vmatpush2.msra.mxu0 0.0
        %1797 = vmatprep.subr.mxu0 0.0
        %1798 = vmatpush2.msra.mxu0 0.0
        %1799 = vmatprep.subr.mxu0 0.0
        %1800 = vmatpush2.msra.mxu0 0.0
        %1801 = vmatprep.subr.mxu0 0.0
        %1802 = vmatpush2.msra.mxu0 0.0
        %1803 = vmatprep.subr.mxu0 0.0
        %1804 = vmatpush2.msra.mxu0 0.0
        %1805 = vmatprep.subr.mxu0 0.0
        %1806 = vmatpush2.msra.mxu0 0.0
        %1807 = vmatprep.subr.mxu0 0.0
        %1808 = vmatpush2.msra.mxu0 0.0
        %1809 = vmatprep.subr.mxu0 0.0
        %1810 = vmatpush2.msra.mxu0 0.0
        %1811 = vmatprep.subr.mxu0 0.0
        %1812 = vmatpush2.msra.mxu0 0.0
        %1813 = vmatprep.subr.mxu0 0.0
        %1814 = vmatpush2.msra.mxu0 0.0
        %1815 = vmatprep.subr.mxu0 0.0
        %1816 = vmatpush2.msra.mxu0 0.0
        %1817 = vmatprep.mubr.f32.mxu0 0.0
        %1818 = vmatmul.mubr.f32.gmra.mxu0 %v1674
        %v1819 = vpop.f32.mrf.mxu0
        %v1820 = vadd.f32 0.0, %v1819
        %v1821 = vpop.f32.mrf.mxu0
        %1822 = vdwg.mxu0
        %v1823 = vadd.f32 %v1659, %v1749
        %v1824 = vadd.f32 %v1660, %v1751
        %v1825 = vadd.f32 %v1661, %v1820
        %v1826 = vld [vmem:[%s3] sm:$0xff]
        %1828 = vset.pattern.permute.xlu0 0
        %1829 = vperm.xlu0 %1828, %v1826
        %v1830 = vpop.permute.xlu0 %1829
        %v1832 = vmul.f32 %v1823, %v1830
        %v1833 = vmul.f32 %v1824, %v1830
        %v1834 = vmul.f32 %v1825, %v1830
        %v1835 = vld [vmem:[%s4] sm:$0xff]
        %1837 = vset.pattern.permute.xlu0 0
        %1838 = vperm.xlu0 %1837, %v1835
        %v1839 = vpop.permute.xlu0 %1838
        %v1841 = vadd.f32 %v1832, %v1839
        %v1842 = vadd.f32 %v1833, %v1839
        %v1843 = vadd.f32 %v1834, %v1839
        %v1844 = vmax.f32 %v1841, 0.0
        %v1845 = vmax.f32 %v1842, 0.0
        %v1846 = vmax.f32 %v1843, 0.0
        %v1848 = vlaneseq
        %v1849 = vshrl.u32 %v1848, 7
        %v1850 = vsub.s32 0, %v1849
        %v1851 = vrot.slane %v360, %v1850
        %v1852 = vlaneseq
        %v1853 = vshrl.u32 %v1852, 7
        %v1854 = vsub.s32 1, %v1853
        %v1855 = vrot.slane %v360, %v1854
        %v1856 = vlaneseq
        %v1857 = vshrl.u32 %v1856, 7
        %v1858 = vsub.s32 2, %v1857
        %v1859 = vrot.slane %v360, %v1858
        %v1863 = vmul.f32 %v1844, %v1851
        %v1864 = vmul.f32 %v1845, %v1855
        %v1865 = vmul.f32 %v1846, %v1859
        %1869 = vrot.lane.b32.xlu0 %v1863, 19
        %v1870 = vpop.permute.xlu0 %1869
        %1871 = vrot.lane.b32.xlu0 %v1864, 19
        %v1872 = vpop.permute.xlu0 %1871
        %1873 = vrot.lane.b32.xlu0 %v1865, 19
        %v1874 = vpop.permute.xlu0 %1873
        %vm1875 = vcmask 154624
        %v1876 = vsel %vm1875, %v1870, %v1872
        %v1877 = vsel %vm1875, %v1872, %v1874
        %v1881 = vsel %vm1875, 0.0, %v1870
        %vm1882 = vcmask 711680
        %v1883 = vsel %vm1882, %v1877, 0.0
        %v1884 = vld [vmem:[%s5] sm:$0xff]
        %s1885 = scalar_lea.vmem %s5, 8
        %v1886 = vld [vmem:[%s1885] sm:$0xff]
        %1889 = vrot.lane.b32.xlu0 %v1881, 127
        %v1890 = vpop.permute.xlu0 %1889
        %1891 = vrot.lane.b32.xlu0 %v1876, 127
        %v1892 = vpop.permute.xlu0 %1891
        %1893 = vrot.lane.b32.xlu0 %v1883, 127
        %v1894 = vpop.permute.xlu0 %1893
        %v1895 = vsel %vm373, %v1890, %v1892
        %v1896 = vsel %vm373, %v1892, %v1894
        %vm1900 = vcmask 64512
        %v1902 = vsel %vm1900, %v1886, 0
        %1904 = vmatprep.subr.mxu0 0.0
        %1905 = vmatpush1.msra.mxu0 0.0
        %1906 = vmatprep.subr.mxu0 0.0
        %1907 = vmatpush1.msra.mxu0 0.0
        %1908 = vmatprep.subr.mxu0 0.0
        %1909 = vmatpush1.msra.mxu0 0.0
        %1910 = vmatprep.subr.mxu0 0.0
        %1911 = vmatpush1.msra.mxu0 0.0
        %1912 = vmatprep.subr.mxu0 0.0
        %1913 = vmatpush1.msra.mxu0 0.0
        %1914 = vmatprep.subr.mxu0 0.0
        %1915 = vmatpush1.msra.mxu0 0.0
        %1916 = vmatprep.subr.mxu0 0.0
        %1917 = vmatpush1.msra.mxu0 0.0
        %1918 = vmatprep.subr.mxu0 0.0
        %1919 = vmatpush1.msra.mxu0 0.0
        %1920 = vmatprep.subr.mxu0 0.0
        %1921 = vmatpush1.msra.mxu0 0.0
        %1922 = vmatprep.subr.mxu0 0.0
        %1923 = vmatpush1.msra.mxu0 0.0
        %1924 = vmatprep.subr.mxu0 0.0
        %1925 = vmatpush1.msra.mxu0 0.0
        %1926 = vmatprep.subr.mxu0 0.0
        %1927 = vmatpush1.msra.mxu0 0.0
        %1928 = vmatprep.subr.mxu0 0.0
        %1929 = vmatpush1.msra.mxu0 0.0
        %1930 = vmatprep.subr.mxu0 0.0
        %1931 = vmatpush1.msra.mxu0 0.0
        %1932 = vmatprep.subr.mxu0 0.0
        %1933 = vmatpush1.msra.mxu0 0.0
        %1934 = vmatprep.subr.mxu0 %v1896
        %1935 = vmatpush1.msra.mxu0 %v1895
        %1936 = vmatprep.subr.mxu0 0.0
        %1937 = vmatpush2.msra.mxu0 0.0
        %1938 = vmatprep.subr.mxu0 0.0
        %1939 = vmatpush2.msra.mxu0 0.0
        %1940 = vmatprep.subr.mxu0 0.0
        %1941 = vmatpush2.msra.mxu0 0.0
        %1942 = vmatprep.subr.mxu0 0.0
        %1943 = vmatpush2.msra.mxu0 0.0
        %1944 = vmatprep.subr.mxu0 0.0
        %1945 = vmatpush2.msra.mxu0 0.0
        %1946 = vmatprep.subr.mxu0 0.0
        %1947 = vmatpush2.msra.mxu0 0.0
        %1948 = vmatprep.subr.mxu0 0.0
        %1949 = vmatpush2.msra.mxu0 0.0
        %1950 = vmatprep.subr.mxu0 0.0
        %1951 = vmatpush2.msra.mxu0 0.0
        %1952 = vmatprep.subr.mxu0 0.0
        %1953 = vmatpush2.msra.mxu0 0.0
        %1954 = vmatprep.subr.mxu0 0.0
        %1955 = vmatpush2.msra.mxu0 0.0
        %1956 = vmatprep.subr.mxu0 0.0
        %1957 = vmatpush2.msra.mxu0 0.0
        %1958 = vmatprep.subr.mxu0 0.0
        %1959 = vmatpush2.msra.mxu0 0.0
        %1960 = vmatprep.subr.mxu0 0.0
        %1961 = vmatpush2.msra.mxu0 0.0
        %1962 = vmatprep.subr.mxu0 0.0
        %1963 = vmatpush2.msra.mxu0 0.0
        %1964 = vmatprep.subr.mxu0 0.0
        %1965 = vmatpush2.msra.mxu0 0.0
        %1966 = vmatprep.subr.mxu0 0.0
        %1967 = vmatpush2.msra.mxu0 0.0
        %1968 = vmatprep.mubr.f32.mxu0 0.0
        %1969 = vmatmul.mubr.f32.gmra.mxu0 %v1902
        %v1970 = vpop.f32.mrf.mxu0
        %v1971 = vadd.f32 0.0, %v1970
        %v1972 = vpop.f32.mrf.mxu0
        %v1973 = vadd.f32 0.0, %v1972
        %1974 = vdwg.mxu0
        %1975 = vmatprep.subr.mxu0 0.0
        %1976 = vmatpush1.msra.mxu0 0.0
        %1977 = vmatprep.subr.mxu0 0.0
        %1978 = vmatpush1.msra.mxu0 0.0
        %1979 = vmatprep.subr.mxu0 0.0
        %1980 = vmatpush1.msra.mxu0 0.0
        %1981 = vmatprep.subr.mxu0 0.0
        %1982 = vmatpush1.msra.mxu0 0.0
        %1983 = vmatprep.subr.mxu0 0.0
        %1984 = vmatpush1.msra.mxu0 0.0
        %1985 = vmatprep.subr.mxu0 0.0
        %1986 = vmatpush1.msra.mxu0 0.0
        %1987 = vmatprep.subr.mxu0 0.0
        %1988 = vmatpush1.msra.mxu0 0.0
        %1989 = vmatprep.subr.mxu0 0.0
        %1990 = vmatpush1.msra.mxu0 0.0
        %1991 = vmatprep.subr.mxu0 0.0
        %1992 = vmatpush1.msra.mxu0 0.0
        %1993 = vmatprep.subr.mxu0 0.0
        %1994 = vmatpush1.msra.mxu0 0.0
        %1995 = vmatprep.subr.mxu0 0.0
        %1996 = vmatpush1.msra.mxu0 0.0
        %1997 = vmatprep.subr.mxu0 0.0
        %1998 = vmatpush1.msra.mxu0 0.0
        %1999 = vmatprep.subr.mxu0 0.0
        %2000 = vmatpush1.msra.mxu0 0.0
        %2001 = vmatprep.subr.mxu0 0.0
        %2002 = vmatpush1.msra.mxu0 0.0
        %2003 = vmatprep.subr.mxu0 0.0
        %2004 = vmatpush1.msra.mxu0 0.0
        %2005 = vmatprep.subr.mxu0 0.0
        %2006 = vmatpush1.msra.mxu0 %v1894
        %2007 = vmatprep.subr.mxu0 0.0
        %2008 = vmatpush2.msra.mxu0 0.0
        %2009 = vmatprep.subr.mxu0 0.0
        %2010 = vmatpush2.msra.mxu0 0.0
        %2011 = vmatprep.subr.mxu0 0.0
        %2012 = vmatpush2.msra.mxu0 0.0
        %2013 = vmatprep.subr.mxu0 0.0
        %2014 = vmatpush2.msra.mxu0 0.0
        %2015 = vmatprep.subr.mxu0 0.0
        %2016 = vmatpush2.msra.mxu0 0.0
        %2017 = vmatprep.subr.mxu0 0.0
        %2018 = vmatpush2.msra.mxu0 0.0
        %2019 = vmatprep.subr.mxu0 0.0
        %2020 = vmatpush2.msra.mxu0 0.0
        %2021 = vmatprep.subr.mxu0 0.0
        %2022 = vmatpush2.msra.mxu0 0.0
        %2023 = vmatprep.subr.mxu0 0.0
        %2024 = vmatpush2.msra.mxu0 0.0
        %2025 = vmatprep.subr.mxu0 0.0
        %2026 = vmatpush2.msra.mxu0 0.0
        %2027 = vmatprep.subr.mxu0 0.0
        %2028 = vmatpush2.msra.mxu0 0.0
        %2029 = vmatprep.subr.mxu0 0.0
        %2030 = vmatpush2.msra.mxu0 0.0
        %2031 = vmatprep.subr.mxu0 0.0
        %2032 = vmatpush2.msra.mxu0 0.0
        %2033 = vmatprep.subr.mxu0 0.0
        %2034 = vmatpush2.msra.mxu0 0.0
        %2035 = vmatprep.subr.mxu0 0.0
        %2036 = vmatpush2.msra.mxu0 0.0
        %2037 = vmatprep.subr.mxu0 0.0
        %2038 = vmatpush2.msra.mxu0 0.0
        %2039 = vmatprep.mubr.f32.mxu0 0.0
        %2040 = vmatmul.mubr.f32.gmra.mxu0 %v1902
        %v2041 = vpop.f32.mrf.mxu0
        %v2042 = vadd.f32 0.0, %v2041
        %v2043 = vpop.f32.mrf.mxu0
        %2044 = vdwg.mxu0
        %v2046 = vsel %vm1900, %v1884, 0
        %2048 = vmatprep.subr.mxu0 0.0
        %2049 = vmatpush1.msra.mxu0 0.0
        %2050 = vmatprep.subr.mxu0 0.0
        %2051 = vmatpush1.msra.mxu0 0.0
        %2052 = vmatprep.subr.mxu0 0.0
        %2053 = vmatpush1.msra.mxu0 0.0
        %2054 = vmatprep.subr.mxu0 0.0
        %2055 = vmatpush1.msra.mxu0 0.0
        %2056 = vmatprep.subr.mxu0 0.0
        %2057 = vmatpush1.msra.mxu0 0.0
        %2058 = vmatprep.subr.mxu0 0.0
        %2059 = vmatpush1.msra.mxu0 0.0
        %2060 = vmatprep.subr.mxu0 0.0
        %2061 = vmatpush1.msra.mxu0 0.0
        %2062 = vmatprep.subr.mxu0 0.0
        %2063 = vmatpush1.msra.mxu0 0.0
        %2064 = vmatprep.subr.mxu0 0.0
        %2065 = vmatpush1.msra.mxu0 0.0
        %2066 = vmatprep.subr.mxu0 0.0
        %2067 = vmatpush1.msra.mxu0 0.0
        %2068 = vmatprep.subr.mxu0 0.0
        %2069 = vmatpush1.msra.mxu0 0.0
        %2070 = vmatprep.subr.mxu0 0.0
        %2071 = vmatpush1.msra.mxu0 0.0
        %2072 = vmatprep.subr.mxu0 0.0
        %2073 = vmatpush1.msra.mxu0 0.0
        %2074 = vmatprep.subr.mxu0 0.0
        %2075 = vmatpush1.msra.mxu0 0.0
        %2076 = vmatprep.subr.mxu0 0.0
        %2077 = vmatpush1.msra.mxu0 0.0
        %2078 = vmatprep.subr.mxu0 %v1876
        %2079 = vmatpush1.msra.mxu0 %v1881
        %2080 = vmatprep.subr.mxu0 0.0
        %2081 = vmatpush2.msra.mxu0 0.0
        %2082 = vmatprep.subr.mxu0 0.0
        %2083 = vmatpush2.msra.mxu0 0.0
        %2084 = vmatprep.subr.mxu0 0.0
        %2085 = vmatpush2.msra.mxu0 0.0
        %2086 = vmatprep.subr.mxu0 0.0
        %2087 = vmatpush2.msra.mxu0 0.0
        %2088 = vmatprep.subr.mxu0 0.0
        %2089 = vmatpush2.msra.mxu0 0.0
        %2090 = vmatprep.subr.mxu0 0.0
        %2091 = vmatpush2.msra.mxu0 0.0
        %2092 = vmatprep.subr.mxu0 0.0
        %2093 = vmatpush2.msra.mxu0 0.0
        %2094 = vmatprep.subr.mxu0 0.0
        %2095 = vmatpush2.msra.mxu0 0.0
        %2096 = vmatprep.subr.mxu0 0.0
        %2097 = vmatpush2.msra.mxu0 0.0
        %2098 = vmatprep.subr.mxu0 0.0
        %2099 = vmatpush2.msra.mxu0 0.0
        %2100 = vmatprep.subr.mxu0 0.0
        %2101 = vmatpush2.msra.mxu0 0.0
        %2102 = vmatprep.subr.mxu0 0.0
        %2103 = vmatpush2.msra.mxu0 0.0
        %2104 = vmatprep.subr.mxu0 0.0
        %2105 = vmatpush2.msra.mxu0 0.0
        %2106 = vmatprep.subr.mxu0 0.0
        %2107 = vmatpush2.msra.mxu0 0.0
        %2108 = vmatprep.subr.mxu0 0.0
        %2109 = vmatpush2.msra.mxu0 0.0
        %2110 = vmatprep.subr.mxu0 0.0
        %2111 = vmatpush2.msra.mxu0 0.0
        %2112 = vmatprep.mubr.f32.mxu0 0.0
        %2113 = vmatmul.mubr.f32.gmra.mxu0 %v2046
        %v2114 = vpop.f32.mrf.mxu0
        %v2115 = vadd.f32 %v1971, %v2114
        %v2116 = vpop.f32.mrf.mxu0
        %v2117 = vadd.f32 %v1973, %v2116
        %2118 = vdwg.mxu0
        %2119 = vmatprep.subr.mxu0 0.0
        %2120 = vmatpush1.msra.mxu0 0.0
        %2121 = vmatprep.subr.mxu0 0.0
        %2122 = vmatpush1.msra.mxu0 0.0
        %2123 = vmatprep.subr.mxu0 0.0
        %2124 = vmatpush1.msra.mxu0 0.0
        %2125 = vmatprep.subr.mxu0 0.0
        %2126 = vmatpush1.msra.mxu0 0.0
        %2127 = vmatprep.subr.mxu0 0.0
        %2128 = vmatpush1.msra.mxu0 0.0
        %2129 = vmatprep.subr.mxu0 0.0
        %2130 = vmatpush1.msra.mxu0 0.0
        %2131 = vmatprep.subr.mxu0 0.0
        %2132 = vmatpush1.msra.mxu0 0.0
        %2133 = vmatprep.subr.mxu0 0.0
        %2134 = vmatpush1.msra.mxu0 0.0
        %2135 = vmatprep.subr.mxu0 0.0
        %2136 = vmatpush1.msra.mxu0 0.0
        %2137 = vmatprep.subr.mxu0 0.0
        %2138 = vmatpush1.msra.mxu0 0.0
        %2139 = vmatprep.subr.mxu0 0.0
        %2140 = vmatpush1.msra.mxu0 0.0
        %2141 = vmatprep.subr.mxu0 0.0
        %2142 = vmatpush1.msra.mxu0 0.0
        %2143 = vmatprep.subr.mxu0 0.0
        %2144 = vmatpush1.msra.mxu0 0.0
        %2145 = vmatprep.subr.mxu0 0.0
        %2146 = vmatpush1.msra.mxu0 0.0
        %2147 = vmatprep.subr.mxu0 0.0
        %2148 = vmatpush1.msra.mxu0 0.0
        %2149 = vmatprep.subr.mxu0 0.0
        %2150 = vmatpush1.msra.mxu0 %v1883
        %2151 = vmatprep.subr.mxu0 0.0
        %2152 = vmatpush2.msra.mxu0 0.0
        %2153 = vmatprep.subr.mxu0 0.0
        %2154 = vmatpush2.msra.mxu0 0.0
        %2155 = vmatprep.subr.mxu0 0.0
        %2156 = vmatpush2.msra.mxu0 0.0
        %2157 = vmatprep.subr.mxu0 0.0
        %2158 = vmatpush2.msra.mxu0 0.0
        %2159 = vmatprep.subr.mxu0 0.0
        %2160 = vmatpush2.msra.mxu0 0.0
        %2161 = vmatprep.subr.mxu0 0.0
        %2162 = vmatpush2.msra.mxu0 0.0
        %2163 = vmatprep.subr.mxu0 0.0
        %2164 = vmatpush2.msra.mxu0 0.0
        %2165 = vmatprep.subr.mxu0 0.0
        %2166 = vmatpush2.msra.mxu0 0.0
        %2167 = vmatprep.subr.mxu0 0.0
        %2168 = vmatpush2.msra.mxu0 0.0
        %2169 = vmatprep.subr.mxu0 0.0
        %2170 = vmatpush2.msra.mxu0 0.0
        %2171 = vmatprep.subr.mxu0 0.0
        %2172 = vmatpush2.msra.mxu0 0.0
        %2173 = vmatprep.subr.mxu0 0.0
        %2174 = vmatpush2.msra.mxu0 0.0
        %2175 = vmatprep.subr.mxu0 0.0
        %2176 = vmatpush2.msra.mxu0 0.0
        %2177 = vmatprep.subr.mxu0 0.0
        %2178 = vmatpush2.msra.mxu0 0.0
        %2179 = vmatprep.subr.mxu0 0.0
        %2180 = vmatpush2.msra.mxu0 0.0
        %2181 = vmatprep.subr.mxu0 0.0
        %2182 = vmatpush2.msra.mxu0 0.0
        %2183 = vmatprep.mubr.f32.mxu0 0.0
        %2184 = vmatmul.mubr.f32.gmra.mxu0 %v2046
        %v2185 = vpop.f32.mrf.mxu0
        %v2186 = vadd.f32 %v2042, %v2185
        %v2187 = vpop.f32.mrf.mxu0
        %2188 = vdwg.mxu0
        %s2189 = scalar_lea.vmem %s5, 16
        %v2190 = vld [vmem:[%s2189] sm:$0xff]
        %2191 = vrot.lane.b32.xlu0 %v1881, 126
        %v2192 = vpop.permute.xlu0 %2191
        %2193 = vrot.lane.b32.xlu0 %v1876, 126
        %v2194 = vpop.permute.xlu0 %2193
        %2195 = vrot.lane.b32.xlu0 %v1883, 126
        %v2196 = vpop.permute.xlu0 %2195
        %v2197 = vsel %vm686, %v2192, %v2194
        %v2198 = vsel %vm686, %v2194, %v2196
        %v2203 = vsel %vm1900, %v2190, 0
        %2205 = vmatprep.subr.mxu0 0.0
        %2206 = vmatpush1.msra.mxu0 0.0
        %2207 = vmatprep.subr.mxu0 0.0
        %2208 = vmatpush1.msra.mxu0 0.0
        %2209 = vmatprep.subr.mxu0 0.0
        %2210 = vmatpush1.msra.mxu0 0.0
        %2211 = vmatprep.subr.mxu0 0.0
        %2212 = vmatpush1.msra.mxu0 0.0
        %2213 = vmatprep.subr.mxu0 0.0
        %2214 = vmatpush1.msra.mxu0 0.0
        %2215 = vmatprep.subr.mxu0 0.0
        %2216 = vmatpush1.msra.mxu0 0.0
        %2217 = vmatprep.subr.mxu0 0.0
        %2218 = vmatpush1.msra.mxu0 0.0
        %2219 = vmatprep.subr.mxu0 0.0
        %2220 = vmatpush1.msra.mxu0 0.0
        %2221 = vmatprep.subr.mxu0 0.0
        %2222 = vmatpush1.msra.mxu0 0.0
        %2223 = vmatprep.subr.mxu0 0.0
        %2224 = vmatpush1.msra.mxu0 0.0
        %2225 = vmatprep.subr.mxu0 0.0
        %2226 = vmatpush1.msra.mxu0 0.0
        %2227 = vmatprep.subr.mxu0 0.0
        %2228 = vmatpush1.msra.mxu0 0.0
        %2229 = vmatprep.subr.mxu0 0.0
        %2230 = vmatpush1.msra.mxu0 0.0
        %2231 = vmatprep.subr.mxu0 0.0
        %2232 = vmatpush1.msra.mxu0 0.0
        %2233 = vmatprep.subr.mxu0 0.0
        %2234 = vmatpush1.msra.mxu0 0.0
        %2235 = vmatprep.subr.mxu0 %v2198
        %2236 = vmatpush1.msra.mxu0 %v2197
        %2237 = vmatprep.subr.mxu0 0.0
        %2238 = vmatpush2.msra.mxu0 0.0
        %2239 = vmatprep.subr.mxu0 0.0
        %2240 = vmatpush2.msra.mxu0 0.0
        %2241 = vmatprep.subr.mxu0 0.0
        %2242 = vmatpush2.msra.mxu0 0.0
        %2243 = vmatprep.subr.mxu0 0.0
        %2244 = vmatpush2.msra.mxu0 0.0
        %2245 = vmatprep.subr.mxu0 0.0
        %2246 = vmatpush2.msra.mxu0 0.0
        %2247 = vmatprep.subr.mxu0 0.0
        %2248 = vmatpush2.msra.mxu0 0.0
        %2249 = vmatprep.subr.mxu0 0.0
        %2250 = vmatpush2.msra.mxu0 0.0
        %2251 = vmatprep.subr.mxu0 0.0
        %2252 = vmatpush2.msra.mxu0 0.0
        %2253 = vmatprep.subr.mxu0 0.0
        %2254 = vmatpush2.msra.mxu0 0.0
        %2255 = vmatprep.subr.mxu0 0.0
        %2256 = vmatpush2.msra.mxu0 0.0
        %2257 = vmatprep.subr.mxu0 0.0
        %2258 = vmatpush2.msra.mxu0 0.0
        %2259 = vmatprep.subr.mxu0 0.0
        %2260 = vmatpush2.msra.mxu0 0.0
        %2261 = vmatprep.subr.mxu0 0.0
        %2262 = vmatpush2.msra.mxu0 0.0
        %2263 = vmatprep.subr.mxu0 0.0
        %2264 = vmatpush2.msra.mxu0 0.0
        %2265 = vmatprep.subr.mxu0 0.0
        %2266 = vmatpush2.msra.mxu0 0.0
        %2267 = vmatprep.subr.mxu0 0.0
        %2268 = vmatpush2.msra.mxu0 0.0
        %2269 = vmatprep.mubr.f32.mxu0 0.0
        %2270 = vmatmul.mubr.f32.gmra.mxu0 %v2203
        %v2271 = vpop.f32.mrf.mxu0
        %v2272 = vadd.f32 0.0, %v2271
        %v2273 = vpop.f32.mrf.mxu0
        %v2274 = vadd.f32 0.0, %v2273
        %2275 = vdwg.mxu0
        %2276 = vmatprep.subr.mxu0 0.0
        %2277 = vmatpush1.msra.mxu0 0.0
        %2278 = vmatprep.subr.mxu0 0.0
        %2279 = vmatpush1.msra.mxu0 0.0
        %2280 = vmatprep.subr.mxu0 0.0
        %2281 = vmatpush1.msra.mxu0 0.0
        %2282 = vmatprep.subr.mxu0 0.0
        %2283 = vmatpush1.msra.mxu0 0.0
        %2284 = vmatprep.subr.mxu0 0.0
        %2285 = vmatpush1.msra.mxu0 0.0
        %2286 = vmatprep.subr.mxu0 0.0
        %2287 = vmatpush1.msra.mxu0 0.0
        %2288 = vmatprep.subr.mxu0 0.0
        %2289 = vmatpush1.msra.mxu0 0.0
        %2290 = vmatprep.subr.mxu0 0.0
        %2291 = vmatpush1.msra.mxu0 0.0
        %2292 = vmatprep.subr.mxu0 0.0
        %2293 = vmatpush1.msra.mxu0 0.0
        %2294 = vmatprep.subr.mxu0 0.0
        %2295 = vmatpush1.msra.mxu0 0.0
        %2296 = vmatprep.subr.mxu0 0.0
        %2297 = vmatpush1.msra.mxu0 0.0
        %2298 = vmatprep.subr.mxu0 0.0
        %2299 = vmatpush1.msra.mxu0 0.0
        %2300 = vmatprep.subr.mxu0 0.0
        %2301 = vmatpush1.msra.mxu0 0.0
        %2302 = vmatprep.subr.mxu0 0.0
        %2303 = vmatpush1.msra.mxu0 0.0
        %2304 = vmatprep.subr.mxu0 0.0
        %2305 = vmatpush1.msra.mxu0 0.0
        %2306 = vmatprep.subr.mxu0 0.0
        %2307 = vmatpush1.msra.mxu0 %v2196
        %2308 = vmatprep.subr.mxu0 0.0
        %2309 = vmatpush2.msra.mxu0 0.0
        %2310 = vmatprep.subr.mxu0 0.0
        %2311 = vmatpush2.msra.mxu0 0.0
        %2312 = vmatprep.subr.mxu0 0.0
        %2313 = vmatpush2.msra.mxu0 0.0
        %2314 = vmatprep.subr.mxu0 0.0
        %2315 = vmatpush2.msra.mxu0 0.0
        %2316 = vmatprep.subr.mxu0 0.0
        %2317 = vmatpush2.msra.mxu0 0.0
        %2318 = vmatprep.subr.mxu0 0.0
        %2319 = vmatpush2.msra.mxu0 0.0
        %2320 = vmatprep.subr.mxu0 0.0
        %2321 = vmatpush2.msra.mxu0 0.0
        %2322 = vmatprep.subr.mxu0 0.0
        %2323 = vmatpush2.msra.mxu0 0.0
        %2324 = vmatprep.subr.mxu0 0.0
        %2325 = vmatpush2.msra.mxu0 0.0
        %2326 = vmatprep.subr.mxu0 0.0
        %2327 = vmatpush2.msra.mxu0 0.0
        %2328 = vmatprep.subr.mxu0 0.0
        %2329 = vmatpush2.msra.mxu0 0.0
        %2330 = vmatprep.subr.mxu0 0.0
        %2331 = vmatpush2.msra.mxu0 0.0
        %2332 = vmatprep.subr.mxu0 0.0
        %2333 = vmatpush2.msra.mxu0 0.0
        %2334 = vmatprep.subr.mxu0 0.0
        %2335 = vmatpush2.msra.mxu0 0.0
        %2336 = vmatprep.subr.mxu0 0.0
        %2337 = vmatpush2.msra.mxu0 0.0
        %2338 = vmatprep.subr.mxu0 0.0
        %2339 = vmatpush2.msra.mxu0 0.0
        %2340 = vmatprep.mubr.f32.mxu0 0.0
        %2341 = vmatmul.mubr.f32.gmra.mxu0 %v2203
        %v2342 = vpop.f32.mrf.mxu0
        %v2343 = vadd.f32 0.0, %v2342
        %v2344 = vpop.f32.mrf.mxu0
        %2345 = vdwg.mxu0
        %v2346 = vadd.f32 %v2115, %v2272
        %v2347 = vadd.f32 %v2117, %v2274
        %v2348 = vadd.f32 %v2186, %v2343
        %s2349 = scalar_lea.vmem %s5, 24
        %v2350 = vld [vmem:[%s2349] sm:$0xff]
        %2351 = vrot.lane.b32.xlu0 %v1881, 110
        %v2352 = vpop.permute.xlu0 %2351
        %2353 = vrot.lane.b32.xlu0 %v1876, 110
        %v2354 = vpop.permute.xlu0 %2353
        %2355 = vrot.lane.b32.xlu0 %v1883, 110
        %v2356 = vpop.permute.xlu0 %2355
        %v2357 = vsel %vm850, %v2352, %v2354
        %v2358 = vsel %vm850, %v2354, %v2356
        %v2363 = vsel %vm1900, %v2350, 0
        %2365 = vmatprep.subr.mxu0 0.0
        %2366 = vmatpush1.msra.mxu0 0.0
        %2367 = vmatprep.subr.mxu0 0.0
        %2368 = vmatpush1.msra.mxu0 0.0
        %2369 = vmatprep.subr.mxu0 0.0
        %2370 = vmatpush1.msra.mxu0 0.0
        %2371 = vmatprep.subr.mxu0 0.0
        %2372 = vmatpush1.msra.mxu0 0.0
        %2373 = vmatprep.subr.mxu0 0.0
        %2374 = vmatpush1.msra.mxu0 0.0
        %2375 = vmatprep.subr.mxu0 0.0
        %2376 = vmatpush1.msra.mxu0 0.0
        %2377 = vmatprep.subr.mxu0 0.0
        %2378 = vmatpush1.msra.mxu0 0.0
        %2379 = vmatprep.subr.mxu0 0.0
        %2380 = vmatpush1.msra.mxu0 0.0
        %2381 = vmatprep.subr.mxu0 0.0
        %2382 = vmatpush1.msra.mxu0 0.0
        %2383 = vmatprep.subr.mxu0 0.0
        %2384 = vmatpush1.msra.mxu0 0.0
        %2385 = vmatprep.subr.mxu0 0.0
        %2386 = vmatpush1.msra.mxu0 0.0
        %2387 = vmatprep.subr.mxu0 0.0
        %2388 = vmatpush1.msra.mxu0 0.0
        %2389 = vmatprep.subr.mxu0 0.0
        %2390 = vmatpush1.msra.mxu0 0.0
        %2391 = vmatprep.subr.mxu0 0.0
        %2392 = vmatpush1.msra.mxu0 0.0
        %2393 = vmatprep.subr.mxu0 0.0
        %2394 = vmatpush1.msra.mxu0 0.0
        %2395 = vmatprep.subr.mxu0 %v2358
        %2396 = vmatpush1.msra.mxu0 %v2357
        %2397 = vmatprep.subr.mxu0 0.0
        %2398 = vmatpush2.msra.mxu0 0.0
        %2399 = vmatprep.subr.mxu0 0.0
        %2400 = vmatpush2.msra.mxu0 0.0
        %2401 = vmatprep.subr.mxu0 0.0
        %2402 = vmatpush2.msra.mxu0 0.0
        %2403 = vmatprep.subr.mxu0 0.0
        %2404 = vmatpush2.msra.mxu0 0.0
        %2405 = vmatprep.subr.mxu0 0.0
        %2406 = vmatpush2.msra.mxu0 0.0
        %2407 = vmatprep.subr.mxu0 0.0
        %2408 = vmatpush2.msra.mxu0 0.0
        %2409 = vmatprep.subr.mxu0 0.0
        %2410 = vmatpush2.msra.mxu0 0.0
        %2411 = vmatprep.subr.mxu0 0.0
        %2412 = vmatpush2.msra.mxu0 0.0
        %2413 = vmatprep.subr.mxu0 0.0
        %2414 = vmatpush2.msra.mxu0 0.0
        %2415 = vmatprep.subr.mxu0 0.0
        %2416 = vmatpush2.msra.mxu0 0.0
        %2417 = vmatprep.subr.mxu0 0.0
        %2418 = vmatpush2.msra.mxu0 0.0
        %2419 = vmatprep.subr.mxu0 0.0
        %2420 = vmatpush2.msra.mxu0 0.0
        %2421 = vmatprep.subr.mxu0 0.0
        %2422 = vmatpush2.msra.mxu0 0.0
        %2423 = vmatprep.subr.mxu0 0.0
        %2424 = vmatpush2.msra.mxu0 0.0
        %2425 = vmatprep.subr.mxu0 0.0
        %2426 = vmatpush2.msra.mxu0 0.0
        %2427 = vmatprep.subr.mxu0 0.0
        %2428 = vmatpush2.msra.mxu0 0.0
        %2429 = vmatprep.mubr.f32.mxu0 0.0
        %2430 = vmatmul.mubr.f32.gmra.mxu0 %v2363
        %v2431 = vpop.f32.mrf.mxu0
        %v2432 = vadd.f32 0.0, %v2431
        %v2433 = vpop.f32.mrf.mxu0
        %v2434 = vadd.f32 0.0, %v2433
        %2435 = vdwg.mxu0
        %2436 = vmatprep.subr.mxu0 0.0
        %2437 = vmatpush1.msra.mxu0 0.0
        %2438 = vmatprep.subr.mxu0 0.0
        %2439 = vmatpush1.msra.mxu0 0.0
        %2440 = vmatprep.subr.mxu0 0.0
        %2441 = vmatpush1.msra.mxu0 0.0
        %2442 = vmatprep.subr.mxu0 0.0
        %2443 = vmatpush1.msra.mxu0 0.0
        %2444 = vmatprep.subr.mxu0 0.0
        %2445 = vmatpush1.msra.mxu0 0.0
        %2446 = vmatprep.subr.mxu0 0.0
        %2447 = vmatpush1.msra.mxu0 0.0
        %2448 = vmatprep.subr.mxu0 0.0
        %2449 = vmatpush1.msra.mxu0 0.0
        %2450 = vmatprep.subr.mxu0 0.0
        %2451 = vmatpush1.msra.mxu0 0.0
        %2452 = vmatprep.subr.mxu0 0.0
        %2453 = vmatpush1.msra.mxu0 0.0
        %2454 = vmatprep.subr.mxu0 0.0
        %2455 = vmatpush1.msra.mxu0 0.0
        %2456 = vmatprep.subr.mxu0 0.0
        %2457 = vmatpush1.msra.mxu0 0.0
        %2458 = vmatprep.subr.mxu0 0.0
        %2459 = vmatpush1.msra.mxu0 0.0
        %2460 = vmatprep.subr.mxu0 0.0
        %2461 = vmatpush1.msra.mxu0 0.0
        %2462 = vmatprep.subr.mxu0 0.0
        %2463 = vmatpush1.msra.mxu0 0.0
        %2464 = vmatprep.subr.mxu0 0.0
        %2465 = vmatpush1.msra.mxu0 0.0
        %2466 = vmatprep.subr.mxu0 0.0
        %2467 = vmatpush1.msra.mxu0 %v2356
        %2468 = vmatprep.subr.mxu0 0.0
        %2469 = vmatpush2.msra.mxu0 0.0
        %2470 = vmatprep.subr.mxu0 0.0
        %2471 = vmatpush2.msra.mxu0 0.0
        %2472 = vmatprep.subr.mxu0 0.0
        %2473 = vmatpush2.msra.mxu0 0.0
        %2474 = vmatprep.subr.mxu0 0.0
        %2475 = vmatpush2.msra.mxu0 0.0
        %2476 = vmatprep.subr.mxu0 0.0
        %2477 = vmatpush2.msra.mxu0 0.0
        %2478 = vmatprep.subr.mxu0 0.0
        %2479 = vmatpush2.msra.mxu0 0.0
        %2480 = vmatprep.subr.mxu0 0.0
        %2481 = vmatpush2.msra.mxu0 0.0
        %2482 = vmatprep.subr.mxu0 0.0
        %2483 = vmatpush2.msra.mxu0 0.0
        %2484 = vmatprep.subr.mxu0 0.0
        %2485 = vmatpush2.msra.mxu0 0.0
        %2486 = vmatprep.subr.mxu0 0.0
        %2487 = vmatpush2.msra.mxu0 0.0
        %2488 = vmatprep.subr.mxu0 0.0
        %2489 = vmatpush2.msra.mxu0 0.0
        %2490 = vmatprep.subr.mxu0 0.0
        %2491 = vmatpush2.msra.mxu0 0.0
        %2492 = vmatprep.subr.mxu0 0.0
        %2493 = vmatpush2.msra.mxu0 0.0
        %2494 = vmatprep.subr.mxu0 0.0
        %2495 = vmatpush2.msra.mxu0 0.0
        %2496 = vmatprep.subr.mxu0 0.0
        %2497 = vmatpush2.msra.mxu0 0.0
        %2498 = vmatprep.subr.mxu0 0.0
        %2499 = vmatpush2.msra.mxu0 0.0
        %2500 = vmatprep.mubr.f32.mxu0 0.0
        %2501 = vmatmul.mubr.f32.gmra.mxu0 %v2363
        %v2502 = vpop.f32.mrf.mxu0
        %v2503 = vadd.f32 0.0, %v2502
        %v2504 = vpop.f32.mrf.mxu0
        %2505 = vdwg.mxu0
        %v2506 = vadd.f32 %v2346, %v2432
        %v2507 = vadd.f32 %v2347, %v2434
        %v2508 = vadd.f32 %v2348, %v2503
        %s2509 = scalar_lea.vmem %s5, 32
        %v2510 = vld [vmem:[%s2509] sm:$0xff]
        %2511 = vrot.lane.b32.xlu0 %v1881, 109
        %v2512 = vpop.permute.xlu0 %2511
        %2513 = vrot.lane.b32.xlu0 %v1876, 109
        %v2514 = vpop.permute.xlu0 %2513
        %2515 = vrot.lane.b32.xlu0 %v1883, 109
        %v2516 = vpop.permute.xlu0 %2515
        %v2517 = vsel %vm1014, %v2512, %v2514
        %v2518 = vsel %vm1014, %v2514, %v2516
        %v2523 = vsel %vm1900, %v2510, 0
        %2525 = vmatprep.subr.mxu0 0.0
        %2526 = vmatpush1.msra.mxu0 0.0
        %2527 = vmatprep.subr.mxu0 0.0
        %2528 = vmatpush1.msra.mxu0 0.0
        %2529 = vmatprep.subr.mxu0 0.0
        %2530 = vmatpush1.msra.mxu0 0.0
        %2531 = vmatprep.subr.mxu0 0.0
        %2532 = vmatpush1.msra.mxu0 0.0
        %2533 = vmatprep.subr.mxu0 0.0
        %2534 = vmatpush1.msra.mxu0 0.0
        %2535 = vmatprep.subr.mxu0 0.0
        %2536 = vmatpush1.msra.mxu0 0.0
        %2537 = vmatprep.subr.mxu0 0.0
        %2538 = vmatpush1.msra.mxu0 0.0
        %2539 = vmatprep.subr.mxu0 0.0
        %2540 = vmatpush1.msra.mxu0 0.0
        %2541 = vmatprep.subr.mxu0 0.0
        %2542 = vmatpush1.msra.mxu0 0.0
        %2543 = vmatprep.subr.mxu0 0.0
        %2544 = vmatpush1.msra.mxu0 0.0
        %2545 = vmatprep.subr.mxu0 0.0
        %2546 = vmatpush1.msra.mxu0 0.0
        %2547 = vmatprep.subr.mxu0 0.0
        %2548 = vmatpush1.msra.mxu0 0.0
        %2549 = vmatprep.subr.mxu0 0.0
        %2550 = vmatpush1.msra.mxu0 0.0
        %2551 = vmatprep.subr.mxu0 0.0
        %2552 = vmatpush1.msra.mxu0 0.0
        %2553 = vmatprep.subr.mxu0 0.0
        %2554 = vmatpush1.msra.mxu0 0.0
        %2555 = vmatprep.subr.mxu0 %v2518
        %2556 = vmatpush1.msra.mxu0 %v2517
        %2557 = vmatprep.subr.mxu0 0.0
        %2558 = vmatpush2.msra.mxu0 0.0
        %2559 = vmatprep.subr.mxu0 0.0
        %2560 = vmatpush2.msra.mxu0 0.0
        %2561 = vmatprep.subr.mxu0 0.0
        %2562 = vmatpush2.msra.mxu0 0.0
        %2563 = vmatprep.subr.mxu0 0.0
        %2564 = vmatpush2.msra.mxu0 0.0
        %2565 = vmatprep.subr.mxu0 0.0
        %2566 = vmatpush2.msra.mxu0 0.0
        %2567 = vmatprep.subr.mxu0 0.0
        %2568 = vmatpush2.msra.mxu0 0.0
        %2569 = vmatprep.subr.mxu0 0.0
        %2570 = vmatpush2.msra.mxu0 0.0
        %2571 = vmatprep.subr.mxu0 0.0
        %2572 = vmatpush2.msra.mxu0 0.0
        %2573 = vmatprep.subr.mxu0 0.0
        %2574 = vmatpush2.msra.mxu0 0.0
        %2575 = vmatprep.subr.mxu0 0.0
        %2576 = vmatpush2.msra.mxu0 0.0
        %2577 = vmatprep.subr.mxu0 0.0
        %2578 = vmatpush2.msra.mxu0 0.0
        %2579 = vmatprep.subr.mxu0 0.0
        %2580 = vmatpush2.msra.mxu0 0.0
        %2581 = vmatprep.subr.mxu0 0.0
        %2582 = vmatpush2.msra.mxu0 0.0
        %2583 = vmatprep.subr.mxu0 0.0
        %2584 = vmatpush2.msra.mxu0 0.0
        %2585 = vmatprep.subr.mxu0 0.0
        %2586 = vmatpush2.msra.mxu0 0.0
        %2587 = vmatprep.subr.mxu0 0.0
        %2588 = vmatpush2.msra.mxu0 0.0
        %2589 = vmatprep.mubr.f32.mxu0 0.0
        %2590 = vmatmul.mubr.f32.gmra.mxu0 %v2523
        %v2591 = vpop.f32.mrf.mxu0
        %v2592 = vadd.f32 0.0, %v2591
        %v2593 = vpop.f32.mrf.mxu0
        %v2594 = vadd.f32 0.0, %v2593
        %2595 = vdwg.mxu0
        %2596 = vmatprep.subr.mxu0 0.0
        %2597 = vmatpush1.msra.mxu0 0.0
        %2598 = vmatprep.subr.mxu0 0.0
        %2599 = vmatpush1.msra.mxu0 0.0
        %2600 = vmatprep.subr.mxu0 0.0
        %2601 = vmatpush1.msra.mxu0 0.0
        %2602 = vmatprep.subr.mxu0 0.0
        %2603 = vmatpush1.msra.mxu0 0.0
        %2604 = vmatprep.subr.mxu0 0.0
        %2605 = vmatpush1.msra.mxu0 0.0
        %2606 = vmatprep.subr.mxu0 0.0
        %2607 = vmatpush1.msra.mxu0 0.0
        %2608 = vmatprep.subr.mxu0 0.0
        %2609 = vmatpush1.msra.mxu0 0.0
        %2610 = vmatprep.subr.mxu0 0.0
        %2611 = vmatpush1.msra.mxu0 0.0
        %2612 = vmatprep.subr.mxu0 0.0
        %2613 = vmatpush1.msra.mxu0 0.0
        %2614 = vmatprep.subr.mxu0 0.0
        %2615 = vmatpush1.msra.mxu0 0.0
        %2616 = vmatprep.subr.mxu0 0.0
        %2617 = vmatpush1.msra.mxu0 0.0
        %2618 = vmatprep.subr.mxu0 0.0
        %2619 = vmatpush1.msra.mxu0 0.0
        %2620 = vmatprep.subr.mxu0 0.0
        %2621 = vmatpush1.msra.mxu0 0.0
        %2622 = vmatprep.subr.mxu0 0.0
        %2623 = vmatpush1.msra.mxu0 0.0
        %2624 = vmatprep.subr.mxu0 0.0
        %2625 = vmatpush1.msra.mxu0 0.0
        %2626 = vmatprep.subr.mxu0 0.0
        %2627 = vmatpush1.msra.mxu0 %v2516
        %2628 = vmatprep.subr.mxu0 0.0
        %2629 = vmatpush2.msra.mxu0 0.0
        %2630 = vmatprep.subr.mxu0 0.0
        %2631 = vmatpush2.msra.mxu0 0.0
        %2632 = vmatprep.subr.mxu0 0.0
        %2633 = vmatpush2.msra.mxu0 0.0
        %2634 = vmatprep.subr.mxu0 0.0
        %2635 = vmatpush2.msra.mxu0 0.0
        %2636 = vmatprep.subr.mxu0 0.0
        %2637 = vmatpush2.msra.mxu0 0.0
        %2638 = vmatprep.subr.mxu0 0.0
        %2639 = vmatpush2.msra.mxu0 0.0
        %2640 = vmatprep.subr.mxu0 0.0
        %2641 = vmatpush2.msra.mxu0 0.0
        %2642 = vmatprep.subr.mxu0 0.0
        %2643 = vmatpush2.msra.mxu0 0.0
        %2644 = vmatprep.subr.mxu0 0.0
        %2645 = vmatpush2.msra.mxu0 0.0
        %2646 = vmatprep.subr.mxu0 0.0
        %2647 = vmatpush2.msra.mxu0 0.0
        %2648 = vmatprep.subr.mxu0 0.0
        %2649 = vmatpush2.msra.mxu0 0.0
        %2650 = vmatprep.subr.mxu0 0.0
        %2651 = vmatpush2.msra.mxu0 0.0
        %2652 = vmatprep.subr.mxu0 0.0
        %2653 = vmatpush2.msra.mxu0 0.0
        %2654 = vmatprep.subr.mxu0 0.0
        %2655 = vmatpush2.msra.mxu0 0.0
        %2656 = vmatprep.subr.mxu0 0.0
        %2657 = vmatpush2.msra.mxu0 0.0
        %2658 = vmatprep.subr.mxu0 0.0
        %2659 = vmatpush2.msra.mxu0 0.0
        %2660 = vmatprep.mubr.f32.mxu0 0.0
        %2661 = vmatmul.mubr.f32.gmra.mxu0 %v2523
        %v2662 = vpop.f32.mrf.mxu0
        %v2663 = vadd.f32 0.0, %v2662
        %v2664 = vpop.f32.mrf.mxu0
        %2665 = vdwg.mxu0
        %v2666 = vadd.f32 %v2506, %v2592
        %v2667 = vadd.f32 %v2507, %v2594
        %v2668 = vadd.f32 %v2508, %v2663
        %s2669 = scalar_lea.vmem %s5, 40
        %v2670 = vld [vmem:[%s2669] sm:$0xff]
        %2671 = vrot.lane.b32.xlu0 %v1881, 108
        %v2672 = vpop.permute.xlu0 %2671
        %2673 = vrot.lane.b32.xlu0 %v1876, 108
        %v2674 = vpop.permute.xlu0 %2673
        %2675 = vrot.lane.b32.xlu0 %v1883, 108
        %v2676 = vpop.permute.xlu0 %2675
        %v2677 = vsel %vm1178, %v2672, %v2674
        %v2678 = vsel %vm1178, %v2674, %v2676
        %v2683 = vsel %vm1900, %v2670, 0
        %2685 = vmatprep.subr.mxu0 0.0
        %2686 = vmatpush1.msra.mxu0 0.0
        %2687 = vmatprep.subr.mxu0 0.0
        %2688 = vmatpush1.msra.mxu0 0.0
        %2689 = vmatprep.subr.mxu0 0.0
        %2690 = vmatpush1.msra.mxu0 0.0
        %2691 = vmatprep.subr.mxu0 0.0
        %2692 = vmatpush1.msra.mxu0 0.0
        %2693 = vmatprep.subr.mxu0 0.0
        %2694 = vmatpush1.msra.mxu0 0.0
        %2695 = vmatprep.subr.mxu0 0.0
        %2696 = vmatpush1.msra.mxu0 0.0
        %2697 = vmatprep.subr.mxu0 0.0
        %2698 = vmatpush1.msra.mxu0 0.0
        %2699 = vmatprep.subr.mxu0 0.0
        %2700 = vmatpush1.msra.mxu0 0.0
        %2701 = vmatprep.subr.mxu0 0.0
        %2702 = vmatpush1.msra.mxu0 0.0
        %2703 = vmatprep.subr.mxu0 0.0
        %2704 = vmatpush1.msra.mxu0 0.0
        %2705 = vmatprep.subr.mxu0 0.0
        %2706 = vmatpush1.msra.mxu0 0.0
        %2707 = vmatprep.subr.mxu0 0.0
        %2708 = vmatpush1.msra.mxu0 0.0
        %2709 = vmatprep.subr.mxu0 0.0
        %2710 = vmatpush1.msra.mxu0 0.0
        %2711 = vmatprep.subr.mxu0 0.0
        %2712 = vmatpush1.msra.mxu0 0.0
        %2713 = vmatprep.subr.mxu0 0.0
        %2714 = vmatpush1.msra.mxu0 0.0
        %2715 = vmatprep.subr.mxu0 %v2678
        %2716 = vmatpush1.msra.mxu0 %v2677
        %2717 = vmatprep.subr.mxu0 0.0
        %2718 = vmatpush2.msra.mxu0 0.0
        %2719 = vmatprep.subr.mxu0 0.0
        %2720 = vmatpush2.msra.mxu0 0.0
        %2721 = vmatprep.subr.mxu0 0.0
        %2722 = vmatpush2.msra.mxu0 0.0
        %2723 = vmatprep.subr.mxu0 0.0
        %2724 = vmatpush2.msra.mxu0 0.0
        %2725 = vmatprep.subr.mxu0 0.0
        %2726 = vmatpush2.msra.mxu0 0.0
        %2727 = vmatprep.subr.mxu0 0.0
        %2728 = vmatpush2.msra.mxu0 0.0
        %2729 = vmatprep.subr.mxu0 0.0
        %2730 = vmatpush2.msra.mxu0 0.0
        %2731 = vmatprep.subr.mxu0 0.0
        %2732 = vmatpush2.msra.mxu0 0.0
        %2733 = vmatprep.subr.mxu0 0.0
        %2734 = vmatpush2.msra.mxu0 0.0
        %2735 = vmatprep.subr.mxu0 0.0
        %2736 = vmatpush2.msra.mxu0 0.0
        %2737 = vmatprep.subr.mxu0 0.0
        %2738 = vmatpush2.msra.mxu0 0.0
        %2739 = vmatprep.subr.mxu0 0.0
        %2740 = vmatpush2.msra.mxu0 0.0
        %2741 = vmatprep.subr.mxu0 0.0
        %2742 = vmatpush2.msra.mxu0 0.0
        %2743 = vmatprep.subr.mxu0 0.0
        %2744 = vmatpush2.msra.mxu0 0.0
        %2745 = vmatprep.subr.mxu0 0.0
        %2746 = vmatpush2.msra.mxu0 0.0
        %2747 = vmatprep.subr.mxu0 0.0
        %2748 = vmatpush2.msra.mxu0 0.0
        %2749 = vmatprep.mubr.f32.mxu0 0.0
        %2750 = vmatmul.mubr.f32.gmra.mxu0 %v2683
        %v2751 = vpop.f32.mrf.mxu0
        %v2752 = vadd.f32 0.0, %v2751
        %v2753 = vpop.f32.mrf.mxu0
        %v2754 = vadd.f32 0.0, %v2753
        %2755 = vdwg.mxu0
        %2756 = vmatprep.subr.mxu0 0.0
        %2757 = vmatpush1.msra.mxu0 0.0
        %2758 = vmatprep.subr.mxu0 0.0
        %2759 = vmatpush1.msra.mxu0 0.0
        %2760 = vmatprep.subr.mxu0 0.0
        %2761 = vmatpush1.msra.mxu0 0.0
        %2762 = vmatprep.subr.mxu0 0.0
        %2763 = vmatpush1.msra.mxu0 0.0
        %2764 = vmatprep.subr.mxu0 0.0
        %2765 = vmatpush1.msra.mxu0 0.0
        %2766 = vmatprep.subr.mxu0 0.0
        %2767 = vmatpush1.msra.mxu0 0.0
        %2768 = vmatprep.subr.mxu0 0.0
        %2769 = vmatpush1.msra.mxu0 0.0
        %2770 = vmatprep.subr.mxu0 0.0
        %2771 = vmatpush1.msra.mxu0 0.0
        %2772 = vmatprep.subr.mxu0 0.0
        %2773 = vmatpush1.msra.mxu0 0.0
        %2774 = vmatprep.subr.mxu0 0.0
        %2775 = vmatpush1.msra.mxu0 0.0
        %2776 = vmatprep.subr.mxu0 0.0
        %2777 = vmatpush1.msra.mxu0 0.0
        %2778 = vmatprep.subr.mxu0 0.0
        %2779 = vmatpush1.msra.mxu0 0.0
        %2780 = vmatprep.subr.mxu0 0.0
        %2781 = vmatpush1.msra.mxu0 0.0
        %2782 = vmatprep.subr.mxu0 0.0
        %2783 = vmatpush1.msra.mxu0 0.0
        %2784 = vmatprep.subr.mxu0 0.0
        %2785 = vmatpush1.msra.mxu0 0.0
        %2786 = vmatprep.subr.mxu0 0.0
        %2787 = vmatpush1.msra.mxu0 %v2676
        %2788 = vmatprep.subr.mxu0 0.0
        %2789 = vmatpush2.msra.mxu0 0.0
        %2790 = vmatprep.subr.mxu0 0.0
        %2791 = vmatpush2.msra.mxu0 0.0
        %2792 = vmatprep.subr.mxu0 0.0
        %2793 = vmatpush2.msra.mxu0 0.0
        %2794 = vmatprep.subr.mxu0 0.0
        %2795 = vmatpush2.msra.mxu0 0.0
        %2796 = vmatprep.subr.mxu0 0.0
        %2797 = vmatpush2.msra.mxu0 0.0
        %2798 = vmatprep.subr.mxu0 0.0
        %2799 = vmatpush2.msra.mxu0 0.0
        %2800 = vmatprep.subr.mxu0 0.0
        %2801 = vmatpush2.msra.mxu0 0.0
        %2802 = vmatprep.subr.mxu0 0.0
        %2803 = vmatpush2.msra.mxu0 0.0
        %2804 = vmatprep.subr.mxu0 0.0
        %2805 = vmatpush2.msra.mxu0 0.0
        %2806 = vmatprep.subr.mxu0 0.0
        %2807 = vmatpush2.msra.mxu0 0.0
        %2808 = vmatprep.subr.mxu0 0.0
        %2809 = vmatpush2.msra.mxu0 0.0
        %2810 = vmatprep.subr.mxu0 0.0
        %2811 = vmatpush2.msra.mxu0 0.0
        %2812 = vmatprep.subr.mxu0 0.0
        %2813 = vmatpush2.msra.mxu0 0.0
        %2814 = vmatprep.subr.mxu0 0.0
        %2815 = vmatpush2.msra.mxu0 0.0
        %2816 = vmatprep.subr.mxu0 0.0
        %2817 = vmatpush2.msra.mxu0 0.0
        %2818 = vmatprep.subr.mxu0 0.0
        %2819 = vmatpush2.msra.mxu0 0.0
        %2820 = vmatprep.mubr.f32.mxu0 0.0
        %2821 = vmatmul.mubr.f32.gmra.mxu0 %v2683
        %v2822 = vpop.f32.mrf.mxu0
        %v2823 = vadd.f32 0.0, %v2822
        %v2824 = vpop.f32.mrf.mxu0
        %2825 = vdwg.mxu0
        %v2826 = vadd.f32 %v2666, %v2752
        %v2827 = vadd.f32 %v2667, %v2754
        %v2828 = vadd.f32 %v2668, %v2823
        %s2829 = scalar_lea.vmem %s5, 48
        %v2830 = vld [vmem:[%s2829] sm:$0xff]
        %2831 = vrot.lane.b32.xlu0 %v1881, 92
        %v2832 = vpop.permute.xlu0 %2831
        %2833 = vrot.lane.b32.xlu0 %v1876, 92
        %v2834 = vpop.permute.xlu0 %2833
        %2835 = vrot.lane.b32.xlu0 %v1883, 92
        %v2836 = vpop.permute.xlu0 %2835
        %v2837 = vsel %vm1342, %v2832, %v2834
        %v2838 = vsel %vm1342, %v2834, %v2836
        %v2843 = vsel %vm1900, %v2830, 0
        %2845 = vmatprep.subr.mxu0 0.0
        %2846 = vmatpush1.msra.mxu0 0.0
        %2847 = vmatprep.subr.mxu0 0.0
        %2848 = vmatpush1.msra.mxu0 0.0
        %2849 = vmatprep.subr.mxu0 0.0
        %2850 = vmatpush1.msra.mxu0 0.0
        %2851 = vmatprep.subr.mxu0 0.0
        %2852 = vmatpush1.msra.mxu0 0.0
        %2853 = vmatprep.subr.mxu0 0.0
        %2854 = vmatpush1.msra.mxu0 0.0
        %2855 = vmatprep.subr.mxu0 0.0
        %2856 = vmatpush1.msra.mxu0 0.0
        %2857 = vmatprep.subr.mxu0 0.0
        %2858 = vmatpush1.msra.mxu0 0.0
        %2859 = vmatprep.subr.mxu0 0.0
        %2860 = vmatpush1.msra.mxu0 0.0
        %2861 = vmatprep.subr.mxu0 0.0
        %2862 = vmatpush1.msra.mxu0 0.0
        %2863 = vmatprep.subr.mxu0 0.0
        %2864 = vmatpush1.msra.mxu0 0.0
        %2865 = vmatprep.subr.mxu0 0.0
        %2866 = vmatpush1.msra.mxu0 0.0
        %2867 = vmatprep.subr.mxu0 0.0
        %2868 = vmatpush1.msra.mxu0 0.0
        %2869 = vmatprep.subr.mxu0 0.0
        %2870 = vmatpush1.msra.mxu0 0.0
        %2871 = vmatprep.subr.mxu0 0.0
        %2872 = vmatpush1.msra.mxu0 0.0
        %2873 = vmatprep.subr.mxu0 0.0
        %2874 = vmatpush1.msra.mxu0 0.0
        %2875 = vmatprep.subr.mxu0 %v2838
        %2876 = vmatpush1.msra.mxu0 %v2837
        %2877 = vmatprep.subr.mxu0 0.0
        %2878 = vmatpush2.msra.mxu0 0.0
        %2879 = vmatprep.subr.mxu0 0.0
        %2880 = vmatpush2.msra.mxu0 0.0
        %2881 = vmatprep.subr.mxu0 0.0
        %2882 = vmatpush2.msra.mxu0 0.0
        %2883 = vmatprep.subr.mxu0 0.0
        %2884 = vmatpush2.msra.mxu0 0.0
        %2885 = vmatprep.subr.mxu0 0.0
        %2886 = vmatpush2.msra.mxu0 0.0
        %2887 = vmatprep.subr.mxu0 0.0
        %2888 = vmatpush2.msra.mxu0 0.0
        %2889 = vmatprep.subr.mxu0 0.0
        %2890 = vmatpush2.msra.mxu0 0.0
        %2891 = vmatprep.subr.mxu0 0.0
        %2892 = vmatpush2.msra.mxu0 0.0
        %2893 = vmatprep.subr.mxu0 0.0
        %2894 = vmatpush2.msra.mxu0 0.0
        %2895 = vmatprep.subr.mxu0 0.0
        %2896 = vmatpush2.msra.mxu0 0.0
        %2897 = vmatprep.subr.mxu0 0.0
        %2898 = vmatpush2.msra.mxu0 0.0
        %2899 = vmatprep.subr.mxu0 0.0
        %2900 = vmatpush2.msra.mxu0 0.0
        %2901 = vmatprep.subr.mxu0 0.0
        %2902 = vmatpush2.msra.mxu0 0.0
        %2903 = vmatprep.subr.mxu0 0.0
        %2904 = vmatpush2.msra.mxu0 0.0
        %2905 = vmatprep.subr.mxu0 0.0
        %2906 = vmatpush2.msra.mxu0 0.0
        %2907 = vmatprep.subr.mxu0 0.0
        %2908 = vmatpush2.msra.mxu0 0.0
        %2909 = vmatprep.mubr.f32.mxu0 0.0
        %2910 = vmatmul.mubr.f32.gmra.mxu0 %v2843
        %v2911 = vpop.f32.mrf.mxu0
        %v2912 = vadd.f32 0.0, %v2911
        %v2913 = vpop.f32.mrf.mxu0
        %v2914 = vadd.f32 0.0, %v2913
        %2915 = vdwg.mxu0
        %2916 = vmatprep.subr.mxu0 0.0
        %2917 = vmatpush1.msra.mxu0 0.0
        %2918 = vmatprep.subr.mxu0 0.0
        %2919 = vmatpush1.msra.mxu0 0.0
        %2920 = vmatprep.subr.mxu0 0.0
        %2921 = vmatpush1.msra.mxu0 0.0
        %2922 = vmatprep.subr.mxu0 0.0
        %2923 = vmatpush1.msra.mxu0 0.0
        %2924 = vmatprep.subr.mxu0 0.0
        %2925 = vmatpush1.msra.mxu0 0.0
        %2926 = vmatprep.subr.mxu0 0.0
        %2927 = vmatpush1.msra.mxu0 0.0
        %2928 = vmatprep.subr.mxu0 0.0
        %2929 = vmatpush1.msra.mxu0 0.0
        %2930 = vmatprep.subr.mxu0 0.0
        %2931 = vmatpush1.msra.mxu0 0.0
        %2932 = vmatprep.subr.mxu0 0.0
        %2933 = vmatpush1.msra.mxu0 0.0
        %2934 = vmatprep.subr.mxu0 0.0
        %2935 = vmatpush1.msra.mxu0 0.0
        %2936 = vmatprep.subr.mxu0 0.0
        %2937 = vmatpush1.msra.mxu0 0.0
        %2938 = vmatprep.subr.mxu0 0.0
        %2939 = vmatpush1.msra.mxu0 0.0
        %2940 = vmatprep.subr.mxu0 0.0
        %2941 = vmatpush1.msra.mxu0 0.0
        %2942 = vmatprep.subr.mxu0 0.0
        %2943 = vmatpush1.msra.mxu0 0.0
        %2944 = vmatprep.subr.mxu0 0.0
        %2945 = vmatpush1.msra.mxu0 0.0
        %2946 = vmatprep.subr.mxu0 0.0
        %2947 = vmatpush1.msra.mxu0 %v2836
        %2948 = vmatprep.subr.mxu0 0.0
        %2949 = vmatpush2.msra.mxu0 0.0
        %2950 = vmatprep.subr.mxu0 0.0
        %2951 = vmatpush2.msra.mxu0 0.0
        %2952 = vmatprep.subr.mxu0 0.0
        %2953 = vmatpush2.msra.mxu0 0.0
        %2954 = vmatprep.subr.mxu0 0.0
        %2955 = vmatpush2.msra.mxu0 0.0
        %2956 = vmatprep.subr.mxu0 0.0
        %2957 = vmatpush2.msra.mxu0 0.0
        %2958 = vmatprep.subr.mxu0 0.0
        %2959 = vmatpush2.msra.mxu0 0.0
        %2960 = vmatprep.subr.mxu0 0.0
        %2961 = vmatpush2.msra.mxu0 0.0
        %2962 = vmatprep.subr.mxu0 0.0
        %2963 = vmatpush2.msra.mxu0 0.0
        %2964 = vmatprep.subr.mxu0 0.0
        %2965 = vmatpush2.msra.mxu0 0.0
        %2966 = vmatprep.subr.mxu0 0.0
        %2967 = vmatpush2.msra.mxu0 0.0
        %2968 = vmatprep.subr.mxu0 0.0
        %2969 = vmatpush2.msra.mxu0 0.0
        %2970 = vmatprep.subr.mxu0 0.0
        %2971 = vmatpush2.msra.mxu0 0.0
        %2972 = vmatprep.subr.mxu0 0.0
        %2973 = vmatpush2.msra.mxu0 0.0
        %2974 = vmatprep.subr.mxu0 0.0
        %2975 = vmatpush2.msra.mxu0 0.0
        %2976 = vmatprep.subr.mxu0 0.0
        %2977 = vmatpush2.msra.mxu0 0.0
        %2978 = vmatprep.subr.mxu0 0.0
        %2979 = vmatpush2.msra.mxu0 0.0
        %2980 = vmatprep.mubr.f32.mxu0 0.0
        %2981 = vmatmul.mubr.f32.gmra.mxu0 %v2843
        %v2982 = vpop.f32.mrf.mxu0
        %v2983 = vadd.f32 0.0, %v2982
        %v2984 = vpop.f32.mrf.mxu0
        %2985 = vdwg.mxu0
        %v2986 = vadd.f32 %v2826, %v2912
        %v2987 = vadd.f32 %v2827, %v2914
        %v2988 = vadd.f32 %v2828, %v2983
        %s2989 = scalar_lea.vmem %s5, 56
        %v2990 = vld [vmem:[%s2989] sm:$0xff]
        %2991 = vrot.lane.b32.xlu0 %v1881, 91
        %v2992 = vpop.permute.xlu0 %2991
        %2993 = vrot.lane.b32.xlu0 %v1876, 91
        %v2994 = vpop.permute.xlu0 %2993
        %2995 = vrot.lane.b32.xlu0 %v1883, 91
        %v2996 = vpop.permute.xlu0 %2995
        %v2997 = vsel %vm1506, %v2992, %v2994
        %v2998 = vsel %vm1506, %v2994, %v2996
        %v3003 = vsel %vm1900, %v2990, 0
        %3005 = vmatprep.subr.mxu0 0.0
        %3006 = vmatpush1.msra.mxu0 0.0
        %3007 = vmatprep.subr.mxu0 0.0
        %3008 = vmatpush1.msra.mxu0 0.0
        %3009 = vmatprep.subr.mxu0 0.0
        %3010 = vmatpush1.msra.mxu0 0.0
        %3011 = vmatprep.subr.mxu0 0.0
        %3012 = vmatpush1.msra.mxu0 0.0
        %3013 = vmatprep.subr.mxu0 0.0
        %3014 = vmatpush1.msra.mxu0 0.0
        %3015 = vmatprep.subr.mxu0 0.0
        %3016 = vmatpush1.msra.mxu0 0.0
        %3017 = vmatprep.subr.mxu0 0.0
        %3018 = vmatpush1.msra.mxu0 0.0
        %3019 = vmatprep.subr.mxu0 0.0
        %3020 = vmatpush1.msra.mxu0 0.0
        %3021 = vmatprep.subr.mxu0 0.0
        %3022 = vmatpush1.msra.mxu0 0.0
        %3023 = vmatprep.subr.mxu0 0.0
        %3024 = vmatpush1.msra.mxu0 0.0
        %3025 = vmatprep.subr.mxu0 0.0
        %3026 = vmatpush1.msra.mxu0 0.0
        %3027 = vmatprep.subr.mxu0 0.0
        %3028 = vmatpush1.msra.mxu0 0.0
        %3029 = vmatprep.subr.mxu0 0.0
        %3030 = vmatpush1.msra.mxu0 0.0
        %3031 = vmatprep.subr.mxu0 0.0
        %3032 = vmatpush1.msra.mxu0 0.0
        %3033 = vmatprep.subr.mxu0 0.0
        %3034 = vmatpush1.msra.mxu0 0.0
        %3035 = vmatprep.subr.mxu0 %v2998
        %3036 = vmatpush1.msra.mxu0 %v2997
        %3037 = vmatprep.subr.mxu0 0.0
        %3038 = vmatpush2.msra.mxu0 0.0
        %3039 = vmatprep.subr.mxu0 0.0
        %3040 = vmatpush2.msra.mxu0 0.0
        %3041 = vmatprep.subr.mxu0 0.0
        %3042 = vmatpush2.msra.mxu0 0.0
        %3043 = vmatprep.subr.mxu0 0.0
        %3044 = vmatpush2.msra.mxu0 0.0
        %3045 = vmatprep.subr.mxu0 0.0
        %3046 = vmatpush2.msra.mxu0 0.0
        %3047 = vmatprep.subr.mxu0 0.0
        %3048 = vmatpush2.msra.mxu0 0.0
        %3049 = vmatprep.subr.mxu0 0.0
        %3050 = vmatpush2.msra.mxu0 0.0
        %3051 = vmatprep.subr.mxu0 0.0
        %3052 = vmatpush2.msra.mxu0 0.0
        %3053 = vmatprep.subr.mxu0 0.0
        %3054 = vmatpush2.msra.mxu0 0.0
        %3055 = vmatprep.subr.mxu0 0.0
        %3056 = vmatpush2.msra.mxu0 0.0
        %3057 = vmatprep.subr.mxu0 0.0
        %3058 = vmatpush2.msra.mxu0 0.0
        %3059 = vmatprep.subr.mxu0 0.0
        %3060 = vmatpush2.msra.mxu0 0.0
        %3061 = vmatprep.subr.mxu0 0.0
        %3062 = vmatpush2.msra.mxu0 0.0
        %3063 = vmatprep.subr.mxu0 0.0
        %3064 = vmatpush2.msra.mxu0 0.0
        %3065 = vmatprep.subr.mxu0 0.0
        %3066 = vmatpush2.msra.mxu0 0.0
        %3067 = vmatprep.subr.mxu0 0.0
        %3068 = vmatpush2.msra.mxu0 0.0
        %3069 = vmatprep.mubr.f32.mxu0 0.0
        %3070 = vmatmul.mubr.f32.gmra.mxu0 %v3003
        %v3071 = vpop.f32.mrf.mxu0
        %v3072 = vadd.f32 0.0, %v3071
        %v3073 = vpop.f32.mrf.mxu0
        %v3074 = vadd.f32 0.0, %v3073
        %3075 = vdwg.mxu0
        %3076 = vmatprep.subr.mxu0 0.0
        %3077 = vmatpush1.msra.mxu0 0.0
        %3078 = vmatprep.subr.mxu0 0.0
        %3079 = vmatpush1.msra.mxu0 0.0
        %3080 = vmatprep.subr.mxu0 0.0
        %3081 = vmatpush1.msra.mxu0 0.0
        %3082 = vmatprep.subr.mxu0 0.0
        %3083 = vmatpush1.msra.mxu0 0.0
        %3084 = vmatprep.subr.mxu0 0.0
        %3085 = vmatpush1.msra.mxu0 0.0
        %3086 = vmatprep.subr.mxu0 0.0
        %3087 = vmatpush1.msra.mxu0 0.0
        %3088 = vmatprep.subr.mxu0 0.0
        %3089 = vmatpush1.msra.mxu0 0.0
        %3090 = vmatprep.subr.mxu0 0.0
        %3091 = vmatpush1.msra.mxu0 0.0
        %3092 = vmatprep.subr.mxu0 0.0
        %3093 = vmatpush1.msra.mxu0 0.0
        %3094 = vmatprep.subr.mxu0 0.0
        %3095 = vmatpush1.msra.mxu0 0.0
        %3096 = vmatprep.subr.mxu0 0.0
        %3097 = vmatpush1.msra.mxu0 0.0
        %3098 = vmatprep.subr.mxu0 0.0
        %3099 = vmatpush1.msra.mxu0 0.0
        %3100 = vmatprep.subr.mxu0 0.0
        %3101 = vmatpush1.msra.mxu0 0.0
        %3102 = vmatprep.subr.mxu0 0.0
        %3103 = vmatpush1.msra.mxu0 0.0
        %3104 = vmatprep.subr.mxu0 0.0
        %3105 = vmatpush1.msra.mxu0 0.0
        %3106 = vmatprep.subr.mxu0 0.0
        %3107 = vmatpush1.msra.mxu0 %v2996
        %3108 = vmatprep.subr.mxu0 0.0
        %3109 = vmatpush2.msra.mxu0 0.0
        %3110 = vmatprep.subr.mxu0 0.0
        %3111 = vmatpush2.msra.mxu0 0.0
        %3112 = vmatprep.subr.mxu0 0.0
        %3113 = vmatpush2.msra.mxu0 0.0
        %3114 = vmatprep.subr.mxu0 0.0
        %3115 = vmatpush2.msra.mxu0 0.0
        %3116 = vmatprep.subr.mxu0 0.0
        %3117 = vmatpush2.msra.mxu0 0.0
        %3118 = vmatprep.subr.mxu0 0.0
        %3119 = vmatpush2.msra.mxu0 0.0
        %3120 = vmatprep.subr.mxu0 0.0
        %3121 = vmatpush2.msra.mxu0 0.0
        %3122 = vmatprep.subr.mxu0 0.0
        %3123 = vmatpush2.msra.mxu0 0.0
        %3124 = vmatprep.subr.mxu0 0.0
        %3125 = vmatpush2.msra.mxu0 0.0
        %3126 = vmatprep.subr.mxu0 0.0
        %3127 = vmatpush2.msra.mxu0 0.0
        %3128 = vmatprep.subr.mxu0 0.0
        %3129 = vmatpush2.msra.mxu0 0.0
        %3130 = vmatprep.subr.mxu0 0.0
        %3131 = vmatpush2.msra.mxu0 0.0
        %3132 = vmatprep.subr.mxu0 0.0
        %3133 = vmatpush2.msra.mxu0 0.0
        %3134 = vmatprep.subr.mxu0 0.0
        %3135 = vmatpush2.msra.mxu0 0.0
        %3136 = vmatprep.subr.mxu0 0.0
        %3137 = vmatpush2.msra.mxu0 0.0
        %3138 = vmatprep.subr.mxu0 0.0
        %3139 = vmatpush2.msra.mxu0 0.0
        %3140 = vmatprep.mubr.f32.mxu0 0.0
        %3141 = vmatmul.mubr.f32.gmra.mxu0 %v3003
        %v3142 = vpop.f32.mrf.mxu0
        %v3143 = vadd.f32 0.0, %v3142
        %v3144 = vpop.f32.mrf.mxu0
        %3145 = vdwg.mxu0
        %v3146 = vadd.f32 %v2986, %v3072
        %v3147 = vadd.f32 %v2987, %v3074
        %v3148 = vadd.f32 %v2988, %v3143
        %s3149 = scalar_lea.vmem %s5, 64
        %v3150 = vld [vmem:[%s3149] sm:$0xff]
        %3151 = vrot.lane.b32.xlu0 %v1881, 90
        %v3152 = vpop.permute.xlu0 %3151
        %3153 = vrot.lane.b32.xlu0 %v1876, 90
        %v3154 = vpop.permute.xlu0 %3153
        %3155 = vrot.lane.b32.xlu0 %v1883, 90
        %v3156 = vpop.permute.xlu0 %3155
        %v3157 = vsel %vm1670, %v3152, %v3154
        %v3158 = vsel %vm1670, %v3154, %v3156
        %v3163 = vsel %vm1900, %v3150, 0
        %3165 = vmatprep.subr.mxu0 0.0
        %3166 = vmatpush1.msra.mxu0 0.0
        %3167 = vmatprep.subr.mxu0 0.0
        %3168 = vmatpush1.msra.mxu0 0.0
        %3169 = vmatprep.subr.mxu0 0.0
        %3170 = vmatpush1.msra.mxu0 0.0
        %3171 = vmatprep.subr.mxu0 0.0
        %3172 = vmatpush1.msra.mxu0 0.0
        %3173 = vmatprep.subr.mxu0 0.0
        %3174 = vmatpush1.msra.mxu0 0.0
        %3175 = vmatprep.subr.mxu0 0.0
        %3176 = vmatpush1.msra.mxu0 0.0
        %3177 = vmatprep.subr.mxu0 0.0
        %3178 = vmatpush1.msra.mxu0 0.0
        %3179 = vmatprep.subr.mxu0 0.0
        %3180 = vmatpush1.msra.mxu0 0.0
        %3181 = vmatprep.subr.mxu0 0.0
        %3182 = vmatpush1.msra.mxu0 0.0
        %3183 = vmatprep.subr.mxu0 0.0
        %3184 = vmatpush1.msra.mxu0 0.0
        %3185 = vmatprep.subr.mxu0 0.0
        %3186 = vmatpush1.msra.mxu0 0.0
        %3187 = vmatprep.subr.mxu0 0.0
        %3188 = vmatpush1.msra.mxu0 0.0
        %3189 = vmatprep.subr.mxu0 0.0
        %3190 = vmatpush1.msra.mxu0 0.0
        %3191 = vmatprep.subr.mxu0 0.0
        %3192 = vmatpush1.msra.mxu0 0.0
        %3193 = vmatprep.subr.mxu0 0.0
        %3194 = vmatpush1.msra.mxu0 0.0
        %3195 = vmatprep.subr.mxu0 %v3158
        %3196 = vmatpush1.msra.mxu0 %v3157
        %3197 = vmatprep.subr.mxu0 0.0
        %3198 = vmatpush2.msra.mxu0 0.0
        %3199 = vmatprep.subr.mxu0 0.0
        %3200 = vmatpush2.msra.mxu0 0.0
        %3201 = vmatprep.subr.mxu0 0.0
        %3202 = vmatpush2.msra.mxu0 0.0
        %3203 = vmatprep.subr.mxu0 0.0
        %3204 = vmatpush2.msra.mxu0 0.0
        %3205 = vmatprep.subr.mxu0 0.0
        %3206 = vmatpush2.msra.mxu0 0.0
        %3207 = vmatprep.subr.mxu0 0.0
        %3208 = vmatpush2.msra.mxu0 0.0
        %3209 = vmatprep.subr.mxu0 0.0
        %3210 = vmatpush2.msra.mxu0 0.0
        %3211 = vmatprep.subr.mxu0 0.0
        %3212 = vmatpush2.msra.mxu0 0.0
        %3213 = vmatprep.subr.mxu0 0.0
        %3214 = vmatpush2.msra.mxu0 0.0
        %3215 = vmatprep.subr.mxu0 0.0
        %3216 = vmatpush2.msra.mxu0 0.0
        %3217 = vmatprep.subr.mxu0 0.0
        %3218 = vmatpush2.msra.mxu0 0.0
        %3219 = vmatprep.subr.mxu0 0.0
        %3220 = vmatpush2.msra.mxu0 0.0
        %3221 = vmatprep.subr.mxu0 0.0
        %3222 = vmatpush2.msra.mxu0 0.0
        %3223 = vmatprep.subr.mxu0 0.0
        %3224 = vmatpush2.msra.mxu0 0.0
        %3225 = vmatprep.subr.mxu0 0.0
        %3226 = vmatpush2.msra.mxu0 0.0
        %3227 = vmatprep.subr.mxu0 0.0
        %3228 = vmatpush2.msra.mxu0 0.0
        %3229 = vmatprep.mubr.f32.mxu0 0.0
        %3230 = vmatmul.mubr.f32.gmra.mxu0 %v3163
        %v3231 = vpop.f32.mrf.mxu0
        %v3232 = vadd.f32 0.0, %v3231
        %v3233 = vpop.f32.mrf.mxu0
        %v3234 = vadd.f32 0.0, %v3233
        %3235 = vdwg.mxu0
        %3236 = vmatprep.subr.mxu0 0.0
        %3237 = vmatpush1.msra.mxu0 0.0
        %3238 = vmatprep.subr.mxu0 0.0
        %3239 = vmatpush1.msra.mxu0 0.0
        %3240 = vmatprep.subr.mxu0 0.0
        %3241 = vmatpush1.msra.mxu0 0.0
        %3242 = vmatprep.subr.mxu0 0.0
        %3243 = vmatpush1.msra.mxu0 0.0
        %3244 = vmatprep.subr.mxu0 0.0
        %3245 = vmatpush1.msra.mxu0 0.0
        %3246 = vmatprep.subr.mxu0 0.0
        %3247 = vmatpush1.msra.mxu0 0.0
        %3248 = vmatprep.subr.mxu0 0.0
        %3249 = vmatpush1.msra.mxu0 0.0
        %3250 = vmatprep.subr.mxu0 0.0
        %3251 = vmatpush1.msra.mxu0 0.0
        %3252 = vmatprep.subr.mxu0 0.0
        %3253 = vmatpush1.msra.mxu0 0.0
        %3254 = vmatprep.subr.mxu0 0.0
        %3255 = vmatpush1.msra.mxu0 0.0
        %3256 = vmatprep.subr.mxu0 0.0
        %3257 = vmatpush1.msra.mxu0 0.0
        %3258 = vmatprep.subr.mxu0 0.0
        %3259 = vmatpush1.msra.mxu0 0.0
        %3260 = vmatprep.subr.mxu0 0.0
        %3261 = vmatpush1.msra.mxu0 0.0
        %3262 = vmatprep.subr.mxu0 0.0
        %3263 = vmatpush1.msra.mxu0 0.0
        %3264 = vmatprep.subr.mxu0 0.0
        %3265 = vmatpush1.msra.mxu0 0.0
        %3266 = vmatprep.subr.mxu0 0.0
        %3267 = vmatpush1.msra.mxu0 %v3156
        %3268 = vmatprep.subr.mxu0 0.0
        %3269 = vmatpush2.msra.mxu0 0.0
        %3270 = vmatprep.subr.mxu0 0.0
        %3271 = vmatpush2.msra.mxu0 0.0
        %3272 = vmatprep.subr.mxu0 0.0
        %3273 = vmatpush2.msra.mxu0 0.0
        %3274 = vmatprep.subr.mxu0 0.0
        %3275 = vmatpush2.msra.mxu0 0.0
        %3276 = vmatprep.subr.mxu0 0.0
        %3277 = vmatpush2.msra.mxu0 0.0
        %3278 = vmatprep.subr.mxu0 0.0
        %3279 = vmatpush2.msra.mxu0 0.0
        %3280 = vmatprep.subr.mxu0 0.0
        %3281 = vmatpush2.msra.mxu0 0.0
        %3282 = vmatprep.subr.mxu0 0.0
        %3283 = vmatpush2.msra.mxu0 0.0
        %3284 = vmatprep.subr.mxu0 0.0
        %3285 = vmatpush2.msra.mxu0 0.0
        %3286 = vmatprep.subr.mxu0 0.0
        %3287 = vmatpush2.msra.mxu0 0.0
        %3288 = vmatprep.subr.mxu0 0.0
        %3289 = vmatpush2.msra.mxu0 0.0
        %3290 = vmatprep.subr.mxu0 0.0
        %3291 = vmatpush2.msra.mxu0 0.0
        %3292 = vmatprep.subr.mxu0 0.0
        %3293 = vmatpush2.msra.mxu0 0.0
        %3294 = vmatprep.subr.mxu0 0.0
        %3295 = vmatpush2.msra.mxu0 0.0
        %3296 = vmatprep.subr.mxu0 0.0
        %3297 = vmatpush2.msra.mxu0 0.0
        %3298 = vmatprep.subr.mxu0 0.0
        %3299 = vmatpush2.msra.mxu0 0.0
        %3300 = vmatprep.mubr.f32.mxu0 0.0
        %3301 = vmatmul.mubr.f32.gmra.mxu0 %v3163
        %v3302 = vpop.f32.mrf.mxu0
        %v3303 = vadd.f32 0.0, %v3302
        %v3304 = vpop.f32.mrf.mxu0
        %3305 = vdwg.mxu0
        %v3306 = vadd.f32 %v3146, %v3232
        %v3307 = vadd.f32 %v3147, %v3234
        %v3308 = vadd.f32 %v3148, %v3303
        %v3309 = vld [vmem:[%s6] sm:$0xff]
        %3311 = vset.pattern.permute.xlu0 0
        %3312 = vperm.xlu0 %3311, %v3309
        %v3313 = vpop.permute.xlu0 %3312
        %v3315 = vmul.f32 %v3306, %v3313
        %v3316 = vmul.f32 %v3307, %v3313
        %v3317 = vmul.f32 %v3308, %v3313
        %v3318 = vld [vmem:[%s7] sm:$0xff]
        %3320 = vset.pattern.permute.xlu0 0
        %3321 = vperm.xlu0 %3320, %v3318
        %v3322 = vpop.permute.xlu0 %3321
        %v3324 = vadd.f32 %v3315, %v3322
        %v3325 = vadd.f32 %v3316, %v3322
        %v3326 = vadd.f32 %v3317, %v3322
        %v3327 = vmax.f32 %v3324, 0.0
        %v3328 = vmax.f32 %v3325, 0.0
        %v3329 = vmax.f32 %v3326, 0.0
        %v3330 = vld [vmem:[%s8] sm:$0xff]
        %v3331 = vld [vmem:[%s9] sm:$0xff]
        %3333 = vset.pattern.permute.xlu0 0
        %3334 = vperm.xlu0 %3333, %v3331
        %v3335 = vpop.permute.xlu0 %3334
        %v3338 = vsel %vm376, %v3330, 0
        %3340 = vmatprep.subr.mxu0 0.0
        %3341 = vmatpush1.msra.mxu0 0.0
        %3342 = vmatprep.subr.mxu0 0.0
        %3343 = vmatpush1.msra.mxu0 0.0
        %3344 = vmatprep.subr.mxu0 0.0
        %3345 = vmatpush1.msra.mxu0 0.0
        %3346 = vmatprep.subr.mxu0 0.0
        %3347 = vmatpush1.msra.mxu0 0.0
        %3348 = vmatprep.subr.mxu0 0.0
        %3349 = vmatpush1.msra.mxu0 0.0
        %3350 = vmatprep.subr.mxu0 0.0
        %3351 = vmatpush1.msra.mxu0 0.0
        %3352 = vmatprep.subr.mxu0 0.0
        %3353 = vmatpush1.msra.mxu0 0.0
        %3354 = vmatprep.subr.mxu0 0.0
        %3355 = vmatpush1.msra.mxu0 0.0
        %3356 = vmatprep.subr.mxu0 0.0
        %3357 = vmatpush1.msra.mxu0 0.0
        %3358 = vmatprep.subr.mxu0 0.0
        %3359 = vmatpush1.msra.mxu0 0.0
        %3360 = vmatprep.subr.mxu0 0.0
        %3361 = vmatpush1.msra.mxu0 0.0
        %3362 = vmatprep.subr.mxu0 0.0
        %3363 = vmatpush1.msra.mxu0 0.0
        %3364 = vmatprep.subr.mxu0 0.0
        %3365 = vmatpush1.msra.mxu0 0.0
        %3366 = vmatprep.subr.mxu0 0.0
        %3367 = vmatpush1.msra.mxu0 0.0
        %3368 = vmatprep.subr.mxu0 0.0
        %3369 = vmatpush1.msra.mxu0 0.0
        %3370 = vmatprep.subr.mxu0 %v1022
        %3371 = vmatpush1.msra.mxu0 %v1020
        %3372 = vmatprep.subr.mxu0 0.0
        %3373 = vmatpush2.msra.mxu0 0.0
        %3374 = vmatprep.subr.mxu0 0.0
        %3375 = vmatpush2.msra.mxu0 0.0
        %3376 = vmatprep.subr.mxu0 0.0
        %3377 = vmatpush2.msra.mxu0 0.0
        %3378 = vmatprep.subr.mxu0 0.0
        %3379 = vmatpush2.msra.mxu0 0.0
        %3380 = vmatprep.subr.mxu0 0.0
        %3381 = vmatpush2.msra.mxu0 0.0
        %3382 = vmatprep.subr.mxu0 0.0
        %3383 = vmatpush2.msra.mxu0 0.0
        %3384 = vmatprep.subr.mxu0 0.0
        %3385 = vmatpush2.msra.mxu0 0.0
        %3386 = vmatprep.subr.mxu0 0.0
        %3387 = vmatpush2.msra.mxu0 0.0
        %3388 = vmatprep.subr.mxu0 0.0
        %3389 = vmatpush2.msra.mxu0 0.0
        %3390 = vmatprep.subr.mxu0 0.0
        %3391 = vmatpush2.msra.mxu0 0.0
        %3392 = vmatprep.subr.mxu0 0.0
        %3393 = vmatpush2.msra.mxu0 0.0
        %3394 = vmatprep.subr.mxu0 0.0
        %3395 = vmatpush2.msra.mxu0 0.0
        %3396 = vmatprep.subr.mxu0 0.0
        %3397 = vmatpush2.msra.mxu0 0.0
        %3398 = vmatprep.subr.mxu0 0.0
        %3399 = vmatpush2.msra.mxu0 0.0
        %3400 = vmatprep.subr.mxu0 0.0
        %3401 = vmatpush2.msra.mxu0 0.0
        %3402 = vmatprep.subr.mxu0 0.0
        %3403 = vmatpush2.msra.mxu0 0.0
        %3404 = vmatprep.mubr.f32.mxu0 0.0
        %3405 = vmatmul.mubr.f32.gmra.mxu0 %v3338
        %v3406 = vpop.f32.mrf.mxu0
        %v3407 = vadd.f32 %v3335, %v3406
        %v3408 = vpop.f32.mrf.mxu0
        %v3409 = vadd.f32 %v3335, %v3408
        %3410 = vdwg.mxu0
        %3411 = vmatprep.subr.mxu0 0.0
        %3412 = vmatpush1.msra.mxu0 0.0
        %3413 = vmatprep.subr.mxu0 0.0
        %3414 = vmatpush1.msra.mxu0 0.0
        %3415 = vmatprep.subr.mxu0 0.0
        %3416 = vmatpush1.msra.mxu0 0.0
        %3417 = vmatprep.subr.mxu0 0.0
        %3418 = vmatpush1.msra.mxu0 0.0
        %3419 = vmatprep.subr.mxu0 0.0
        %3420 = vmatpush1.msra.mxu0 0.0
        %3421 = vmatprep.subr.mxu0 0.0
        %3422 = vmatpush1.msra.mxu0 0.0
        %3423 = vmatprep.subr.mxu0 0.0
        %3424 = vmatpush1.msra.mxu0 0.0
        %3425 = vmatprep.subr.mxu0 0.0
        %3426 = vmatpush1.msra.mxu0 0.0
        %3427 = vmatprep.subr.mxu0 0.0
        %3428 = vmatpush1.msra.mxu0 0.0
        %3429 = vmatprep.subr.mxu0 0.0
        %3430 = vmatpush1.msra.mxu0 0.0
        %3431 = vmatprep.subr.mxu0 0.0
        %3432 = vmatpush1.msra.mxu0 0.0
        %3433 = vmatprep.subr.mxu0 0.0
        %3434 = vmatpush1.msra.mxu0 0.0
        %3435 = vmatprep.subr.mxu0 0.0
        %3436 = vmatpush1.msra.mxu0 0.0
        %3437 = vmatprep.subr.mxu0 0.0
        %3438 = vmatpush1.msra.mxu0 0.0
        %3439 = vmatprep.subr.mxu0 0.0
        %3440 = vmatpush1.msra.mxu0 0.0
        %3441 = vmatprep.subr.mxu0 0.0
        %3442 = vmatpush1.msra.mxu0 %v1024
        %3443 = vmatprep.subr.mxu0 0.0
        %3444 = vmatpush2.msra.mxu0 0.0
        %3445 = vmatprep.subr.mxu0 0.0
        %3446 = vmatpush2.msra.mxu0 0.0
        %3447 = vmatprep.subr.mxu0 0.0
        %3448 = vmatpush2.msra.mxu0 0.0
        %3449 = vmatprep.subr.mxu0 0.0
        %3450 = vmatpush2.msra.mxu0 0.0
        %3451 = vmatprep.subr.mxu0 0.0
        %3452 = vmatpush2.msra.mxu0 0.0
        %3453 = vmatprep.subr.mxu0 0.0
        %3454 = vmatpush2.msra.mxu0 0.0
        %3455 = vmatprep.subr.mxu0 0.0
        %3456 = vmatpush2.msra.mxu0 0.0
        %3457 = vmatprep.subr.mxu0 0.0
        %3458 = vmatpush2.msra.mxu0 0.0
        %3459 = vmatprep.subr.mxu0 0.0
        %3460 = vmatpush2.msra.mxu0 0.0
        %3461 = vmatprep.subr.mxu0 0.0
        %3462 = vmatpush2.msra.mxu0 0.0
        %3463 = vmatprep.subr.mxu0 0.0
        %3464 = vmatpush2.msra.mxu0 0.0
        %3465 = vmatprep.subr.mxu0 0.0
        %3466 = vmatpush2.msra.mxu0 0.0
        %3467 = vmatprep.subr.mxu0 0.0
        %3468 = vmatpush2.msra.mxu0 0.0
        %3469 = vmatprep.subr.mxu0 0.0
        %3470 = vmatpush2.msra.mxu0 0.0
        %3471 = vmatprep.subr.mxu0 0.0
        %3472 = vmatpush2.msra.mxu0 0.0
        %3473 = vmatprep.subr.mxu0 0.0
        %3474 = vmatpush2.msra.mxu0 0.0
        %3475 = vmatprep.mubr.f32.mxu0 0.0
        %3476 = vmatmul.mubr.f32.gmra.mxu0 %v3338
        %v3477 = vpop.f32.mrf.mxu0
        %v3478 = vadd.f32 %v3335, %v3477
        %v3479 = vpop.f32.mrf.mxu0
        %3480 = vdwg.mxu0
        %v3481 = vadd.f32 %v3327, %v3407
        %v3482 = vadd.f32 %v3328, %v3409
        %v3483 = vadd.f32 %v3329, %v3478
        %v3484 = vmax.f32 %v3481, 0.0
        %v3485 = vmax.f32 %v3482, 0.0
        %v3486 = vmax.f32 %v3483, 0.0
        %3487 = vst [vmem:[%s352] sm:$0xff] %v3484
        %3488 = vst [vmem:[%s352 + $0x8] sm:$0xff] %v3485
        %vm3489 = vcmask 556032
        %3490 = vst.msk [vmem:[%s352 + $0x10] sm:$0xff] %vm3489, %v3486
        %s3491 = sand.u32 %s247, 1
        %s3492 = scalar_lea.sflag [#allocation3], %s3491
        %s3493 = sand.u32 %s247, 1
        %s3494 = smul.addr %s3493, 24
        %s3495 = scalar_lea.vmem [#allocation2], %s3494
        // Predicated region
        $region61: #{tpu_custom_call.1} parent=59 // pred_check
          %p3496 = pneg %p257
        $region62: #{tpu_custom_call.1} parent=59 // pred_check_branch
          %3498 = sbr.rel (%p3496) target = $region64
        $region63: #{tpu_custom_call.1} parent=59 // pred_region
          %s3500 = ssub.s32 384, 384
          %3501 = vsyncadd %s3492, %s3500
          %s3502 = smul.addr %s24, 3
          %s3503 = smul.addr %s3502, 128
          %s3504 = scalar_lea.hbm %s10, %s3503
          %s3506 = sshll.u32 %s3495, 4
          %s3507 = int_to_ptr.vmem [resolvable:$true] %s3506
          %3509 = dma.vmem_to_hbm [thread:$0]  %s3507, 384, %s3504, %s3492
        $region64: #{tpu_custom_call.1} parent=59 // pred_fallthru
          _
      $region60: #{tpu_custom_call.1} parent=5 // pred_fallthru
        _
      %p3510 = scmp.le.s32.totalorder 2, %s19
      // Predicated region
      $region65: #{tpu_custom_call.1} parent=5 // pred_check
        %p3511 = pneg %p3510
      $region66: #{tpu_custom_call.1} parent=5 // pred_check_branch
        %3513 = sbr.rel (%p3511) target = $region68
      $region67: #{tpu_custom_call.1} parent=5 // pred_region
        %s3514 = ssub.s32 %s19, 2
        // Predicated region
        $region69: #{tpu_custom_call.1} parent=67 // pred_check
          %p3515 = pneg %p263
        $region70: #{tpu_custom_call.1} parent=67 // pred_check_branch
          %3517 = sbr.rel (%p3515) target = $region72
        $region71: #{tpu_custom_call.1} parent=67 // pred_region
          %s3518 = sand.u32 %s248, 1
          %s3519 = scalar_lea.sflag [#allocation3], %s3518
          %s3520 = sand.u32 %s248, 1
          %s3521 = smul.addr %s3520, 24
          %s3522 = scalar_lea.vmem [#allocation2], %s3521
          %3523 = dma.done %s3519, 384
        $region72: #{tpu_custom_call.1} parent=67 // pred_fallthru
          _
      $region68: #{tpu_custom_call.1} parent=5 // pred_fallthru
        _
    $region6: #{tpu_custom_call.1} parent=1 // loop_footer
      %s23 = sadd.s32 1, %s19
    $region7: #{tpu_custom_call.1} parent=1 // loop_footer_branch
      %18 = sbr.rel target = $region3
    $region8: #{tpu_custom_call.1} parent=1 // loop_exit
      _
    %3524 = vsyncpa [#allocation3], 1
    %s3525 = scalar_lea.sflag [#allocation3], 1
    %3526 = vsyncpa %s3525, 1

</llo_original>
